<compile_context>
chip_gen: v7x
topology: tpu7x:2x2x1
jax: 0.10.0
libtpu: 0.0.40
codegen_flags: <defaults>
</compile_context>

<pallas_src>
import functools

import jax
import jax.numpy as jnp
from jax.experimental import pallas as pl
from jax.experimental.pallas import tpu as pltpu


# Matmul operand dtype.  Set to jnp.bfloat16 on v5e/v6e/v7x for ~2x HBM traffic and full
# MXU throughput (accumulation stays fp32 via preferred_element_type).  Kept fp32 here so
# the numerics match the fp32 PyTorch module.
MATMUL_DTYPE = jnp.float32

_PARALLEL_1D = pltpu.CompilerParams(dimension_semantics=("parallel",))


# --------------------------------------------------------------------------- #
# Pallas kernels
# --------------------------------------------------------------------------- #
def fusion_kernel(xu_ref, sk_ref, wx_ref, ws_ref, b_ref, o_ref):
    """SimpleFusion: Conv1d(2C->C, k=1) over cat([x_up, skip], channel) with the concat
    fused away:  y = x_up @ W_top + skip @ W_bot + b.
    xu/sk: (tm, C); wx/ws: (C, C); b: (1, C); o: (tm, C)."""
    acc = jnp.dot(xu_ref[...], wx_ref[...], preferred_element_type=jnp.float32)
    acc = acc + jnp.dot(sk_ref[...], ws_ref[...], preferred_element_type=jnp.float32)
    o_ref[...] = (acc + b_ref[...]).astype(o_ref.dtype)


def spk_split_kernel(x_ref, w1a_ref, b1a_ref, w1g_ref, b1g_ref, w2_ref, b2_ref,
                     gam_ref, bet_ref, o_ref, *, num_spks):
    """SpkSplitStage fused: Conv1x1 -> GLU(channel) -> Conv1x1 -> speaker split ->
    GroupNorm(num_groups=1, eps=1e-8) per (sample, speaker).
    x: (1, T, Cin); w1a/w1g: (Cin, 2*Cin*S); w2: (2*Cin*S, Cin*S);
    gamma/beta: (1, Cin); o: (1, S, T, Cin)."""
    x = x_ref[0]
    # GLU done as two matmuls (w1 pre-split on the host) so the (T, 4*N*S) intermediate is
    # never materialized nor sliced across lane-tile boundaries.
    a = jnp.dot(x, w1a_ref[...], preferred_element_type=jnp.float32) + b1a_ref[...]
    g = jnp.dot(x, w1g_ref[...], preferred_element_type=jnp.float32) + b1g_ref[...]
    glu = a * jax.nn.sigmoid(g)
    y = jnp.dot(glu.astype(w2_ref.dtype), w2_ref[...],
                preferred_element_type=jnp.float32) + b2_ref[...]
    cn = o_ref.shape[3]
    for s in range(num_spks):                          # static, unrolled
        chunk = jax.lax.slice_in_dim(y, s * cn, (s + 1) * cn, axis=1)
        mean = jnp.mean(chunk)
        cen = chunk - mean
        var = jnp.mean(cen * cen)
        inv = jax.lax.rsqrt(var + 1e-8)
        o_ref[0, s] = (cen * inv * gam_ref[...] + bet_ref[...]).astype(o_ref.dtype)


def downconv_kernel(xe_ref, xo_ref, w_ref, scale_ref, shift_ref, o_ref, *, ksize):
    """Depthwise Conv1d (stride=2) + folded eval-mode BatchNorm + exact (erf) GELU.
    The stride-2 access pattern is resolved on the host by an even/odd time de-interleave,
    so the kernel only performs contiguous, statically offset slices (no strided ds).
    xe/xo: (1, Th, C) with xe[t]=x_pad[2t], xo[t]=x_pad[2t+1];  w: (K, C); scale/shift: (1, C)."""
    t_out = o_ref.shape[1]
    c = o_ref.shape[2]
    xe = xe_ref[0].astype(jnp.float32)
    xo = xo_ref[0].astype(jnp.float32)
    w = w_ref[...].astype(jnp.float32)                 # hoisted: loaded once for all taps
    acc = jnp.zeros((t_out, c), jnp.float32)
    for k in range(ksize):                             # static K, unrolled
        src = xe if (k % 2 == 0) else xo               # x_pad[2t + k]
        xk = jax.lax.slice_in_dim(src, k // 2, k // 2 + t_out, axis=0)
        acc = acc + xk * jax.lax.slice_in_dim(w, k, k + 1, axis=0)
    y = acc * scale_ref[...] + shift_ref[...]
    # exact (erf) GELU, matching torch.nn.GELU() default
    y = 0.5 * y * (1.0 + jax.lax.erf(y * 0.7071067811865476))
    o_ref[0] = y.astype(o_ref.dtype)


# --------------------------------------------------------------------------- #
# Wrappers (glue: channel-last layout + pallas_call plumbing)
# --------------------------------------------------------------------------- #
def _pick_row_tile(m):
    """Largest power-of-two row tile (>=8) that divides m, else the full extent."""
    for t in (512, 256, 128, 64, 32, 16, 8):
        if m % t == 0:
            return t
    return m


def down_conv_layer(x_btc, p):
    """DownConvLayer: depthwise Conv1d(stride=2, padding=(K-1)//2, groups=C) + BN(eval)
    + GELU.  Channel-last [B, T, C] -> [B, T_out, C]."""
    B, T, C = x_btc.shape
    K = p["dw_w"].shape[0]
    pad = (K - 1) // 2
    Tp = T + 2 * pad
    T_out = (Tp - K) // 2 + 1
    # Host-side even/odd de-interleave of the padded signal (cheap XLA slices under jit);
    # avoids stride-2 sublane loads inside the kernel.
    xp = jnp.pad(x_btc, ((0, 0), (pad, pad + (Tp % 2)), (0, 0)))
    xe = xp[:, 0::2, :]                                # x_pad[2t]
    xo = xp[:, 1::2, :]                                # x_pad[2t + 1]
    Th = xe.shape[1]
    # Fold eval-mode BatchNorm (+ conv bias) into per-channel scale/shift.
    scale = p["bn_gamma"] / jnp.sqrt(p["bn_var"] + 1e-5)
    shift = p["bn_beta"] - p["bn_mean"] * scale + p["dw_b"] * scale
    return pl.pallas_call(
        functools.partial(downconv_kernel, ksize=K),
        out_shape=jax.ShapeDtypeStruct((B, T_out, C), x_btc.dtype),
        grid=(B,),
        in_specs=[
            pl.BlockSpec((1, Th, C), lambda i: (i, 0, 0)),
            pl.BlockSpec((1, Th, C), lambda i: (i, 0, 0)),
            pl.BlockSpec((K, C), lambda i: (0, 0)),
            pl.BlockSpec((1, C), lambda i: (0, 0)),
            pl.BlockSpec((1, C), lambda i: (0, 0)),
        ],
        out_specs=pl.BlockSpec((1, T_out, C), lambda i: (i, 0, 0)),
        compiler_params=_PARALLEL_1D,
    )(xe, xo, p["dw_w"], scale.reshape(1, -1), shift.reshape(1, -1))


def spk_split_stage(x_btc, p, num_spks):
    """SpkSplitStage fully fused in a single kernel per sample.
    [B, T, C] -> [B*num_spks, T, C] (channel-last)."""
    B, T, C = x_btc.shape
    out_dtype = x_btc.dtype
    half = p["w1_a"].shape[1]                          # 2 * C * num_spks
    Cout = p["w2"].shape[1]                            # C * num_spks
    Cn = Cout // num_spks                              # == C
    x = x_btc.astype(MATMUL_DTYPE)
    w1a = p["w1_a"].astype(MATMUL_DTYPE)
    w1g = p["w1_g"].astype(MATMUL_DTYPE)
    w2 = p["w2"].astype(MATMUL_DTYPE)
    # TODO(synk): for very long T on v7x (64 MiB VMEM) split the full-T block into T tiles
    # with a two-pass (sum/sumsq) GroupNorm; at these sizes a per-sample block fits easily.
    y = pl.pallas_call(
        functools.partial(spk_split_kernel, num_spks=num_spks),
        out_shape=jax.ShapeDtypeStruct((B, num_spks, T, Cn), out_dtype),
        grid=(B,),
        in_specs=[
            pl.BlockSpec((1, T, C), lambda i: (i, 0, 0)),
            pl.BlockSpec((C, half), lambda i: (0, 0)),
            pl.BlockSpec((1, half), lambda i: (0, 0)),
            pl.BlockSpec((C, half), lambda i: (0, 0)),
            pl.BlockSpec((1, half), lambda i: (0, 0)),
            pl.BlockSpec((half, Cout), lambda i: (0, 0)),
            pl.BlockSpec((1, Cout), lambda i: (0, 0)),
            pl.BlockSpec((1, Cn), lambda i: (0, 0)),
            pl.BlockSpec((1, Cn), lambda i: (0, 0)),
        ],
        out_specs=pl.BlockSpec((1, num_spks, T, Cn), lambda i: (i, 0, 0, 0)),
        compiler_params=_PARALLEL_1D,
    )(x, w1a, p["b1_a"].reshape(1, -1), w1g, p["b1_g"].reshape(1, -1),
      w2, p["b2"].reshape(1, -1),
      p["gn_gamma"].reshape(1, -1), p["gn_beta"].reshape(1, -1))
    # torch view(B*num_spks, C, T): speaker is the outer factor of the channel split,
    # which is exactly the second axis here -> a free reshape.
    return y.reshape(B * num_spks, T, Cn)


def simple_fusion(x_up_btc, skip_btc, p):
    """Conv1d(2C->C, k=1) over cat([x_up, skip], channel), concat fused into the kernel.
    (B', T) is flattened to M and tiled so the two CxC weights stay resident."""
    Bp, T, C = x_up_btc.shape
    out_dtype = x_up_btc.dtype
    M = Bp * T
    xm = x_up_btc.reshape(M, C).astype(MATMUL_DTYPE)
    sm = skip_btc.reshape(M, C).astype(MATMUL_DTYPE)
    wx = p["w_x"].astype(MATMUL_DTYPE)
    ws = p["w_skip"].astype(MATMUL_DTYPE)
    tm = _pick_row_tile(M)
    y = pl.pallas_call(
        fusion_kernel,
        out_shape=jax.ShapeDtypeStruct((M, C), out_dtype),
        grid=(M // tm,),
        in_specs=[
            pl.BlockSpec((tm, C), lambda i: (i, 0)),
            pl.BlockSpec((tm, C), lambda i: (i, 0)),
            pl.BlockSpec((C, C), lambda i: (0, 0)),
            pl.BlockSpec((C, C), lambda i: (0, 0)),
            pl.BlockSpec((1, C), lambda i: (0, 0)),
        ],
        out_specs=pl.BlockSpec((tm, C), lambda i: (i, 0)),
        compiler_params=_PARALLEL_1D,
    )(xm, sm, wx, ws, p["b"].reshape(1, -1))
    return y.reshape(Bp, T, C)


def sep_enc_stage(x_btc, pos_k, p_downconv):
    # TODO(synk): GlobalBlock / LocalBlock definitions are not in the provided source; identity.
    skip = x_btc
    x = down_conv_layer(x_btc, p_downconv) if p_downconv is not None else x_btc
    return x, skip


def sep_dec_stage(x_btc, pos_k, num_spks):
    # TODO(synk): GlobalBlock / LocalBlock / SpkAttention definitions are not in the provided source; identity.
    return x_btc, x_btc


def upsample_nearest_cl(x_btc, size):
    """torch.nn.functional.upsample(x, size) (mode='nearest') in channel-last layout.
    Between stages this is always an exact 2x repeat -> cheap broadcast/reshape, no gather."""
    t_in = x_btc.shape[1]
    if size % t_in == 0:
        return jnp.repeat(x_btc, size // t_in, axis=1)
    idx = (jnp.arange(size) * t_in) // size            # general nearest fallback
    return x_btc[:, idx, :]


def pad_signal(x, num_stages):
    if x.ndim == 1:
        x = x[None, :]
    if x.ndim == 2:
        x = x[:, None, :]
    L = 2 ** num_stages
    nframe = x.shape[2]
    padded_len = (nframe // L + 1) * L
    rest = 0 if nframe % L == 0 else padded_len - nframe
    if rest > 0:
        pad = jnp.zeros(x.shape[:-1] + (rest,), x.dtype)
        x = jnp.concatenate([x, pad], axis=-1)
    return x, rest


# --------------------------------------------------------------------------- #
# Separator forward (jitted; NCT in / NCT out, channel-last internally)
# --------------------------------------------------------------------------- #
@functools.partial(jax.jit,
                   static_argnames=("num_stages", "num_spks", "maxlen", "compute_pos_k"))
def separator_forward(inp, params, *, num_stages, num_spks, maxlen, compute_pos_k=False):
    """inp: [B, N, L] (float32, NCT)."""
    x_nct, _ = pad_signal(inp, num_stages)
    len_x = x_nct.shape[-1]

    # Relative positional encoding (pe_k lookup).  Dead work while Global/Local blocks are
    # identity, so it is gated off by default.
    if compute_pos_k:
        t_b = len_x // (2 ** num_stages)
        pos = jnp.arange(t_b)
        pos_mat = jnp.clip(pos[:, None] - pos[None, :], -maxlen, maxlen - 1) + maxlen
        pos_k = params["pe_k"][pos_mat]                # [t_b, t_b, emb_dim]
    else:
        pos_k = None  # TODO(synk): required once the real Global/Local blocks are implemented.

    # Channel-last internally: one transpose in, one per output on the way out.
    x = jnp.transpose(x_nct, (0, 2, 1))                # [B, T, C]

    skips = []
    for idx in range(num_stages):
        x, skip_ = sep_enc_stage(x, pos_k, params["downconv"][idx])
        skips.append(spk_split_stage(skip_, params["spk_split"][idx], num_spks))

    x, _ = sep_enc_stage(x, pos_k, None)               # bottleneck_G (no downconv)
    x = spk_split_stage(x, params["spk_split"][-1], num_spks)

    each_stage_outputs = []
    for idx in range(num_stages):
        each_stage_outputs.append(x)
        idx_en = num_stages - (idx + 1)
        x_up = upsample_nearest_cl(x, skips[idx_en].shape[1])
        x = simple_fusion(x_up, skips[idx_en], params["fusion"][idx])
        x, _ = sep_dec_stage(x, pos_k, num_spks)

    last_stage_output = jnp.transpose(x, (0, 2, 1))                    # back to NCT
    each_stage_outputs = [jnp.transpose(e, (0, 2, 1)) for e in each_stage_outputs]
    return last_stage_output, each_stage_outputs


# --------------------------------------------------------------------------- #
# Deterministic parameter initialization
# --------------------------------------------------------------------------- #
def init_params(key, *, N, num_spks, num_stages, num_heads, maxlen, ksize):
    keys = iter(jax.random.split(key, 64))

    def nrm(shape, s=0.1):
        return s * jax.random.normal(next(keys), shape, jnp.float32)

    params = {"pe_k": nrm((2 * maxlen, N // num_heads))}

    params["downconv"] = []
    for _ in range(num_stages):
        params["downconv"].append(dict(
            dw_w=nrm((ksize, N)),                      # depthwise Conv1d weight, [K, C]
            dw_b=nrm((N,)),
            bn_gamma=1.0 + nrm((N,)),
            bn_beta=nrm((N,)),
            bn_mean=jnp.zeros((N,), jnp.float32),      # eval-mode running stats
            bn_var=jnp.ones((N,), jnp.float32),
        ))

    params["spk_split"] = []
    half = 2 * N * num_spks
    for _ in range(num_stages + 1):
        w1 = nrm((N, 4 * N * num_spks))                # Conv1d(N, 4NS, 1) weight^T
        b1 = nrm((4 * N * num_spks,))
        params["spk_split"].append(dict(
            # GLU(dim=channel): first half -> value path, second half -> gate (split on host
            # so the kernel never slices the 4NS-wide intermediate).
            w1_a=w1[:, :half], b1_a=b1[:half],
            w1_g=w1[:, half:], b1_g=b1[half:],
            w2=nrm((half, N * num_spks)),              # Conv1d(2NS, NS, 1) weight^T
            b2=nrm((N * num_spks,)),
            gn_gamma=1.0 + nrm((N,)),
            gn_beta=nrm((N,)),
        ))

    params["fusion"] = []
    for _ in range(num_stages):
        w = nrm((2 * N, N))                            # Conv1d(2N, N, 1) weight^T
        params["fusion"].append(dict(
            w_x=w[:N, :],                              # multiplies the upsampled decoder path
            w_skip=w[N:, :],                           # multiplies the encoder skip
            b=nrm((N,)),
        ))
    return params


# --------------------------------------------------------------------------- #
if __name__ == "__main__":
    key = jax.random.PRNGKey(0)
    kp, kx = jax.random.split(key)

    B, N, L = 2, 8, 32           # batch, channels, sequence length
    num_stages = 2
    num_spks = 2
    num_heads = 2
    maxlen = 8
    ksize = 5                    # samp_kernel_size of DownConvLayer

    params = init_params(kp, N=N, num_spks=num_spks, num_stages=num_stages,
                         num_heads=num_heads, maxlen=maxlen, ksize=ksize)
    x = jax.random.normal(kx, (B, N, L), jnp.float32)

    last, each = separator_forward(x, params, num_stages=num_stages,
                                   num_spks=num_spks, maxlen=maxlen)
    jax.block_until_ready(last)
    for e in each:
        jax.block_until_ready(e)

    assert last.shape == (B * num_spks, N, L)
    assert each[0].shape == (B * num_spks, N, L // 4)
    assert each[1].shape == (B * num_spks, N, L // 2)
    print("KERNEL_OK")
</pallas_src>

<mosaic_0001>
module attributes {stable_mosaic.version = 11 : i64} {
  func.func @spk_split_kernel(%arg0: i32, %arg1: memref<1x32x8xf32, #tpu.memory_space<vmem>>, %arg2: memref<8x32xf32, #tpu.memory_space<vmem>>, %arg3: memref<1x32xf32, #tpu.memory_space<vmem>>, %arg4: memref<8x32xf32, #tpu.memory_space<vmem>>, %arg5: memref<1x32xf32, #tpu.memory_space<vmem>>, %arg6: memref<32x16xf32, #tpu.memory_space<vmem>>, %arg7: memref<1x16xf32, #tpu.memory_space<vmem>>, %arg8: memref<1x8xf32, #tpu.memory_space<vmem>>, %arg9: memref<1x8xf32, #tpu.memory_space<vmem>>, %arg10: memref<1x2x32x8xf32, #tpu.memory_space<vmem>>) attributes {dimension_semantics = [#tpu.dimension_semantics<parallel>], iteration_bounds = array<i64: 2>, scalar_prefetch = 0 : i64, scratch_operands = 0 : i64, tpu.core_type = #tpu.core_type<tc>, window_params = [{transform_indices = @transform_0, window_bounds = array<i64: 1, 32, 8>}, {pipeline_mode = #tpu.pipeline_mode<synchronous>, transform_indices = @transform_1, window_bounds = array<i64: 8, 32>}, {pipeline_mode = #tpu.pipeline_mode<synchronous>, transform_indices = @transform_2, window_bounds = array<i64: 1, 32>}, {pipeline_mode = #tpu.pipeline_mode<synchronous>, transform_indices = @transform_3, window_bounds = array<i64: 8, 32>}, {pipeline_mode = #tpu.pipeline_mode<synchronous>, transform_indices = @transform_4, window_bounds = array<i64: 1, 32>}, {pipeline_mode = #tpu.pipeline_mode<synchronous>, transform_indices = @transform_5, window_bounds = array<i64: 32, 16>}, {pipeline_mode = #tpu.pipeline_mode<synchronous>, transform_indices = @transform_6, window_bounds = array<i64: 1, 16>}, {pipeline_mode = #tpu.pipeline_mode<synchronous>, transform_indices = @transform_7, window_bounds = array<i64: 1, 8>}, {pipeline_mode = #tpu.pipeline_mode<synchronous>, transform_indices = @transform_8, window_bounds = array<i64: 1, 8>}, {transform_indices = @transform_9, window_bounds = array<i64: 1, 2, 32, 8>}]} {
    %c0 = arith.constant 0 : index
    %c0_0 = arith.constant 0 : index
    %c0_1 = arith.constant 0 : index
    %0 = vector.load %arg1[%c0, %c0_0, %c0_1] : memref<1x32x8xf32, #tpu.memory_space<vmem>>, vector<1x32x8xf32>
    %1 = vector.shape_cast %0 : vector<1x32x8xf32> to vector<32x8xf32>
    %c0_2 = arith.constant 0 : index
    %c0_3 = arith.constant 0 : index
    %2 = vector.load %arg2[%c0_2, %c0_3] : memref<8x32xf32, #tpu.memory_space<vmem>>, vector<8x32xf32>
    %cst = arith.constant dense<0.000000e+00> : vector<32x32xf32>
    %3 = tpu.matmul %1, %2, %cst {dimension_numbers = #tpu.dot_dimension_numbers<[1], [0], [0], [1], [0, 0, 1, 1], [], []>} : vector<32x8xf32>, vector<8x32xf32>, vector<32x32xf32> -> vector<32x32xf32>
    %c0_4 = arith.constant 0 : index
    %c0_5 = arith.constant 0 : index
    %4 = vector.load %arg3[%c0_4, %c0_5] : memref<1x32xf32, #tpu.memory_space<vmem>>, vector<1x32xf32>
    %5 = vector.broadcast %4 : vector<1x32xf32> to vector<32x32xf32>
    %6 = arith.addf %3, %5 : vector<32x32xf32>
    %c0_6 = arith.constant 0 : index
    %c0_7 = arith.constant 0 : index
    %7 = vector.load %arg4[%c0_6, %c0_7] : memref<8x32xf32, #tpu.memory_space<vmem>>, vector<8x32xf32>
    %cst_8 = arith.constant dense<0.000000e+00> : vector<32x32xf32>
    %8 = tpu.matmul %1, %7, %cst_8 {dimension_numbers = #tpu.dot_dimension_numbers<[1], [0], [0], [1], [0, 0, 1, 1], [], []>} : vector<32x8xf32>, vector<8x32xf32>, vector<32x32xf32> -> vector<32x32xf32>
    %c0_9 = arith.constant 0 : index
    %c0_10 = arith.constant 0 : index
    %9 = vector.load %arg5[%c0_9, %c0_10] : memref<1x32xf32, #tpu.memory_space<vmem>>, vector<1x32xf32>
    %10 = vector.broadcast %9 : vector<1x32xf32> to vector<32x32xf32>
    %11 = arith.addf %8, %10 : vector<32x32xf32>
    %12 = arith.negf %11 : vector<32x32xf32>
    %13 = math.exp %12 : vector<32x32xf32>
    %cst_11 = arith.constant 1.000000e+00 : f32
    %14 = vector.broadcast %cst_11 : f32 to vector<32x32xf32>
    %15 = arith.addf %14, %13 : vector<32x32xf32>
    %16 = arith.divf %14, %15 : vector<32x32xf32>
    %17 = arith.mulf %6, %16 : vector<32x32xf32>
    %c0_12 = arith.constant 0 : index
    %c0_13 = arith.constant 0 : index
    %18 = vector.load %arg6[%c0_12, %c0_13] : memref<32x16xf32, #tpu.memory_space<vmem>>, vector<32x16xf32>
    %cst_14 = arith.constant dense<0.000000e+00> : vector<32x16xf32>
    %19 = tpu.matmul %17, %18, %cst_14 {dimension_numbers = #tpu.dot_dimension_numbers<[1], [0], [0], [1], [0, 0, 1, 1], [], []>} : vector<32x32xf32>, vector<32x16xf32>, vector<32x16xf32> -> vector<32x16xf32>
    %c0_15 = arith.constant 0 : index
    %c0_16 = arith.constant 0 : index
    %20 = vector.load %arg7[%c0_15, %c0_16] : memref<1x16xf32, #tpu.memory_space<vmem>>, vector<1x16xf32>
    %21 = vector.broadcast %20 : vector<1x16xf32> to vector<32x16xf32>
    %22 = arith.addf %19, %21 : vector<32x16xf32>
    %23 = vector.extract_strided_slice %22 {offsets = [0, 0], sizes = [32, 8], strides = [1, 1]} : vector<32x16xf32> to vector<32x8xf32>
    %24 = vector.shape_cast %23 : vector<32x8xf32> to vector<1x32x8xf32>
    %cst_17 = arith.constant dense<0.000000e+00> : vector<1xf32>
    %25 = vector.multi_reduction <add>, %24, %cst_17 [1, 2] : vector<1x32x8xf32> to vector<1xf32>
    %26 = vector.shape_cast %25 : vector<1xf32> to vector<1x1x1xf32>
    %27 = vector.extract %26[0, 0, 0] : f32 from vector<1x1x1xf32>
    %cst_18 = arith.constant 2.560000e+02 : f32
    %28 = arith.divf %27, %cst_18 : f32
    %29 = vector.broadcast %28 : f32 to vector<32x8xf32>
    %30 = arith.subf %23, %29 : vector<32x8xf32>
    %31 = arith.mulf %30, %30 : vector<32x8xf32>
    %32 = vector.shape_cast %31 : vector<32x8xf32> to vector<1x32x8xf32>
    %cst_19 = arith.constant dense<0.000000e+00> : vector<1xf32>
    %33 = vector.multi_reduction <add>, %32, %cst_19 [1, 2] : vector<1x32x8xf32> to vector<1xf32>
    %34 = vector.shape_cast %33 : vector<1xf32> to vector<1x1x1xf32>
    %35 = vector.extract %34[0, 0, 0] : f32 from vector<1x1x1xf32>
    %cst_20 = arith.constant 2.560000e+02 : f32
    %36 = arith.divf %35, %cst_20 : f32
    %cst_21 = arith.constant 9.99999993E-9 : f32
    %37 = arith.addf %36, %cst_21 : f32
    %38 = math.rsqrt %37 : f32
    %39 = vector.broadcast %38 : f32 to vector<32x8xf32>
    %40 = arith.mulf %30, %39 : vector<32x8xf32>
    %c0_22 = arith.constant 0 : index
    %c0_23 = arith.constant 0 : index
    %41 = vector.load %arg8[%c0_22, %c0_23] : memref<1x8xf32, #tpu.memory_space<vmem>>, vector<1x8xf32>
    %42 = vector.broadcast %41 : vector<1x8xf32> to vector<32x8xf32>
    %43 = arith.mulf %40, %42 : vector<32x8xf32>
    %c0_24 = arith.constant 0 : index
    %c0_25 = arith.constant 0 : index
    %44 = vector.load %arg9[%c0_24, %c0_25] : memref<1x8xf32, #tpu.memory_space<vmem>>, vector<1x8xf32>
    %45 = vector.broadcast %44 : vector<1x8xf32> to vector<32x8xf32>
    %46 = arith.addf %43, %45 : vector<32x8xf32>
    %c0_26 = arith.constant 0 : index
    %c0_27 = arith.constant 0 : index
    %c0_28 = arith.constant 0 : index
    %c0_29 = arith.constant 0 : index
    %47 = vector.load %arg10[%c0_26, %c0_27, %c0_28, %c0_29] : memref<1x2x32x8xf32, #tpu.memory_space<vmem>>, vector<1x1x32x8xf32>
    %48 = vector.shape_cast %47 : vector<1x1x32x8xf32> to vector<32x8xf32>
    %49 = vector.shape_cast %46 : vector<32x8xf32> to vector<1x1x32x8xf32>
    tpu.vector_store %arg10[%c0_26, %c0_27, %c0_28, %c0_29], %49 {strides = array<i32>} : memref<1x2x32x8xf32, #tpu.memory_space<vmem>>, vector<1x1x32x8xf32>,
    %50 = vector.extract_strided_slice %22 {offsets = [0, 8], sizes = [32, 8], strides = [1, 1]} : vector<32x16xf32> to vector<32x8xf32>
    %51 = vector.shape_cast %50 : vector<32x8xf32> to vector<1x32x8xf32>
    %cst_30 = arith.constant dense<0.000000e+00> : vector<1xf32>
    %52 = vector.multi_reduction <add>, %51, %cst_30 [1, 2] : vector<1x32x8xf32> to vector<1xf32>
    %53 = vector.shape_cast %52 : vector<1xf32> to vector<1x1x1xf32>
    %54 = vector.extract %53[0, 0, 0] : f32 from vector<1x1x1xf32>
    %cst_31 = arith.constant 2.560000e+02 : f32
    %55 = arith.divf %54, %cst_31 : f32
    %56 = vector.broadcast %55 : f32 to vector<32x8xf32>
    %57 = arith.subf %50, %56 : vector<32x8xf32>
    %58 = arith.mulf %57, %57 : vector<32x8xf32>
    %59 = vector.shape_cast %58 : vector<32x8xf32> to vector<1x32x8xf32>
    %cst_32 = arith.constant dense<0.000000e+00> : vector<1xf32>
    %60 = vector.multi_reduction <add>, %59, %cst_32 [1, 2] : vector<1x32x8xf32> to vector<1xf32>
    %61 = vector.shape_cast %60 : vector<1xf32> to vector<1x1x1xf32>
    %62 = vector.extract %61[0, 0, 0] : f32 from vector<1x1x1xf32>
    %cst_33 = arith.constant 2.560000e+02 : f32
    %63 = arith.divf %62, %cst_33 : f32
    %cst_34 = arith.constant 9.99999993E-9 : f32
    %64 = arith.addf %63, %cst_34 : f32
    %65 = math.rsqrt %64 : f32
    %66 = vector.broadcast %65 : f32 to vector<32x8xf32>
    %67 = arith.mulf %57, %66 : vector<32x8xf32>
    %c0_35 = arith.constant 0 : index
    %c0_36 = arith.constant 0 : index
    %68 = vector.load %arg8[%c0_35, %c0_36] : memref<1x8xf32, #tpu.memory_space<vmem>>, vector<1x8xf32>
    %69 = vector.broadcast %68 : vector<1x8xf32> to vector<32x8xf32>
    %70 = arith.mulf %67, %69 : vector<32x8xf32>
    %c0_37 = arith.constant 0 : index
    %c0_38 = arith.constant 0 : index
    %71 = vector.load %arg9[%c0_37, %c0_38] : memref<1x8xf32, #tpu.memory_space<vmem>>, vector<1x8xf32>
    %72 = vector.broadcast %71 : vector<1x8xf32> to vector<32x8xf32>
    %73 = arith.addf %70, %72 : vector<32x8xf32>
    %c0_39 = arith.constant 0 : index
    %c1 = arith.constant 1 : index
    %c0_40 = arith.constant 0 : index
    %c0_41 = arith.constant 0 : index
    %74 = vector.load %arg10[%c0_39, %c1, %c0_40, %c0_41] : memref<1x2x32x8xf32, #tpu.memory_space<vmem>>, vector<1x1x32x8xf32>
    %75 = vector.shape_cast %74 : vector<1x1x32x8xf32> to vector<32x8xf32>
    %76 = vector.shape_cast %73 : vector<32x8xf32> to vector<1x1x32x8xf32>
    tpu.vector_store %arg10[%c0_39, %c1, %c0_40, %c0_41], %76 {strides = array<i32>} : memref<1x2x32x8xf32, #tpu.memory_space<vmem>>, vector<1x1x32x8xf32>,
    return
  }
  func.func @transform_0(%arg0: i32) -> (i32, i32, i32) {
    %c0_i32 = arith.constant 0 : i32
    %c0_i32_0 = arith.constant 0 : i32
    %c0_i32_1 = arith.constant 0 : i32
    return %arg0, %c0_i32, %c0_i32_0 : i32, i32, i32
  }
  func.func @transform_1(%arg0: i32) -> (i32, i32) {
    %c0_i32 = arith.constant 0 : i32
    %c0_i32_0 = arith.constant 0 : i32
    %c0_i32_1 = arith.constant 0 : i32
    return %c0_i32, %c0_i32_0 : i32, i32
  }
  func.func @transform_2(%arg0: i32) -> (i32, i32) {
    %c0_i32 = arith.constant 0 : i32
    %c0_i32_0 = arith.constant 0 : i32
    %c0_i32_1 = arith.constant 0 : i32
    return %c0_i32, %c0_i32_0 : i32, i32
  }
  func.func @transform_3(%arg0: i32) -> (i32, i32) {
    %c0_i32 = arith.constant 0 : i32
    %c0_i32_0 = arith.constant 0 : i32
    %c0_i32_1 = arith.constant 0 : i32
    return %c0_i32, %c0_i32_0 : i32, i32
  }
  func.func @transform_4(%arg0: i32) -> (i32, i32) {
    %c0_i32 = arith.constant 0 : i32
    %c0_i32_0 = arith.constant 0 : i32
    %c0_i32_1 = arith.constant 0 : i32
    return %c0_i32, %c0_i32_0 : i32, i32
  }
  func.func @transform_5(%arg0: i32) -> (i32, i32) {
    %c0_i32 = arith.constant 0 : i32
    %c0_i32_0 = arith.constant 0 : i32
    %c0_i32_1 = arith.constant 0 : i32
    return %c0_i32, %c0_i32_0 : i32, i32
  }
  func.func @transform_6(%arg0: i32) -> (i32, i32) {
    %c0_i32 = arith.constant 0 : i32
    %c0_i32_0 = arith.constant 0 : i32
    %c0_i32_1 = arith.constant 0 : i32
    return %c0_i32, %c0_i32_0 : i32, i32
  }
  func.func @transform_7(%arg0: i32) -> (i32, i32) {
    %c0_i32 = arith.constant 0 : i32
    %c0_i32_0 = arith.constant 0 : i32
    %c0_i32_1 = arith.constant 0 : i32
    return %c0_i32, %c0_i32_0 : i32, i32
  }
  func.func @transform_8(%arg0: i32) -> (i32, i32) {
    %c0_i32 = arith.constant 0 : i32
    %c0_i32_0 = arith.constant 0 : i32
    %c0_i32_1 = arith.constant 0 : i32
    return %c0_i32, %c0_i32_0 : i32, i32
  }
  func.func @transform_9(%arg0: i32) -> (i32, i32, i32, i32) {
    %c0_i32 = arith.constant 0 : i32
    %c0_i32_0 = arith.constant 0 : i32
    %c0_i32_1 = arith.constant 0 : i32
    %c0_i32_2 = arith.constant 0 : i32
    return %arg0, %c0_i32, %c0_i32_0, %c0_i32_1 : i32, i32, i32, i32
  }
}

module attributes {stable_mosaic.version = 11 : i64} {
  func.func @spk_split_kernel(%arg0: i32, %arg1: memref<1x16x8xf32, #tpu.memory_space<vmem>>, %arg2: memref<8x32xf32, #tpu.memory_space<vmem>>, %arg3: memref<1x32xf32, #tpu.memory_space<vmem>>, %arg4: memref<8x32xf32, #tpu.memory_space<vmem>>, %arg5: memref<1x32xf32, #tpu.memory_space<vmem>>, %arg6: memref<32x16xf32, #tpu.memory_space<vmem>>, %arg7: memref<1x16xf32, #tpu.memory_space<vmem>>, %arg8: memref<1x8xf32, #tpu.memory_space<vmem>>, %arg9: memref<1x8xf32, #tpu.memory_space<vmem>>, %arg10: memref<1x2x16x8xf32, #tpu.memory_space<vmem>>) attributes {dimension_semantics = [#tpu.dimension_semantics<parallel>], iteration_bounds = array<i64: 2>, scalar_prefetch = 0 : i64, scratch_operands = 0 : i64, tpu.core_type = #tpu.core_type<tc>, window_params = [{transform_indices = @transform_0, window_bounds = array<i64: 1, 16, 8>}, {pipeline_mode = #tpu.pipeline_mode<synchronous>, transform_indices = @transform_1, window_bounds = array<i64: 8, 32>}, {pipeline_mode = #tpu.pipeline_mode<synchronous>, transform_indices = @transform_2, window_bounds = array<i64: 1, 32>}, {pipeline_mode = #tpu.pipeline_mode<synchronous>, transform_indices = @transform_3, window_bounds = array<i64: 8, 32>}, {pipeline_mode = #tpu.pipeline_mode<synchronous>, transform_indices = @transform_4, window_bounds = array<i64: 1, 32>}, {pipeline_mode = #tpu.pipeline_mode<synchronous>, transform_indices = @transform_5, window_bounds = array<i64: 32, 16>}, {pipeline_mode = #tpu.pipeline_mode<synchronous>, transform_indices = @transform_6, window_bounds = array<i64: 1, 16>}, {pipeline_mode = #tpu.pipeline_mode<synchronous>, transform_indices = @transform_7, window_bounds = array<i64: 1, 8>}, {pipeline_mode = #tpu.pipeline_mode<synchronous>, transform_indices = @transform_8, window_bounds = array<i64: 1, 8>}, {transform_indices = @transform_9, window_bounds = array<i64: 1, 2, 16, 8>}]} {
    %c0 = arith.constant 0 : index
    %c0_0 = arith.constant 0 : index
    %c0_1 = arith.constant 0 : index
    %0 = vector.load %arg1[%c0, %c0_0, %c0_1] : memref<1x16x8xf32, #tpu.memory_space<vmem>>, vector<1x16x8xf32>
    %1 = vector.shape_cast %0 : vector<1x16x8xf32> to vector<16x8xf32>
    %c0_2 = arith.constant 0 : index
    %c0_3 = arith.constant 0 : index
    %2 = vector.load %arg2[%c0_2, %c0_3] : memref<8x32xf32, #tpu.memory_space<vmem>>, vector<8x32xf32>
    %cst = arith.constant dense<0.000000e+00> : vector<16x32xf32>
    %3 = tpu.matmul %1, %2, %cst {dimension_numbers = #tpu.dot_dimension_numbers<[1], [0], [0], [1], [0, 0, 1, 1], [], []>} : vector<16x8xf32>, vector<8x32xf32>, vector<16x32xf32> -> vector<16x32xf32>
    %c0_4 = arith.constant 0 : index
    %c0_5 = arith.constant 0 : index
    %4 = vector.load %arg3[%c0_4, %c0_5] : memref<1x32xf32, #tpu.memory_space<vmem>>, vector<1x32xf32>
    %5 = vector.broadcast %4 : vector<1x32xf32> to vector<16x32xf32>
    %6 = arith.addf %3, %5 : vector<16x32xf32>
    %c0_6 = arith.constant 0 : index
    %c0_7 = arith.constant 0 : index
    %7 = vector.load %arg4[%c0_6, %c0_7] : memref<8x32xf32, #tpu.memory_space<vmem>>, vector<8x32xf32>
    %cst_8 = arith.constant dense<0.000000e+00> : vector<16x32xf32>
    %8 = tpu.matmul %1, %7, %cst_8 {dimension_numbers = #tpu.dot_dimension_numbers<[1], [0], [0], [1], [0, 0, 1, 1], [], []>} : vector<16x8xf32>, vector<8x32xf32>, vector<16x32xf32> -> vector<16x32xf32>
    %c0_9 = arith.constant 0 : index
    %c0_10 = arith.constant 0 : index
    %9 = vector.load %arg5[%c0_9, %c0_10] : memref<1x32xf32, #tpu.memory_space<vmem>>, vector<1x32xf32>
    %10 = vector.broadcast %9 : vector<1x32xf32> to vector<16x32xf32>
    %11 = arith.addf %8, %10 : vector<16x32xf32>
    %12 = arith.negf %11 : vector<16x32xf32>
    %13 = math.exp %12 : vector<16x32xf32>
    %cst_11 = arith.constant 1.000000e+00 : f32
    %14 = vector.broadcast %cst_11 : f32 to vector<16x32xf32>
    %15 = arith.addf %14, %13 : vector<16x32xf32>
    %16 = arith.divf %14, %15 : vector<16x32xf32>
    %17 = arith.mulf %6, %16 : vector<16x32xf32>
    %c0_12 = arith.constant 0 : index
    %c0_13 = arith.constant 0 : index
    %18 = vector.load %arg6[%c0_12, %c0_13] : memref<32x16xf32, #tpu.memory_space<vmem>>, vector<32x16xf32>
    %cst_14 = arith.constant dense<0.000000e+00> : vector<16x16xf32>
    %19 = tpu.matmul %17, %18, %cst_14 {dimension_numbers = #tpu.dot_dimension_numbers<[1], [0], [0], [1], [0, 0, 1, 1], [], []>} : vector<16x32xf32>, vector<32x16xf32>, vector<16x16xf32> -> vector<16x16xf32>
    %c0_15 = arith.constant 0 : index
    %c0_16 = arith.constant 0 : index
    %20 = vector.load %arg7[%c0_15, %c0_16] : memref<1x16xf32, #tpu.memory_space<vmem>>, vector<1x16xf32>
    %21 = vector.broadcast %20 : vector<1x16xf32> to vector<16x16xf32>
    %22 = arith.addf %19, %21 : vector<16x16xf32>
    %23 = vector.extract_strided_slice %22 {offsets = [0, 0], sizes = [16, 8], strides = [1, 1]} : vector<16x16xf32> to vector<16x8xf32>
    %24 = vector.shape_cast %23 : vector<16x8xf32> to vector<1x16x8xf32>
    %cst_17 = arith.constant dense<0.000000e+00> : vector<1xf32>
    %25 = vector.multi_reduction <add>, %24, %cst_17 [1, 2] : vector<1x16x8xf32> to vector<1xf32>
    %26 = vector.shape_cast %25 : vector<1xf32> to vector<1x1x1xf32>
    %27 = vector.extract %26[0, 0, 0] : f32 from vector<1x1x1xf32>
    %cst_18 = arith.constant 1.280000e+02 : f32
    %28 = arith.divf %27, %cst_18 : f32
    %29 = vector.broadcast %28 : f32 to vector<16x8xf32>
    %30 = arith.subf %23, %29 : vector<16x8xf32>
    %31 = arith.mulf %30, %30 : vector<16x8xf32>
    %32 = vector.shape_cast %31 : vector<16x8xf32> to vector<1x16x8xf32>
    %cst_19 = arith.constant dense<0.000000e+00> : vector<1xf32>
    %33 = vector.multi_reduction <add>, %32, %cst_19 [1, 2] : vector<1x16x8xf32> to vector<1xf32>
    %34 = vector.shape_cast %33 : vector<1xf32> to vector<1x1x1xf32>
    %35 = vector.extract %34[0, 0, 0] : f32 from vector<1x1x1xf32>
    %cst_20 = arith.constant 1.280000e+02 : f32
    %36 = arith.divf %35, %cst_20 : f32
    %cst_21 = arith.constant 9.99999993E-9 : f32
    %37 = arith.addf %36, %cst_21 : f32
    %38 = math.rsqrt %37 : f32
    %39 = vector.broadcast %38 : f32 to vector<16x8xf32>
    %40 = arith.mulf %30, %39 : vector<16x8xf32>
    %c0_22 = arith.constant 0 : index
    %c0_23 = arith.constant 0 : index
    %41 = vector.load %arg8[%c0_22, %c0_23] : memref<1x8xf32, #tpu.memory_space<vmem>>, vector<1x8xf32>
    %42 = vector.broadcast %41 : vector<1x8xf32> to vector<16x8xf32>
    %43 = arith.mulf %40, %42 : vector<16x8xf32>
    %c0_24 = arith.constant 0 : index
    %c0_25 = arith.constant 0 : index
    %44 = vector.load %arg9[%c0_24, %c0_25] : memref<1x8xf32, #tpu.memory_space<vmem>>, vector<1x8xf32>
    %45 = vector.broadcast %44 : vector<1x8xf32> to vector<16x8xf32>
    %46 = arith.addf %43, %45 : vector<16x8xf32>
    %c0_26 = arith.constant 0 : index
    %c0_27 = arith.constant 0 : index
    %c0_28 = arith.constant 0 : index
    %c0_29 = arith.constant 0 : index
    %47 = vector.load %arg10[%c0_26, %c0_27, %c0_28, %c0_29] : memref<1x2x16x8xf32, #tpu.memory_space<vmem>>, vector<1x1x16x8xf32>
    %48 = vector.shape_cast %47 : vector<1x1x16x8xf32> to vector<16x8xf32>
    %49 = vector.shape_cast %46 : vector<16x8xf32> to vector<1x1x16x8xf32>
    tpu.vector_store %arg10[%c0_26, %c0_27, %c0_28, %c0_29], %49 {strides = array<i32>} : memref<1x2x16x8xf32, #tpu.memory_space<vmem>>, vector<1x1x16x8xf32>,
    %50 = vector.extract_strided_slice %22 {offsets = [0, 8], sizes = [16, 8], strides = [1, 1]} : vector<16x16xf32> to vector<16x8xf32>
    %51 = vector.shape_cast %50 : vector<16x8xf32> to vector<1x16x8xf32>
    %cst_30 = arith.constant dense<0.000000e+00> : vector<1xf32>
    %52 = vector.multi_reduction <add>, %51, %cst_30 [1, 2] : vector<1x16x8xf32> to vector<1xf32>
    %53 = vector.shape_cast %52 : vector<1xf32> to vector<1x1x1xf32>
    %54 = vector.extract %53[0, 0, 0] : f32 from vector<1x1x1xf32>
    %cst_31 = arith.constant 1.280000e+02 : f32
    %55 = arith.divf %54, %cst_31 : f32
    %56 = vector.broadcast %55 : f32 to vector<16x8xf32>
    %57 = arith.subf %50, %56 : vector<16x8xf32>
    %58 = arith.mulf %57, %57 : vector<16x8xf32>
    %59 = vector.shape_cast %58 : vector<16x8xf32> to vector<1x16x8xf32>
    %cst_32 = arith.constant dense<0.000000e+00> : vector<1xf32>
    %60 = vector.multi_reduction <add>, %59, %cst_32 [1, 2] : vector<1x16x8xf32> to vector<1xf32>
    %61 = vector.shape_cast %60 : vector<1xf32> to vector<1x1x1xf32>
    %62 = vector.extract %61[0, 0, 0] : f32 from vector<1x1x1xf32>
    %cst_33 = arith.constant 1.280000e+02 : f32
    %63 = arith.divf %62, %cst_33 : f32
    %cst_34 = arith.constant 9.99999993E-9 : f32
    %64 = arith.addf %63, %cst_34 : f32
    %65 = math.rsqrt %64 : f32
    %66 = vector.broadcast %65 : f32 to vector<16x8xf32>
    %67 = arith.mulf %57, %66 : vector<16x8xf32>
    %c0_35 = arith.constant 0 : index
    %c0_36 = arith.constant 0 : index
    %68 = vector.load %arg8[%c0_35, %c0_36] : memref<1x8xf32, #tpu.memory_space<vmem>>, vector<1x8xf32>
    %69 = vector.broadcast %68 : vector<1x8xf32> to vector<16x8xf32>
    %70 = arith.mulf %67, %69 : vector<16x8xf32>
    %c0_37 = arith.constant 0 : index
    %c0_38 = arith.constant 0 : index
    %71 = vector.load %arg9[%c0_37, %c0_38] : memref<1x8xf32, #tpu.memory_space<vmem>>, vector<1x8xf32>
    %72 = vector.broadcast %71 : vector<1x8xf32> to vector<16x8xf32>
    %73 = arith.addf %70, %72 : vector<16x8xf32>
    %c0_39 = arith.constant 0 : index
    %c1 = arith.constant 1 : index
    %c0_40 = arith.constant 0 : index
    %c0_41 = arith.constant 0 : index
    %74 = vector.load %arg10[%c0_39, %c1, %c0_40, %c0_41] : memref<1x2x16x8xf32, #tpu.memory_space<vmem>>, vector<1x1x16x8xf32>
    %75 = vector.shape_cast %74 : vector<1x1x16x8xf32> to vector<16x8xf32>
    %76 = vector.shape_cast %73 : vector<16x8xf32> to vector<1x1x16x8xf32>
    tpu.vector_store %arg10[%c0_39, %c1, %c0_40, %c0_41], %76 {strides = array<i32>} : memref<1x2x16x8xf32, #tpu.memory_space<vmem>>, vector<1x1x16x8xf32>,
    return
  }
  func.func @transform_0(%arg0: i32) -> (i32, i32, i32) {
    %c0_i32 = arith.constant 0 : i32
    %c0_i32_0 = arith.constant 0 : i32
    %c0_i32_1 = arith.constant 0 : i32
    return %arg0, %c0_i32, %c0_i32_0 : i32, i32, i32
  }
  func.func @transform_1(%arg0: i32) -> (i32, i32) {
    %c0_i32 = arith.constant 0 : i32
    %c0_i32_0 = arith.constant 0 : i32
    %c0_i32_1 = arith.constant 0 : i32
    return %c0_i32, %c0_i32_0 : i32, i32
  }
  func.func @transform_2(%arg0: i32) -> (i32, i32) {
    %c0_i32 = arith.constant 0 : i32
    %c0_i32_0 = arith.constant 0 : i32
    %c0_i32_1 = arith.constant 0 : i32
    return %c0_i32, %c0_i32_0 : i32, i32
  }
  func.func @transform_3(%arg0: i32) -> (i32, i32) {
    %c0_i32 = arith.constant 0 : i32
    %c0_i32_0 = arith.constant 0 : i32
    %c0_i32_1 = arith.constant 0 : i32
    return %c0_i32, %c0_i32_0 : i32, i32
  }
  func.func @transform_4(%arg0: i32) -> (i32, i32) {
    %c0_i32 = arith.constant 0 : i32
    %c0_i32_0 = arith.constant 0 : i32
    %c0_i32_1 = arith.constant 0 : i32
    return %c0_i32, %c0_i32_0 : i32, i32
  }
  func.func @transform_5(%arg0: i32) -> (i32, i32) {
    %c0_i32 = arith.constant 0 : i32
    %c0_i32_0 = arith.constant 0 : i32
    %c0_i32_1 = arith.constant 0 : i32
    return %c0_i32, %c0_i32_0 : i32, i32
  }
  func.func @transform_6(%arg0: i32) -> (i32, i32) {
    %c0_i32 = arith.constant 0 : i32
    %c0_i32_0 = arith.constant 0 : i32
    %c0_i32_1 = arith.constant 0 : i32
    return %c0_i32, %c0_i32_0 : i32, i32
  }
  func.func @transform_7(%arg0: i32) -> (i32, i32) {
    %c0_i32 = arith.constant 0 : i32
    %c0_i32_0 = arith.constant 0 : i32
    %c0_i32_1 = arith.constant 0 : i32
    return %c0_i32, %c0_i32_0 : i32, i32
  }
  func.func @transform_8(%arg0: i32) -> (i32, i32) {
    %c0_i32 = arith.constant 0 : i32
    %c0_i32_0 = arith.constant 0 : i32
    %c0_i32_1 = arith.constant 0 : i32
    return %c0_i32, %c0_i32_0 : i32, i32
  }
  func.func @transform_9(%arg0: i32) -> (i32, i32, i32, i32) {
    %c0_i32 = arith.constant 0 : i32
    %c0_i32_0 = arith.constant 0 : i32
    %c0_i32_1 = arith.constant 0 : i32
    %c0_i32_2 = arith.constant 0 : i32
    return %arg0, %c0_i32, %c0_i32_0, %c0_i32_1 : i32, i32, i32, i32
  }
}

module attributes {stable_mosaic.version = 11 : i64} {
  func.func @downconv_kernel(%arg0: i32, %arg1: memref<1x18x8xf32, #tpu.memory_space<vmem>>, %arg2: memref<1x18x8xf32, #tpu.memory_space<vmem>>, %arg3: memref<5x8xf32, #tpu.memory_space<vmem>>, %arg4: memref<1x8xf32, #tpu.memory_space<vmem>>, %arg5: memref<1x8xf32, #tpu.memory_space<vmem>>, %arg6: memref<1x16x8xf32, #tpu.memory_space<vmem>>) attributes {dimension_semantics = [#tpu.dimension_semantics<parallel>], iteration_bounds = array<i64: 2>, scalar_prefetch = 0 : i64, scratch_operands = 0 : i64, tpu.core_type = #tpu.core_type<tc>, window_params = [{transform_indices = @transform_0, window_bounds = array<i64: 1, 18, 8>}, {transform_indices = @transform_1, window_bounds = array<i64: 1, 18, 8>}, {pipeline_mode = #tpu.pipeline_mode<synchronous>, transform_indices = @transform_2, window_bounds = array<i64: 5, 8>}, {pipeline_mode = #tpu.pipeline_mode<synchronous>, transform_indices = @transform_3, window_bounds = array<i64: 1, 8>}, {pipeline_mode = #tpu.pipeline_mode<synchronous>, transform_indices = @transform_4, window_bounds = array<i64: 1, 8>}, {transform_indices = @transform_5, window_bounds = array<i64: 1, 16, 8>}]} {
    %c0 = arith.constant 0 : index
    %c0_0 = arith.constant 0 : index
    %c0_1 = arith.constant 0 : index
    %0 = vector.load %arg1[%c0, %c0_0, %c0_1] : memref<1x18x8xf32, #tpu.memory_space<vmem>>, vector<1x18x8xf32>
    %1 = vector.shape_cast %0 : vector<1x18x8xf32> to vector<18x8xf32>
    %c0_2 = arith.constant 0 : index
    %c0_3 = arith.constant 0 : index
    %c0_4 = arith.constant 0 : index
    %2 = vector.load %arg2[%c0_2, %c0_3, %c0_4] : memref<1x18x8xf32, #tpu.memory_space<vmem>>, vector<1x18x8xf32>
    %3 = vector.shape_cast %2 : vector<1x18x8xf32> to vector<18x8xf32>
    %c0_5 = arith.constant 0 : index
    %c0_6 = arith.constant 0 : index
    %4 = vector.load %arg3[%c0_5, %c0_6] : memref<5x8xf32, #tpu.memory_space<vmem>>, vector<5x8xf32>
    %cst = arith.constant 0.000000e+00 : f32
    %5 = vector.broadcast %cst : f32 to vector<16x8xf32>
    %6 = vector.extract_strided_slice %1 {offsets = [0, 0], sizes = [16, 8], strides = [1, 1]} : vector<18x8xf32> to vector<16x8xf32>
    %7 = vector.extract_strided_slice %4 {offsets = [0, 0], sizes = [1, 8], strides = [1, 1]} : vector<5x8xf32> to vector<1x8xf32>
    %8 = vector.broadcast %7 : vector<1x8xf32> to vector<16x8xf32>
    %9 = arith.mulf %6, %8 : vector<16x8xf32>
    %10 = arith.addf %5, %9 : vector<16x8xf32>
    %11 = vector.extract_strided_slice %3 {offsets = [0, 0], sizes = [16, 8], strides = [1, 1]} : vector<18x8xf32> to vector<16x8xf32>
    %12 = vector.extract_strided_slice %4 {offsets = [1, 0], sizes = [1, 8], strides = [1, 1]} : vector<5x8xf32> to vector<1x8xf32>
    %13 = vector.broadcast %12 : vector<1x8xf32> to vector<16x8xf32>
    %14 = arith.mulf %11, %13 : vector<16x8xf32>
    %15 = arith.addf %10, %14 : vector<16x8xf32>
    %16 = vector.extract_strided_slice %1 {offsets = [1, 0], sizes = [16, 8], strides = [1, 1]} : vector<18x8xf32> to vector<16x8xf32>
    %17 = vector.extract_strided_slice %4 {offsets = [2, 0], sizes = [1, 8], strides = [1, 1]} : vector<5x8xf32> to vector<1x8xf32>
    %18 = vector.broadcast %17 : vector<1x8xf32> to vector<16x8xf32>
    %19 = arith.mulf %16, %18 : vector<16x8xf32>
    %20 = arith.addf %15, %19 : vector<16x8xf32>
    %21 = vector.extract_strided_slice %3 {offsets = [1, 0], sizes = [16, 8], strides = [1, 1]} : vector<18x8xf32> to vector<16x8xf32>
    %22 = vector.extract_strided_slice %4 {offsets = [3, 0], sizes = [1, 8], strides = [1, 1]} : vector<5x8xf32> to vector<1x8xf32>
    %23 = vector.broadcast %22 : vector<1x8xf32> to vector<16x8xf32>
    %24 = arith.mulf %21, %23 : vector<16x8xf32>
    %25 = arith.addf %20, %24 : vector<16x8xf32>
    %26 = vector.extract_strided_slice %1 {offsets = [2, 0], sizes = [16, 8], strides = [1, 1]} : vector<18x8xf32> to vector<16x8xf32>
    %27 = vector.extract_strided_slice %4 {offsets = [4, 0], sizes = [1, 8], strides = [1, 1]} : vector<5x8xf32> to vector<1x8xf32>
    %28 = vector.broadcast %27 : vector<1x8xf32> to vector<16x8xf32>
    %29 = arith.mulf %26, %28 : vector<16x8xf32>
    %30 = arith.addf %25, %29 : vector<16x8xf32>
    %c0_7 = arith.constant 0 : index
    %c0_8 = arith.constant 0 : index
    %31 = vector.load %arg4[%c0_7, %c0_8] : memref<1x8xf32, #tpu.memory_space<vmem>>, vector<1x8xf32>
    %32 = vector.broadcast %31 : vector<1x8xf32> to vector<16x8xf32>
    %33 = arith.mulf %30, %32 : vector<16x8xf32>
    %c0_9 = arith.constant 0 : index
    %c0_10 = arith.constant 0 : index
    %34 = vector.load %arg5[%c0_9, %c0_10] : memref<1x8xf32, #tpu.memory_space<vmem>>, vector<1x8xf32>
    %35 = vector.broadcast %34 : vector<1x8xf32> to vector<16x8xf32>
    %36 = arith.addf %33, %35 : vector<16x8xf32>
    %cst_11 = arith.constant 5.000000e-01 : f32
    %37 = vector.broadcast %cst_11 : f32 to vector<16x8xf32>
    %38 = arith.mulf %37, %36 : vector<16x8xf32>
    %cst_12 = arith.constant 0.707106769 : f32
    %39 = vector.broadcast %cst_12 : f32 to vector<16x8xf32>
    %40 = arith.mulf %36, %39 : vector<16x8xf32>
    %41 = math.erf %40 : vector<16x8xf32>
    %cst_13 = arith.constant 1.000000e+00 : f32
    %42 = vector.broadcast %cst_13 : f32 to vector<16x8xf32>
    %43 = arith.addf %42, %41 : vector<16x8xf32>
    %44 = arith.mulf %38, %43 : vector<16x8xf32>
    %c0_14 = arith.constant 0 : index
    %c0_15 = arith.constant 0 : index
    %c0_16 = arith.constant 0 : index
    %45 = vector.load %arg6[%c0_14, %c0_15, %c0_16] : memref<1x16x8xf32, #tpu.memory_space<vmem>>, vector<1x16x8xf32>
    %46 = vector.shape_cast %45 : vector<1x16x8xf32> to vector<16x8xf32>
    %47 = vector.shape_cast %44 : vector<16x8xf32> to vector<1x16x8xf32>
    tpu.vector_store %arg6[%c0_14, %c0_15, %c0_16], %47 {strides = array<i32>} : memref<1x16x8xf32, #tpu.memory_space<vmem>>, vector<1x16x8xf32>,
    return
  }
  func.func @transform_0(%arg0: i32) -> (i32, i32, i32) {
    %c0_i32 = arith.constant 0 : i32
    %c0_i32_0 = arith.constant 0 : i32
    %c0_i32_1 = arith.constant 0 : i32
    return %arg0, %c0_i32, %c0_i32_0 : i32, i32, i32
  }
  func.func @transform_1(%arg0: i32) -> (i32, i32, i32) {
    %c0_i32 = arith.constant 0 : i32
    %c0_i32_0 = arith.constant 0 : i32
    %c0_i32_1 = arith.constant 0 : i32
    return %arg0, %c0_i32, %c0_i32_0 : i32, i32, i32
  }
  func.func @transform_2(%arg0: i32) -> (i32, i32) {
    %c0_i32 = arith.constant 0 : i32
    %c0_i32_0 = arith.constant 0 : i32
    %c0_i32_1 = arith.constant 0 : i32
    return %c0_i32, %c0_i32_0 : i32, i32
  }
  func.func @transform_3(%arg0: i32) -> (i32, i32) {
    %c0_i32 = arith.constant 0 : i32
    %c0_i32_0 = arith.constant 0 : i32
    %c0_i32_1 = arith.constant 0 : i32
    return %c0_i32, %c0_i32_0 : i32, i32
  }
  func.func @transform_4(%arg0: i32) -> (i32, i32) {
    %c0_i32 = arith.constant 0 : i32
    %c0_i32_0 = arith.constant 0 : i32
    %c0_i32_1 = arith.constant 0 : i32
    return %c0_i32, %c0_i32_0 : i32, i32
  }
  func.func @transform_5(%arg0: i32) -> (i32, i32, i32) {
    %c0_i32 = arith.constant 0 : i32
    %c0_i32_0 = arith.constant 0 : i32
    %c0_i32_1 = arith.constant 0 : i32
    return %arg0, %c0_i32, %c0_i32_0 : i32, i32, i32
  }
}

module attributes {stable_mosaic.version = 11 : i64} {
  func.func @downconv_kernel(%arg0: i32, %arg1: memref<1x10x8xf32, #tpu.memory_space<vmem>>, %arg2: memref<1x10x8xf32, #tpu.memory_space<vmem>>, %arg3: memref<5x8xf32, #tpu.memory_space<vmem>>, %arg4: memref<1x8xf32, #tpu.memory_space<vmem>>, %arg5: memref<1x8xf32, #tpu.memory_space<vmem>>, %arg6: memref<1x8x8xf32, #tpu.memory_space<vmem>>) attributes {dimension_semantics = [#tpu.dimension_semantics<parallel>], iteration_bounds = array<i64: 2>, scalar_prefetch = 0 : i64, scratch_operands = 0 : i64, tpu.core_type = #tpu.core_type<tc>, window_params = [{transform_indices = @transform_0, window_bounds = array<i64: 1, 10, 8>}, {transform_indices = @transform_1, window_bounds = array<i64: 1, 10, 8>}, {pipeline_mode = #tpu.pipeline_mode<synchronous>, transform_indices = @transform_2, window_bounds = array<i64: 5, 8>}, {pipeline_mode = #tpu.pipeline_mode<synchronous>, transform_indices = @transform_3, window_bounds = array<i64: 1, 8>}, {pipeline_mode = #tpu.pipeline_mode<synchronous>, transform_indices = @transform_4, window_bounds = array<i64: 1, 8>}, {transform_indices = @transform_5, window_bounds = array<i64: 1, 8, 8>}]} {
    %c0 = arith.constant 0 : index
    %c0_0 = arith.constant 0 : index
    %c0_1 = arith.constant 0 : index
    %0 = vector.load %arg1[%c0, %c0_0, %c0_1] : memref<1x10x8xf32, #tpu.memory_space<vmem>>, vector<1x10x8xf32>
    %1 = vector.shape_cast %0 : vector<1x10x8xf32> to vector<10x8xf32>
    %c0_2 = arith.constant 0 : index
    %c0_3 = arith.constant 0 : index
    %c0_4 = arith.constant 0 : index
    %2 = vector.load %arg2[%c0_2, %c0_3, %c0_4] : memref<1x10x8xf32, #tpu.memory_space<vmem>>, vector<1x10x8xf32>
    %3 = vector.shape_cast %2 : vector<1x10x8xf32> to vector<10x8xf32>
    %c0_5 = arith.constant 0 : index
    %c0_6 = arith.constant 0 : index
    %4 = vector.load %arg3[%c0_5, %c0_6] : memref<5x8xf32, #tpu.memory_space<vmem>>, vector<5x8xf32>
    %cst = arith.constant 0.000000e+00 : f32
    %5 = vector.broadcast %cst : f32 to vector<8x8xf32>
    %6 = vector.extract_strided_slice %1 {offsets = [0, 0], sizes = [8, 8], strides = [1, 1]} : vector<10x8xf32> to vector<8x8xf32>
    %7 = vector.extract_strided_slice %4 {offsets = [0, 0], sizes = [1, 8], strides = [1, 1]} : vector<5x8xf32> to vector<1x8xf32>
    %8 = vector.broadcast %7 : vector<1x8xf32> to vector<8x8xf32>
    %9 = arith.mulf %6, %8 : vector<8x8xf32>
    %10 = arith.addf %5, %9 : vector<8x8xf32>
    %11 = vector.extract_strided_slice %3 {offsets = [0, 0], sizes = [8, 8], strides = [1, 1]} : vector<10x8xf32> to vector<8x8xf32>
    %12 = vector.extract_strided_slice %4 {offsets = [1, 0], sizes = [1, 8], strides = [1, 1]} : vector<5x8xf32> to vector<1x8xf32>
    %13 = vector.broadcast %12 : vector<1x8xf32> to vector<8x8xf32>
    %14 = arith.mulf %11, %13 : vector<8x8xf32>
    %15 = arith.addf %10, %14 : vector<8x8xf32>
    %16 = vector.extract_strided_slice %1 {offsets = [1, 0], sizes = [8, 8], strides = [1, 1]} : vector<10x8xf32> to vector<8x8xf32>
    %17 = vector.extract_strided_slice %4 {offsets = [2, 0], sizes = [1, 8], strides = [1, 1]} : vector<5x8xf32> to vector<1x8xf32>
    %18 = vector.broadcast %17 : vector<1x8xf32> to vector<8x8xf32>
    %19 = arith.mulf %16, %18 : vector<8x8xf32>
    %20 = arith.addf %15, %19 : vector<8x8xf32>
    %21 = vector.extract_strided_slice %3 {offsets = [1, 0], sizes = [8, 8], strides = [1, 1]} : vector<10x8xf32> to vector<8x8xf32>
    %22 = vector.extract_strided_slice %4 {offsets = [3, 0], sizes = [1, 8], strides = [1, 1]} : vector<5x8xf32> to vector<1x8xf32>
    %23 = vector.broadcast %22 : vector<1x8xf32> to vector<8x8xf32>
    %24 = arith.mulf %21, %23 : vector<8x8xf32>
    %25 = arith.addf %20, %24 : vector<8x8xf32>
    %26 = vector.extract_strided_slice %1 {offsets = [2, 0], sizes = [8, 8], strides = [1, 1]} : vector<10x8xf32> to vector<8x8xf32>
    %27 = vector.extract_strided_slice %4 {offsets = [4, 0], sizes = [1, 8], strides = [1, 1]} : vector<5x8xf32> to vector<1x8xf32>
    %28 = vector.broadcast %27 : vector<1x8xf32> to vector<8x8xf32>
    %29 = arith.mulf %26, %28 : vector<8x8xf32>
    %30 = arith.addf %25, %29 : vector<8x8xf32>
    %c0_7 = arith.constant 0 : index
    %c0_8 = arith.constant 0 : index
    %31 = vector.load %arg4[%c0_7, %c0_8] : memref<1x8xf32, #tpu.memory_space<vmem>>, vector<1x8xf32>
    %32 = vector.broadcast %31 : vector<1x8xf32> to vector<8x8xf32>
    %33 = arith.mulf %30, %32 : vector<8x8xf32>
    %c0_9 = arith.constant 0 : index
    %c0_10 = arith.constant 0 : index
    %34 = vector.load %arg5[%c0_9, %c0_10] : memref<1x8xf32, #tpu.memory_space<vmem>>, vector<1x8xf32>
    %35 = vector.broadcast %34 : vector<1x8xf32> to vector<8x8xf32>
    %36 = arith.addf %33, %35 : vector<8x8xf32>
    %cst_11 = arith.constant 5.000000e-01 : f32
    %37 = vector.broadcast %cst_11 : f32 to vector<8x8xf32>
    %38 = arith.mulf %37, %36 : vector<8x8xf32>
    %cst_12 = arith.constant 0.707106769 : f32
    %39 = vector.broadcast %cst_12 : f32 to vector<8x8xf32>
    %40 = arith.mulf %36, %39 : vector<8x8xf32>
    %41 = math.erf %40 : vector<8x8xf32>
    %cst_13 = arith.constant 1.000000e+00 : f32
    %42 = vector.broadcast %cst_13 : f32 to vector<8x8xf32>
    %43 = arith.addf %42, %41 : vector<8x8xf32>
    %44 = arith.mulf %38, %43 : vector<8x8xf32>
    %c0_14 = arith.constant 0 : index
    %c0_15 = arith.constant 0 : index
    %c0_16 = arith.constant 0 : index
    %45 = vector.load %arg6[%c0_14, %c0_15, %c0_16] : memref<1x8x8xf32, #tpu.memory_space<vmem>>, vector<1x8x8xf32>
    %46 = vector.shape_cast %45 : vector<1x8x8xf32> to vector<8x8xf32>
    %47 = vector.shape_cast %44 : vector<8x8xf32> to vector<1x8x8xf32>
    tpu.vector_store %arg6[%c0_14, %c0_15, %c0_16], %47 {strides = array<i32>} : memref<1x8x8xf32, #tpu.memory_space<vmem>>, vector<1x8x8xf32>,
    return
  }
  func.func @transform_0(%arg0: i32) -> (i32, i32, i32) {
    %c0_i32 = arith.constant 0 : i32
    %c0_i32_0 = arith.constant 0 : i32
    %c0_i32_1 = arith.constant 0 : i32
    return %arg0, %c0_i32, %c0_i32_0 : i32, i32, i32
  }
  func.func @transform_1(%arg0: i32) -> (i32, i32, i32) {
    %c0_i32 = arith.constant 0 : i32
    %c0_i32_0 = arith.constant 0 : i32
    %c0_i32_1 = arith.constant 0 : i32
    return %arg0, %c0_i32, %c0_i32_0 : i32, i32, i32
  }
  func.func @transform_2(%arg0: i32) -> (i32, i32) {
    %c0_i32 = arith.constant 0 : i32
    %c0_i32_0 = arith.constant 0 : i32
    %c0_i32_1 = arith.constant 0 : i32
    return %c0_i32, %c0_i32_0 : i32, i32
  }
  func.func @transform_3(%arg0: i32) -> (i32, i32) {
    %c0_i32 = arith.constant 0 : i32
    %c0_i32_0 = arith.constant 0 : i32
    %c0_i32_1 = arith.constant 0 : i32
    return %c0_i32, %c0_i32_0 : i32, i32
  }
  func.func @transform_4(%arg0: i32) -> (i32, i32) {
    %c0_i32 = arith.constant 0 : i32
    %c0_i32_0 = arith.constant 0 : i32
    %c0_i32_1 = arith.constant 0 : i32
    return %c0_i32, %c0_i32_0 : i32, i32
  }
  func.func @transform_5(%arg0: i32) -> (i32, i32, i32) {
    %c0_i32 = arith.constant 0 : i32
    %c0_i32_0 = arith.constant 0 : i32
    %c0_i32_1 = arith.constant 0 : i32
    return %arg0, %c0_i32, %c0_i32_0 : i32, i32, i32
  }
}

module attributes {stable_mosaic.version = 11 : i64} {
  func.func @spk_split_kernel(%arg0: i32, %arg1: memref<1x8x8xf32, #tpu.memory_space<vmem>>, %arg2: memref<8x32xf32, #tpu.memory_space<vmem>>, %arg3: memref<1x32xf32, #tpu.memory_space<vmem>>, %arg4: memref<8x32xf32, #tpu.memory_space<vmem>>, %arg5: memref<1x32xf32, #tpu.memory_space<vmem>>, %arg6: memref<32x16xf32, #tpu.memory_space<vmem>>, %arg7: memref<1x16xf32, #tpu.memory_space<vmem>>, %arg8: memref<1x8xf32, #tpu.memory_space<vmem>>, %arg9: memref<1x8xf32, #tpu.memory_space<vmem>>, %arg10: memref<1x2x8x8xf32, #tpu.memory_space<vmem>>) attributes {dimension_semantics = [#tpu.dimension_semantics<parallel>], iteration_bounds = array<i64: 2>, scalar_prefetch = 0 : i64, scratch_operands = 0 : i64, tpu.core_type = #tpu.core_type<tc>, window_params = [{transform_indices = @transform_0, window_bounds = array<i64: 1, 8, 8>}, {pipeline_mode = #tpu.pipeline_mode<synchronous>, transform_indices = @transform_1, window_bounds = array<i64: 8, 32>}, {pipeline_mode = #tpu.pipeline_mode<synchronous>, transform_indices = @transform_2, window_bounds = array<i64: 1, 32>}, {pipeline_mode = #tpu.pipeline_mode<synchronous>, transform_indices = @transform_3, window_bounds = array<i64: 8, 32>}, {pipeline_mode = #tpu.pipeline_mode<synchronous>, transform_indices = @transform_4, window_bounds = array<i64: 1, 32>}, {pipeline_mode = #tpu.pipeline_mode<synchronous>, transform_indices = @transform_5, window_bounds = array<i64: 32, 16>}, {pipeline_mode = #tpu.pipeline_mode<synchronous>, transform_indices = @transform_6, window_bounds = array<i64: 1, 16>}, {pipeline_mode = #tpu.pipeline_mode<synchronous>, transform_indices = @transform_7, window_bounds = array<i64: 1, 8>}, {pipeline_mode = #tpu.pipeline_mode<synchronous>, transform_indices = @transform_8, window_bounds = array<i64: 1, 8>}, {transform_indices = @transform_9, window_bounds = array<i64: 1, 2, 8, 8>}]} {
    %c0 = arith.constant 0 : index
    %c0_0 = arith.constant 0 : index
    %c0_1 = arith.constant 0 : index
    %0 = vector.load %arg1[%c0, %c0_0, %c0_1] : memref<1x8x8xf32, #tpu.memory_space<vmem>>, vector<1x8x8xf32>
    %1 = vector.shape_cast %0 : vector<1x8x8xf32> to vector<8x8xf32>
    %c0_2 = arith.constant 0 : index
    %c0_3 = arith.constant 0 : index
    %2 = vector.load %arg2[%c0_2, %c0_3] : memref<8x32xf32, #tpu.memory_space<vmem>>, vector<8x32xf32>
    %cst = arith.constant dense<0.000000e+00> : vector<8x32xf32>
    %3 = tpu.matmul %1, %2, %cst {dimension_numbers = #tpu.dot_dimension_numbers<[1], [0], [0], [1], [0, 0, 1, 1], [], []>} : vector<8x8xf32>, vector<8x32xf32>, vector<8x32xf32> -> vector<8x32xf32>
    %c0_4 = arith.constant 0 : index
    %c0_5 = arith.constant 0 : index
    %4 = vector.load %arg3[%c0_4, %c0_5] : memref<1x32xf32, #tpu.memory_space<vmem>>, vector<1x32xf32>
    %5 = vector.broadcast %4 : vector<1x32xf32> to vector<8x32xf32>
    %6 = arith.addf %3, %5 : vector<8x32xf32>
    %c0_6 = arith.constant 0 : index
    %c0_7 = arith.constant 0 : index
    %7 = vector.load %arg4[%c0_6, %c0_7] : memref<8x32xf32, #tpu.memory_space<vmem>>, vector<8x32xf32>
    %cst_8 = arith.constant dense<0.000000e+00> : vector<8x32xf32>
    %8 = tpu.matmul %1, %7, %cst_8 {dimension_numbers = #tpu.dot_dimension_numbers<[1], [0], [0], [1], [0, 0, 1, 1], [], []>} : vector<8x8xf32>, vector<8x32xf32>, vector<8x32xf32> -> vector<8x32xf32>
    %c0_9 = arith.constant 0 : index
    %c0_10 = arith.constant 0 : index
    %9 = vector.load %arg5[%c0_9, %c0_10] : memref<1x32xf32, #tpu.memory_space<vmem>>, vector<1x32xf32>
    %10 = vector.broadcast %9 : vector<1x32xf32> to vector<8x32xf32>
    %11 = arith.addf %8, %10 : vector<8x32xf32>
    %12 = arith.negf %11 : vector<8x32xf32>
    %13 = math.exp %12 : vector<8x32xf32>
    %cst_11 = arith.constant 1.000000e+00 : f32
    %14 = vector.broadcast %cst_11 : f32 to vector<8x32xf32>
    %15 = arith.addf %14, %13 : vector<8x32xf32>
    %16 = arith.divf %14, %15 : vector<8x32xf32>
    %17 = arith.mulf %6, %16 : vector<8x32xf32>
    %c0_12 = arith.constant 0 : index
    %c0_13 = arith.constant 0 : index
    %18 = vector.load %arg6[%c0_12, %c0_13] : memref<32x16xf32, #tpu.memory_space<vmem>>, vector<32x16xf32>
    %cst_14 = arith.constant dense<0.000000e+00> : vector<8x16xf32>
    %19 = tpu.matmul %17, %18, %cst_14 {dimension_numbers = #tpu.dot_dimension_numbers<[1], [0], [0], [1], [0, 0, 1, 1], [], []>} : vector<8x32xf32>, vector<32x16xf32>, vector<8x16xf32> -> vector<8x16xf32>
    %c0_15 = arith.constant 0 : index
    %c0_16 = arith.constant 0 : index
    %20 = vector.load %arg7[%c0_15, %c0_16] : memref<1x16xf32, #tpu.memory_space<vmem>>, vector<1x16xf32>
    %21 = vector.broadcast %20 : vector<1x16xf32> to vector<8x16xf32>
    %22 = arith.addf %19, %21 : vector<8x16xf32>
    %23 = vector.extract_strided_slice %22 {offsets = [0, 0], sizes = [8, 8], strides = [1, 1]} : vector<8x16xf32> to vector<8x8xf32>
    %24 = vector.shape_cast %23 : vector<8x8xf32> to vector<1x8x8xf32>
    %cst_17 = arith.constant dense<0.000000e+00> : vector<1xf32>
    %25 = vector.multi_reduction <add>, %24, %cst_17 [1, 2] : vector<1x8x8xf32> to vector<1xf32>
    %26 = vector.shape_cast %25 : vector<1xf32> to vector<1x1x1xf32>
    %27 = vector.extract %26[0, 0, 0] : f32 from vector<1x1x1xf32>
    %cst_18 = arith.constant 6.400000e+01 : f32
    %28 = arith.divf %27, %cst_18 : f32
    %29 = vector.broadcast %28 : f32 to vector<8x8xf32>
    %30 = arith.subf %23, %29 : vector<8x8xf32>
    %31 = arith.mulf %30, %30 : vector<8x8xf32>
    %32 = vector.shape_cast %31 : vector<8x8xf32> to vector<1x8x8xf32>
    %cst_19 = arith.constant dense<0.000000e+00> : vector<1xf32>
    %33 = vector.multi_reduction <add>, %32, %cst_19 [1, 2] : vector<1x8x8xf32> to vector<1xf32>
    %34 = vector.shape_cast %33 : vector<1xf32> to vector<1x1x1xf32>
    %35 = vector.extract %34[0, 0, 0] : f32 from vector<1x1x1xf32>
    %cst_20 = arith.constant 6.400000e+01 : f32
    %36 = arith.divf %35, %cst_20 : f32
    %cst_21 = arith.constant 9.99999993E-9 : f32
    %37 = arith.addf %36, %cst_21 : f32
    %38 = math.rsqrt %37 : f32
    %39 = vector.broadcast %38 : f32 to vector<8x8xf32>
    %40 = arith.mulf %30, %39 : vector<8x8xf32>
    %c0_22 = arith.constant 0 : index
    %c0_23 = arith.constant 0 : index
    %41 = vector.load %arg8[%c0_22, %c0_23] : memref<1x8xf32, #tpu.memory_space<vmem>>, vector<1x8xf32>
    %42 = vector.broadcast %41 : vector<1x8xf32> to vector<8x8xf32>
    %43 = arith.mulf %40, %42 : vector<8x8xf32>
    %c0_24 = arith.constant 0 : index
    %c0_25 = arith.constant 0 : index
    %44 = vector.load %arg9[%c0_24, %c0_25] : memref<1x8xf32, #tpu.memory_space<vmem>>, vector<1x8xf32>
    %45 = vector.broadcast %44 : vector<1x8xf32> to vector<8x8xf32>
    %46 = arith.addf %43, %45 : vector<8x8xf32>
    %c0_26 = arith.constant 0 : index
    %c0_27 = arith.constant 0 : index
    %c0_28 = arith.constant 0 : index
    %c0_29 = arith.constant 0 : index
    %47 = vector.load %arg10[%c0_26, %c0_27, %c0_28, %c0_29] : memref<1x2x8x8xf32, #tpu.memory_space<vmem>>, vector<1x1x8x8xf32>
    %48 = vector.shape_cast %47 : vector<1x1x8x8xf32> to vector<8x8xf32>
    %49 = vector.shape_cast %46 : vector<8x8xf32> to vector<1x1x8x8xf32>
    tpu.vector_store %arg10[%c0_26, %c0_27, %c0_28, %c0_29], %49 {strides = array<i32>} : memref<1x2x8x8xf32, #tpu.memory_space<vmem>>, vector<1x1x8x8xf32>,
    %50 = vector.extract_strided_slice %22 {offsets = [0, 8], sizes = [8, 8], strides = [1, 1]} : vector<8x16xf32> to vector<8x8xf32>
    %51 = vector.shape_cast %50 : vector<8x8xf32> to vector<1x8x8xf32>
    %cst_30 = arith.constant dense<0.000000e+00> : vector<1xf32>
    %52 = vector.multi_reduction <add>, %51, %cst_30 [1, 2] : vector<1x8x8xf32> to vector<1xf32>
    %53 = vector.shape_cast %52 : vector<1xf32> to vector<1x1x1xf32>
    %54 = vector.extract %53[0, 0, 0] : f32 from vector<1x1x1xf32>
    %cst_31 = arith.constant 6.400000e+01 : f32
    %55 = arith.divf %54, %cst_31 : f32
    %56 = vector.broadcast %55 : f32 to vector<8x8xf32>
    %57 = arith.subf %50, %56 : vector<8x8xf32>
    %58 = arith.mulf %57, %57 : vector<8x8xf32>
    %59 = vector.shape_cast %58 : vector<8x8xf32> to vector<1x8x8xf32>
    %cst_32 = arith.constant dense<0.000000e+00> : vector<1xf32>
    %60 = vector.multi_reduction <add>, %59, %cst_32 [1, 2] : vector<1x8x8xf32> to vector<1xf32>
    %61 = vector.shape_cast %60 : vector<1xf32> to vector<1x1x1xf32>
    %62 = vector.extract %61[0, 0, 0] : f32 from vector<1x1x1xf32>
    %cst_33 = arith.constant 6.400000e+01 : f32
    %63 = arith.divf %62, %cst_33 : f32
    %cst_34 = arith.constant 9.99999993E-9 : f32
    %64 = arith.addf %63, %cst_34 : f32
    %65 = math.rsqrt %64 : f32
    %66 = vector.broadcast %65 : f32 to vector<8x8xf32>
    %67 = arith.mulf %57, %66 : vector<8x8xf32>
    %c0_35 = arith.constant 0 : index
    %c0_36 = arith.constant 0 : index
    %68 = vector.load %arg8[%c0_35, %c0_36] : memref<1x8xf32, #tpu.memory_space<vmem>>, vector<1x8xf32>
    %69 = vector.broadcast %68 : vector<1x8xf32> to vector<8x8xf32>
    %70 = arith.mulf %67, %69 : vector<8x8xf32>
    %c0_37 = arith.constant 0 : index
    %c0_38 = arith.constant 0 : index
    %71 = vector.load %arg9[%c0_37, %c0_38] : memref<1x8xf32, #tpu.memory_space<vmem>>, vector<1x8xf32>
    %72 = vector.broadcast %71 : vector<1x8xf32> to vector<8x8xf32>
    %73 = arith.addf %70, %72 : vector<8x8xf32>
    %c0_39 = arith.constant 0 : index
    %c1 = arith.constant 1 : index
    %c0_40 = arith.constant 0 : index
    %c0_41 = arith.constant 0 : index
    %74 = vector.load %arg10[%c0_39, %c1, %c0_40, %c0_41] : memref<1x2x8x8xf32, #tpu.memory_space<vmem>>, vector<1x1x8x8xf32>
    %75 = vector.shape_cast %74 : vector<1x1x8x8xf32> to vector<8x8xf32>
    %76 = vector.shape_cast %73 : vector<8x8xf32> to vector<1x1x8x8xf32>
    tpu.vector_store %arg10[%c0_39, %c1, %c0_40, %c0_41], %76 {strides = array<i32>} : memref<1x2x8x8xf32, #tpu.memory_space<vmem>>, vector<1x1x8x8xf32>,
    return
  }
  func.func @transform_0(%arg0: i32) -> (i32, i32, i32) {
    %c0_i32 = arith.constant 0 : i32
    %c0_i32_0 = arith.constant 0 : i32
    %c0_i32_1 = arith.constant 0 : i32
    return %arg0, %c0_i32, %c0_i32_0 : i32, i32, i32
  }
  func.func @transform_1(%arg0: i32) -> (i32, i32) {
    %c0_i32 = arith.constant 0 : i32
    %c0_i32_0 = arith.constant 0 : i32
    %c0_i32_1 = arith.constant 0 : i32
    return %c0_i32, %c0_i32_0 : i32, i32
  }
  func.func @transform_2(%arg0: i32) -> (i32, i32) {
    %c0_i32 = arith.constant 0 : i32
    %c0_i32_0 = arith.constant 0 : i32
    %c0_i32_1 = arith.constant 0 : i32
    return %c0_i32, %c0_i32_0 : i32, i32
  }
  func.func @transform_3(%arg0: i32) -> (i32, i32) {
    %c0_i32 = arith.constant 0 : i32
    %c0_i32_0 = arith.constant 0 : i32
    %c0_i32_1 = arith.constant 0 : i32
    return %c0_i32, %c0_i32_0 : i32, i32
  }
  func.func @transform_4(%arg0: i32) -> (i32, i32) {
    %c0_i32 = arith.constant 0 : i32
    %c0_i32_0 = arith.constant 0 : i32
    %c0_i32_1 = arith.constant 0 : i32
    return %c0_i32, %c0_i32_0 : i32, i32
  }
  func.func @transform_5(%arg0: i32) -> (i32, i32) {
    %c0_i32 = arith.constant 0 : i32
    %c0_i32_0 = arith.constant 0 : i32
    %c0_i32_1 = arith.constant 0 : i32
    return %c0_i32, %c0_i32_0 : i32, i32
  }
  func.func @transform_6(%arg0: i32) -> (i32, i32) {
    %c0_i32 = arith.constant 0 : i32
    %c0_i32_0 = arith.constant 0 : i32
    %c0_i32_1 = arith.constant 0 : i32
    return %c0_i32, %c0_i32_0 : i32, i32
  }
  func.func @transform_7(%arg0: i32) -> (i32, i32) {
    %c0_i32 = arith.constant 0 : i32
    %c0_i32_0 = arith.constant 0 : i32
    %c0_i32_1 = arith.constant 0 : i32
    return %c0_i32, %c0_i32_0 : i32, i32
  }
  func.func @transform_8(%arg0: i32) -> (i32, i32) {
    %c0_i32 = arith.constant 0 : i32
    %c0_i32_0 = arith.constant 0 : i32
    %c0_i32_1 = arith.constant 0 : i32
    return %c0_i32, %c0_i32_0 : i32, i32
  }
  func.func @transform_9(%arg0: i32) -> (i32, i32, i32, i32) {
    %c0_i32 = arith.constant 0 : i32
    %c0_i32_0 = arith.constant 0 : i32
    %c0_i32_1 = arith.constant 0 : i32
    %c0_i32_2 = arith.constant 0 : i32
    return %arg0, %c0_i32, %c0_i32_0, %c0_i32_1 : i32, i32, i32, i32
  }
}

module attributes {stable_mosaic.version = 11 : i64} {
  func.func @fusion_kernel(%arg0: i32, %arg1: memref<128x8xf32, #tpu.memory_space<vmem>>, %arg2: memref<128x8xf32, #tpu.memory_space<vmem>>, %arg3: memref<8x8xf32, #tpu.memory_space<vmem>>, %arg4: memref<8x8xf32, #tpu.memory_space<vmem>>, %arg5: memref<1x8xf32, #tpu.memory_space<vmem>>, %arg6: memref<128x8xf32, #tpu.memory_space<vmem>>) attributes {dimension_semantics = [#tpu.dimension_semantics<parallel>], iteration_bounds = array<i64: 1>, scalar_prefetch = 0 : i64, scratch_operands = 0 : i64, tpu.core_type = #tpu.core_type<tc>, window_params = [{transform_indices = @transform_0, window_bounds = array<i64: 128, 8>}, {transform_indices = @transform_1, window_bounds = array<i64: 128, 8>}, {pipeline_mode = #tpu.pipeline_mode<synchronous>, transform_indices = @transform_2, window_bounds = array<i64: 8, 8>}, {pipeline_mode = #tpu.pipeline_mode<synchronous>, transform_indices = @transform_3, window_bounds = array<i64: 8, 8>}, {pipeline_mode = #tpu.pipeline_mode<synchronous>, transform_indices = @transform_4, window_bounds = array<i64: 1, 8>}, {transform_indices = @transform_5, window_bounds = array<i64: 128, 8>}]} {
    %c0 = arith.constant 0 : index
    %c0_0 = arith.constant 0 : index
    %0 = vector.load %arg1[%c0, %c0_0] : memref<128x8xf32, #tpu.memory_space<vmem>>, vector<128x8xf32>
    %c0_1 = arith.constant 0 : index
    %c0_2 = arith.constant 0 : index
    %1 = vector.load %arg3[%c0_1, %c0_2] : memref<8x8xf32, #tpu.memory_space<vmem>>, vector<8x8xf32>
    %cst = arith.constant dense<0.000000e+00> : vector<128x8xf32>
    %2 = tpu.matmul %0, %1, %cst {dimension_numbers = #tpu.dot_dimension_numbers<[1], [0], [0], [1], [0, 0, 1, 1], [], []>} : vector<128x8xf32>, vector<8x8xf32>, vector<128x8xf32> -> vector<128x8xf32>
    %c0_3 = arith.constant 0 : index
    %c0_4 = arith.constant 0 : index
    %3 = vector.load %arg2[%c0_3, %c0_4] : memref<128x8xf32, #tpu.memory_space<vmem>>, vector<128x8xf32>
    %c0_5 = arith.constant 0 : index
    %c0_6 = arith.constant 0 : index
    %4 = vector.load %arg4[%c0_5, %c0_6] : memref<8x8xf32, #tpu.memory_space<vmem>>, vector<8x8xf32>
    %cst_7 = arith.constant dense<0.000000e+00> : vector<128x8xf32>
    %5 = tpu.matmul %3, %4, %cst_7 {dimension_numbers = #tpu.dot_dimension_numbers<[1], [0], [0], [1], [0, 0, 1, 1], [], []>} : vector<128x8xf32>, vector<8x8xf32>, vector<128x8xf32> -> vector<128x8xf32>
    %6 = arith.addf %2, %5 : vector<128x8xf32>
    %c0_8 = arith.constant 0 : index
    %c0_9 = arith.constant 0 : index
    %7 = vector.load %arg5[%c0_8, %c0_9] : memref<1x8xf32, #tpu.memory_space<vmem>>, vector<1x8xf32>
    %8 = vector.broadcast %7 : vector<1x8xf32> to vector<128x8xf32>
    %9 = arith.addf %6, %8 : vector<128x8xf32>
    %c0_10 = arith.constant 0 : index
    %c0_11 = arith.constant 0 : index
    %10 = vector.load %arg6[%c0_10, %c0_11] : memref<128x8xf32, #tpu.memory_space<vmem>>, vector<128x8xf32>
    tpu.vector_store %arg6[%c0_10, %c0_11], %9 {strides = array<i32>} : memref<128x8xf32, #tpu.memory_space<vmem>>, vector<128x8xf32>,
    return
  }
  func.func @transform_0(%arg0: i32) -> (i32, i32) {
    %c0_i32 = arith.constant 0 : i32
    %c0_i32_0 = arith.constant 0 : i32
    return %arg0, %c0_i32 : i32, i32
  }
  func.func @transform_1(%arg0: i32) -> (i32, i32) {
    %c0_i32 = arith.constant 0 : i32
    %c0_i32_0 = arith.constant 0 : i32
    return %arg0, %c0_i32 : i32, i32
  }
  func.func @transform_2(%arg0: i32) -> (i32, i32) {
    %c0_i32 = arith.constant 0 : i32
    %c0_i32_0 = arith.constant 0 : i32
    %c0_i32_1 = arith.constant 0 : i32
    return %c0_i32, %c0_i32_0 : i32, i32
  }
  func.func @transform_3(%arg0: i32) -> (i32, i32) {
    %c0_i32 = arith.constant 0 : i32
    %c0_i32_0 = arith.constant 0 : i32
    %c0_i32_1 = arith.constant 0 : i32
    return %c0_i32, %c0_i32_0 : i32, i32
  }
  func.func @transform_4(%arg0: i32) -> (i32, i32) {
    %c0_i32 = arith.constant 0 : i32
    %c0_i32_0 = arith.constant 0 : i32
    %c0_i32_1 = arith.constant 0 : i32
    return %c0_i32, %c0_i32_0 : i32, i32
  }
  func.func @transform_5(%arg0: i32) -> (i32, i32) {
    %c0_i32 = arith.constant 0 : i32
    %c0_i32_0 = arith.constant 0 : i32
    return %arg0, %c0_i32 : i32, i32
  }
}

module attributes {stable_mosaic.version = 11 : i64} {
  func.func @fusion_kernel(%arg0: i32, %arg1: memref<64x8xf32, #tpu.memory_space<vmem>>, %arg2: memref<64x8xf32, #tpu.memory_space<vmem>>, %arg3: memref<8x8xf32, #tpu.memory_space<vmem>>, %arg4: memref<8x8xf32, #tpu.memory_space<vmem>>, %arg5: memref<1x8xf32, #tpu.memory_space<vmem>>, %arg6: memref<64x8xf32, #tpu.memory_space<vmem>>) attributes {dimension_semantics = [#tpu.dimension_semantics<parallel>], iteration_bounds = array<i64: 1>, scalar_prefetch = 0 : i64, scratch_operands = 0 : i64, tpu.core_type = #tpu.core_type<tc>, window_params = [{transform_indices = @transform_0, window_bounds = array<i64: 64, 8>}, {transform_indices = @transform_1, window_bounds = array<i64: 64, 8>}, {pipeline_mode = #tpu.pipeline_mode<synchronous>, transform_indices = @transform_2, window_bounds = array<i64: 8, 8>}, {pipeline_mode = #tpu.pipeline_mode<synchronous>, transform_indices = @transform_3, window_bounds = array<i64: 8, 8>}, {pipeline_mode = #tpu.pipeline_mode<synchronous>, transform_indices = @transform_4, window_bounds = array<i64: 1, 8>}, {transform_indices = @transform_5, window_bounds = array<i64: 64, 8>}]} {
    %c0 = arith.constant 0 : index
    %c0_0 = arith.constant 0 : index
    %0 = vector.load %arg1[%c0, %c0_0] : memref<64x8xf32, #tpu.memory_space<vmem>>, vector<64x8xf32>
    %c0_1 = arith.constant 0 : index
    %c0_2 = arith.constant 0 : index
    %1 = vector.load %arg3[%c0_1, %c0_2] : memref<8x8xf32, #tpu.memory_space<vmem>>, vector<8x8xf32>
    %cst = arith.constant dense<0.000000e+00> : vector<64x8xf32>
    %2 = tpu.matmul %0, %1, %cst {dimension_numbers = #tpu.dot_dimension_numbers<[1], [0], [0], [1], [0, 0, 1, 1], [], []>} : vector<64x8xf32>, vector<8x8xf32>, vector<64x8xf32> -> vector<64x8xf32>
    %c0_3 = arith.constant 0 : index
    %c0_4 = arith.constant 0 : index
    %3 = vector.load %arg2[%c0_3, %c0_4] : memref<64x8xf32, #tpu.memory_space<vmem>>, vector<64x8xf32>
    %c0_5 = arith.constant 0 : index
    %c0_6 = arith.constant 0 : index
    %4 = vector.load %arg4[%c0_5, %c0_6] : memref<8x8xf32, #tpu.memory_space<vmem>>, vector<8x8xf32>
    %cst_7 = arith.constant dense<0.000000e+00> : vector<64x8xf32>
    %5 = tpu.matmul %3, %4, %cst_7 {dimension_numbers = #tpu.dot_dimension_numbers<[1], [0], [0], [1], [0, 0, 1, 1], [], []>} : vector<64x8xf32>, vector<8x8xf32>, vector<64x8xf32> -> vector<64x8xf32>
    %6 = arith.addf %2, %5 : vector<64x8xf32>
    %c0_8 = arith.constant 0 : index
    %c0_9 = arith.constant 0 : index
    %7 = vector.load %arg5[%c0_8, %c0_9] : memref<1x8xf32, #tpu.memory_space<vmem>>, vector<1x8xf32>
    %8 = vector.broadcast %7 : vector<1x8xf32> to vector<64x8xf32>
    %9 = arith.addf %6, %8 : vector<64x8xf32>
    %c0_10 = arith.constant 0 : index
    %c0_11 = arith.constant 0 : index
    %10 = vector.load %arg6[%c0_10, %c0_11] : memref<64x8xf32, #tpu.memory_space<vmem>>, vector<64x8xf32>
    tpu.vector_store %arg6[%c0_10, %c0_11], %9 {strides = array<i32>} : memref<64x8xf32, #tpu.memory_space<vmem>>, vector<64x8xf32>,
    return
  }
  func.func @transform_0(%arg0: i32) -> (i32, i32) {
    %c0_i32 = arith.constant 0 : i32
    %c0_i32_0 = arith.constant 0 : i32
    return %arg0, %c0_i32 : i32, i32
  }
  func.func @transform_1(%arg0: i32) -> (i32, i32) {
    %c0_i32 = arith.constant 0 : i32
    %c0_i32_0 = arith.constant 0 : i32
    return %arg0, %c0_i32 : i32, i32
  }
  func.func @transform_2(%arg0: i32) -> (i32, i32) {
    %c0_i32 = arith.constant 0 : i32
    %c0_i32_0 = arith.constant 0 : i32
    %c0_i32_1 = arith.constant 0 : i32
    return %c0_i32, %c0_i32_0 : i32, i32
  }
  func.func @transform_3(%arg0: i32) -> (i32, i32) {
    %c0_i32 = arith.constant 0 : i32
    %c0_i32_0 = arith.constant 0 : i32
    %c0_i32_1 = arith.constant 0 : i32
    return %c0_i32, %c0_i32_0 : i32, i32
  }
  func.func @transform_4(%arg0: i32) -> (i32, i32) {
    %c0_i32 = arith.constant 0 : i32
    %c0_i32_0 = arith.constant 0 : i32
    %c0_i32_1 = arith.constant 0 : i32
    return %c0_i32, %c0_i32_0 : i32, i32
  }
  func.func @transform_5(%arg0: i32) -> (i32, i32) {
    %c0_i32 = arith.constant 0 : i32
    %c0_i32_0 = arith.constant 0 : i32
    return %arg0, %c0_i32 : i32, i32
  }
}

</mosaic_0001>

<llo_original>
// kernel: separator_forward.7
$region0: #{separator_forward.7}
  #allocation0 [shape = 'u32[]', space=smem, size = 0x4, offset = 0x4, fixed_abs, tag = 'smem constant byte address 0x4 - core index']
  #allocation1 [shape = 'u32[144,128]{1,0:T(1,128)}', space=vmem, size = 0x12000, scoped, tag = 'internal scratch']
  %s0 = inlined_call_operand.vmem [shape: f32[2,18,8], index: 0, kind: input, shape index: {}]
  %s1 = inlined_call_operand.vmem [shape: f32[2,18,8], index: 1, kind: input, shape index: {}]
  %s2 = inlined_call_operand.vmem [shape: f32[5,8], index: 2, kind: input, shape index: {}]
  %s3 = inlined_call_operand.vmem [shape: f32[1,8], index: 3, kind: input, shape index: {}]
  %s4 = inlined_call_operand.vmem [shape: f32[1,8], index: 4, kind: input, shape index: {}]
  %s5 = inlined_call_operand.vmem [shape: f32[2,16,8], index: 5, kind: output, shape index: {}]
  %s6 = sld [smem:[#allocation0]]
  $region53: #{separator_forward.7} parent=0
    _
  %s8 = ssub.s32 1, %s6
  %s9 = scalar_select 0, %s8, %s6
  loop: start=0, step=1, limit=4
  $region2: #{separator_forward.7} parent=0 // loop_pre_header
    _
  $region3: #{separator_forward.7} parent=0 // loop_header
    %s11 = sphi 0, %s15
    %p12 = scmp.ge.s32.totalorder %s11, 4
    %s21 = sphi 0, %s23
    %s24 = sphi 0, %s21
    %s25 = sphi 0, %s24
    %s41 = sphi 0, %s25
    %s47 = sphi 0, %s49
    %s50 = sphi 0, %s47
    %s51 = sphi 0, %s50
    %s67 = sphi 0, %s51
    %s71 = sphi 0, %s71
    %s73 = sphi 0, %s71
    %s74 = sphi 0, %s73
    %s88 = sphi 0, %s74
    %s92 = sphi 0, %s92
    %s94 = sphi 0, %s92
    %s95 = sphi 0, %s94
    %s109 = sphi 0, %s95
    %s113 = sphi 0, %s113
    %s115 = sphi 0, %s113
    %s116 = sphi 0, %s115
    %s130 = sphi 0, %s116
    %s136 = sphi 0, %s138
    %s139 = sphi 0, %s136
    %s140 = sphi 0, %s139
    %s156 = sphi 0, %s140
  $region4: #{separator_forward.7} parent=0 // loop_header_branch
    %14 = sbr.rel (%p12) target = $region8
  $region5: #{separator_forward.7} parent=0 // loop_body
    %s16 = ssub.s32 %s11, 1
    %s17 = ssub.s32 %s11, 2
    %s18 = sadd.s32 %s11, 1
    %s19 = ssub.s32 %s11, %s18
    %p20 = scmp.eq.s32.totalorder %s19, 0
    %s22 = sadd.s32 %s21, 1
    %s23 = scalar_select %p20, %s21, %s22
    %p26 = pneg %p20
    %p27 = scmp.eq.s32.totalorder %s11, 1
    %p28 = por %p26, %p27
    %p29 = scmp.ne.s32.totalorder %s21, %s24
    %p30 = scmp.eq.s32.totalorder %s11, 0
    %p31 = por %p29, %p30
    %p32 = scmp.ne.s32.totalorder %s21, %s24
    %p33 = scmp.eq.s32.totalorder %s16, 1
    %p34 = por %p32, %p33
    %p35 = scmp.ne.s32.totalorder %s24, %s25
    %p36 = scmp.eq.s32.totalorder %s16, 0
    %p37 = por %p35, %p36
    %p38 = scmp.ne.s32.totalorder %s24, %s25
    %p39 = scmp.eq.s32.totalorder %s17, 1
    %p40 = por %p38, %p39
    %p42 = scmp.ne.s32.totalorder %s25, %s41
    %p43 = scmp.eq.s32.totalorder %s17, 0
    %p44 = por %p42, %p43
    %s45 = ssub.s32 %s11, %s18
    %p46 = scmp.eq.s32.totalorder %s45, 0
    %s48 = sadd.s32 %s47, 1
    %s49 = scalar_select %p46, %s47, %s48
    %p52 = pneg %p46
    %p53 = scmp.eq.s32.totalorder %s11, 1
    %p54 = por %p52, %p53
    %p55 = scmp.ne.s32.totalorder %s47, %s50
    %p56 = scmp.eq.s32.totalorder %s11, 0
    %p57 = por %p55, %p56
    %p58 = scmp.ne.s32.totalorder %s47, %s50
    %p59 = scmp.eq.s32.totalorder %s16, 1
    %p60 = por %p58, %p59
    %p61 = scmp.ne.s32.totalorder %s50, %s51
    %p62 = scmp.eq.s32.totalorder %s16, 0
    %p63 = por %p61, %p62
    %p64 = scmp.ne.s32.totalorder %s50, %s51
    %p65 = scmp.eq.s32.totalorder %s17, 1
    %p66 = por %p64, %p65
    %p68 = scmp.ne.s32.totalorder %s51, %s67
    %p69 = scmp.eq.s32.totalorder %s17, 0
    %p70 = por %p68, %p69
    %s72 = sadd.s32 %s71, 1
    %p75 = scmp.eq.s32.totalorder %s11, 1
    %p76 = scmp.ne.s32.totalorder %s71, %s73
    %p77 = scmp.eq.s32.totalorder %s11, 0
    %p78 = por %p76, %p77
    %p79 = scmp.ne.s32.totalorder %s71, %s73
    %p80 = scmp.eq.s32.totalorder %s16, 1
    %p81 = por %p79, %p80
    %p82 = scmp.ne.s32.totalorder %s73, %s74
    %p83 = scmp.eq.s32.totalorder %s16, 0
    %p84 = por %p82, %p83
    %p85 = scmp.ne.s32.totalorder %s73, %s74
    %p86 = scmp.eq.s32.totalorder %s17, 1
    %p87 = por %p85, %p86
    %p89 = scmp.ne.s32.totalorder %s74, %s88
    %p90 = scmp.eq.s32.totalorder %s17, 0
    %p91 = por %p89, %p90
    %s93 = sadd.s32 %s92, 1
    %p96 = scmp.eq.s32.totalorder %s11, 1
    %p97 = scmp.ne.s32.totalorder %s92, %s94
    %p98 = scmp.eq.s32.totalorder %s11, 0
    %p99 = por %p97, %p98
    %p100 = scmp.ne.s32.totalorder %s92, %s94
    %p101 = scmp.eq.s32.totalorder %s16, 1
    %p102 = por %p100, %p101
    %p103 = scmp.ne.s32.totalorder %s94, %s95
    %p104 = scmp.eq.s32.totalorder %s16, 0
    %p105 = por %p103, %p104
    %p106 = scmp.ne.s32.totalorder %s94, %s95
    %p107 = scmp.eq.s32.totalorder %s17, 1
    %p108 = por %p106, %p107
    %p110 = scmp.ne.s32.totalorder %s95, %s109
    %p111 = scmp.eq.s32.totalorder %s17, 0
    %p112 = por %p110, %p111
    %s114 = sadd.s32 %s113, 1
    %p117 = scmp.eq.s32.totalorder %s11, 1
    %p118 = scmp.ne.s32.totalorder %s113, %s115
    %p119 = scmp.eq.s32.totalorder %s11, 0
    %p120 = por %p118, %p119
    %p121 = scmp.ne.s32.totalorder %s113, %s115
    %p122 = scmp.eq.s32.totalorder %s16, 1
    %p123 = por %p121, %p122
    %p124 = scmp.ne.s32.totalorder %s115, %s116
    %p125 = scmp.eq.s32.totalorder %s16, 0
    %p126 = por %p124, %p125
    %p127 = scmp.ne.s32.totalorder %s115, %s116
    %p128 = scmp.eq.s32.totalorder %s17, 1
    %p129 = por %p127, %p128
    %p131 = scmp.ne.s32.totalorder %s116, %s130
    %p132 = scmp.eq.s32.totalorder %s17, 0
    %p133 = por %p131, %p132
    %s134 = ssub.s32 %s11, %s18
    %p135 = scmp.eq.s32.totalorder %s134, 0
    %s137 = sadd.s32 %s136, 1
    %s138 = scalar_select %p135, %s136, %s137
    %p141 = pneg %p135
    %p142 = scmp.eq.s32.totalorder %s11, 1
    %p143 = por %p141, %p142
    %p144 = scmp.ne.s32.totalorder %s136, %s139
    %p145 = scmp.eq.s32.totalorder %s11, 0
    %p146 = por %p144, %p145
    %p147 = scmp.ne.s32.totalorder %s136, %s139
    %p148 = scmp.eq.s32.totalorder %s16, 1
    %p149 = por %p147, %p148
    %p150 = scmp.ne.s32.totalorder %s139, %s140
    %p151 = scmp.eq.s32.totalorder %s16, 0
    %p152 = por %p150, %p151
    %p153 = scmp.ne.s32.totalorder %s139, %s140
    %p154 = scmp.eq.s32.totalorder %s17, 1
    %p155 = por %p153, %p154
    %p157 = scmp.ne.s32.totalorder %s140, %s156
    %p158 = scmp.eq.s32.totalorder %s17, 0
    %p159 = por %p157, %p158
    %p160 = scmp.le.s32.totalorder 1, %s11
    %p161 = scmp.lt.s32.totalorder %s11, 3
    %p162 = pnand %p160, %p161
    %p163 = pneg %p162
    // Predicated region
    $region9: #{separator_forward.7} parent=5 // pred_check
      _
    $region10: #{separator_forward.7} parent=5 // pred_check_branch
      %165 = sbr.rel (%p162) target = $region12
    $region11: #{separator_forward.7} parent=5 // pred_region
      %s166 = ssub.s32 %s11, 1
      // Predicated region
      $region13: #{separator_forward.7} parent=11 // pred_check
        %p167 = pneg %p84
      $region14: #{separator_forward.7} parent=11 // pred_check_branch
        %169 = sbr.rel (%p167) target = $region16
      $region15: #{separator_forward.7} parent=11 // pred_region
        _
      $region16: #{separator_forward.7} parent=11 // pred_fallthru
        _
      // Predicated region
      $region17: #{separator_forward.7} parent=11 // pred_check
        %p170 = pneg %p105
      $region18: #{separator_forward.7} parent=11 // pred_check_branch
        %172 = sbr.rel (%p170) target = $region20
      $region19: #{separator_forward.7} parent=11 // pred_region
        _
      $region20: #{separator_forward.7} parent=11 // pred_fallthru
        _
      // Predicated region
      $region21: #{separator_forward.7} parent=11 // pred_check
        %p173 = pneg %p126
      $region22: #{separator_forward.7} parent=11 // pred_check_branch
        %175 = sbr.rel (%p173) target = $region24
      $region23: #{separator_forward.7} parent=11 // pred_region
        _
      $region24: #{separator_forward.7} parent=11 // pred_fallthru
        _
    $region12: #{separator_forward.7} parent=5 // pred_fallthru
      _
    %p176 = scmp.lt.s32.totalorder %s11, 2
    // Predicated region
    $region25: #{separator_forward.7} parent=5 // pred_check
      %p177 = pneg %p176
    $region26: #{separator_forward.7} parent=5 // pred_check_branch
      %179 = sbr.rel (%p177) target = $region28
    $region27: #{separator_forward.7} parent=5 // pred_region
      // Predicated region
      $region29: #{separator_forward.7} parent=27 // pred_check
        %p180 = pneg %p31
      $region30: #{separator_forward.7} parent=27 // pred_check_branch
        %182 = sbr.rel (%p180) target = $region32
      $region31: #{separator_forward.7} parent=27 // pred_region
        %p183 = scmp.lt.s32.totalorder %s11, 1
        %s184 = scalar_select %p183, %s11, 1
        %s185 = smul.addr %s184, 3
        %s186 = smul.addr %s185, 8
        %s187 = scalar_lea.vmem %s0, %s186
      $region32: #{separator_forward.7} parent=27 // pred_fallthru
        _
      // Predicated region
      $region33: #{separator_forward.7} parent=27 // pred_check
        %p188 = pneg %p57
      $region34: #{separator_forward.7} parent=27 // pred_check_branch
        %190 = sbr.rel (%p188) target = $region36
      $region35: #{separator_forward.7} parent=27 // pred_region
        %p191 = scmp.lt.s32.totalorder %s11, 1
        %s192 = scalar_select %p191, %s11, 1
        %s193 = smul.addr %s192, 3
        %s194 = smul.addr %s193, 8
        %s195 = scalar_lea.vmem %s1, %s194
      $region36: #{separator_forward.7} parent=27 // pred_fallthru
        _
    $region28: #{separator_forward.7} parent=5 // pred_fallthru
      _
    %p196 = scmp.le.s32.totalorder 1, %s11
    %p197 = scmp.lt.s32.totalorder %s11, 3
    %p198 = pnand %p196, %p197
    %p199 = pneg %p198
    // Predicated region
    $region37: #{separator_forward.7} parent=5 // pred_check
      _
    $region38: #{separator_forward.7} parent=5 // pred_check_branch
      %201 = sbr.rel (%p198) target = $region40
    $region39: #{separator_forward.7} parent=5 // pred_region
      %s202 = ssub.s32 %s11, 1
      %p203 = scmp.lt.s32.totalorder %s16, 1
      %s204 = scalar_select %p203, %s16, 1
      %s205 = smul.addr %s204, 3
      %s206 = smul.addr %s205, 8
      %s207 = scalar_lea.vmem %s0, %s206
      %p208 = pneg %p37
      %p209 = pneg %p34
      %p210 = scmp.lt.s32.totalorder %s16, 1
      %s211 = scalar_select %p210, %s16, 1
      %s212 = smul.addr %s211, 3
      %s213 = smul.addr %s212, 8
      %s214 = scalar_lea.vmem %s1, %s213
      %p215 = pneg %p63
      %p216 = pneg %p60
      %p217 = pneg %p84
      %p218 = pneg %p81
      %p219 = pneg %p105
      %p220 = pneg %p102
      %p221 = pneg %p126
      %p222 = pneg %p123
      %p223 = pneg %p152
      %p224 = pneg %p149
      %p225 = scmp.lt.s32.totalorder %s16, 1
      %s226 = scalar_select %p225, %s16, 1
      %s227 = smul.addr %s226, 2
      %s228 = smul.addr %s227, 8
      %s229 = scalar_lea.vmem %s5, %s228
      %p230 = scmp.lt.s32.totalorder %s16, 1
      %s231 = scalar_select %p230, %s16, 1
      %s232 = smul.addr %s231, 3
      %s233 = smul.addr %s232, 8
      %s234 = scalar_lea.vmem %s0, %s233
      %p235 = scmp.lt.s32.totalorder %s16, 1
      %s236 = scalar_select %p235, %s16, 1
      %s237 = smul.addr %s236, 3
      %s238 = smul.addr %s237, 8
      %s239 = scalar_lea.vmem %s1, %s238
      %p240 = scmp.lt.s32.totalorder %s16, 1
      %s241 = scalar_select %p240, %s16, 1
      %s242 = smul.addr %s241, 2
      %s243 = smul.addr %s242, 8
      %s244 = scalar_lea.vmem %s5, %s243
      %v245 = vld [vmem:[%s234] sm:$0xff]
      %v246 = vld [vmem:[%s234 + $0x8] sm:$0xff]
      %v247 = vld [vmem:[%s234 + $0x10] sm:$0x3]
      %v248 = vld [vmem:[%s239] sm:$0xff]
      %v249 = vld [vmem:[%s239 + $0x8] sm:$0xff]
      %v250 = vld [vmem:[%s239 + $0x10] sm:$0x3]
      %v251 = vld [vmem:[%s2] sm:$0x1f]
      %v252 = vlaneseq
      %v253 = vshrl.u32 %v252, 7
      %v254 = vsub.s32 0, %v253
      %v255 = vrot.slane %v251, %v254
      %v256 = vmul.f32 %v245, %v255
      %v257 = vmul.f32 %v246, %v255
      %v258 = vadd.f32 %v256, 0.0
      %v259 = vadd.f32 %v257, 0.0
      %v260 = vlaneseq
      %v261 = vshrl.u32 %v260, 7
      %v262 = vsub.s32 1, %v261
      %v263 = vrot.slane %v251, %v262
      %v264 = vmul.f32 %v248, %v263
      %v265 = vmul.f32 %v249, %v263
      %v266 = vadd.f32 %v258, %v264
      %v267 = vadd.f32 %v259, %v265
      %v268 = vlaneseq
      %v269 = vshrl.u32 %v268, 7
      %v270 = vsub.s32 2, %v269
      %v271 = vrot.slane %v251, %v270
      %v272 = vmul.f32 %v245, %v271
      %v273 = vmul.f32 %v246, %v271
      %v274 = vmul.f32 %v247, %v271
      %vm278 = vcmask 1046528
      %v279 = vrot.slane %v272, 1
      %v280 = vrot.slane %v273, 1
      %v281 = vsel %vm278, %v279, %v280
      %v282 = vrot.slane %v274, 1
      %v283 = vsel %vm278, %v280, %v282
      %v286 = vadd.f32 %v266, %v281
      %v287 = vadd.f32 %v267, %v283
      %v288 = vlaneseq
      %v289 = vshrl.u32 %v288, 7
      %v290 = vsub.s32 3, %v289
      %v291 = vrot.slane %v251, %v290
      %v292 = vmul.f32 %v248, %v291
      %v293 = vmul.f32 %v249, %v291
      %v294 = vmul.f32 %v250, %v291
      %v298 = vrot.slane %v292, 1
      %v299 = vrot.slane %v293, 1
      %v300 = vsel %vm278, %v298, %v299
      %v301 = vrot.slane %v294, 1
      %v302 = vsel %vm278, %v299, %v301
      %v305 = vadd.f32 %v286, %v300
      %v306 = vadd.f32 %v287, %v302
      %v307 = vlaneseq
      %v308 = vshrl.u32 %v307, 7
      %v309 = vsub.s32 4, %v308
      %v310 = vrot.slane %v251, %v309
      %v311 = vmul.f32 %v245, %v310
      %v312 = vmul.f32 %v246, %v310
      %v313 = vmul.f32 %v247, %v310
      %vm317 = vcmask 1045504
      %v318 = vrot.slane %v311, 2
      %v319 = vrot.slane %v312, 2
      %v320 = vsel %vm317, %v318, %v319
      %v321 = vrot.slane %v313, 2
      %v322 = vsel %vm317, %v319, %v321
      %v325 = vadd.f32 %v305, %v320
      %v326 = vadd.f32 %v306, %v322
      %v327 = vld [vmem:[%s3] sm:$0x1]
      %v329 = vlaneseq
      %v330 = vshrl.u32 %v329, 7
      %v331 = vsub.s32 0, %v330
      %v332 = vrot.slane %v327, %v331
      %v334 = vmul.f32 %v325, %v332
      %v335 = vmul.f32 %v326, %v332
      %v336 = vld [vmem:[%s4] sm:$0x1]
      %v338 = vlaneseq
      %v339 = vshrl.u32 %v338, 7
      %v340 = vsub.s32 0, %v339
      %v341 = vrot.slane %v336, %v340
      %v343 = vadd.f32 %v334, %v341
      %v344 = vadd.f32 %v335, %v341
      %v345 = vmul.f32 %v343, 0.5
      %v346 = vmul.f32 %v344, 0.5
      %v347 = vmul.f32 %v343, 0.70710677
      %v348 = vmul.f32 %v344, 0.70710677
      %v349 = verf.f32.pop %v347
      %v350 = verf.f32.pop %v348
      %v351 = vadd.f32 %v349, 1.0
      %v352 = vadd.f32 %v350, 1.0
      %v353 = vmul.f32 %v345, %v351
      %v354 = vmul.f32 %v346, %v352
      %vm355 = vcmask 64512
      %356 = vst.msk [vmem:[%s244] sm:$0xff] %vm355, %v353
      %357 = vst.msk [vmem:[%s244 + $0x8] sm:$0xff] %vm355, %v354
      %p358 = scmp.lt.s32.totalorder %s16, 1
      %s359 = scalar_select %p358, %s16, 1
      %s360 = smul.addr %s359, 2
      %s361 = smul.addr %s360, 8
      %s362 = scalar_lea.vmem %s5, %s361
      // Predicated region
      $region41: #{separator_forward.7} parent=39 // pred_check
        %p363 = pneg %p149
      $region42: #{separator_forward.7} parent=39 // pred_check_branch
        %365 = sbr.rel (%p363) target = $region44
      $region43: #{separator_forward.7} parent=39 // pred_region
        _
      $region44: #{separator_forward.7} parent=39 // pred_fallthru
        _
    $region40: #{separator_forward.7} parent=5 // pred_fallthru
      _
    %p366 = scmp.le.s32.totalorder 2, %s11
    // Predicated region
    $region45: #{separator_forward.7} parent=5 // pred_check
      %p367 = pneg %p366
    $region46: #{separator_forward.7} parent=5 // pred_check_branch
      %369 = sbr.rel (%p367) target = $region48
    $region47: #{separator_forward.7} parent=5 // pred_region
      %s370 = ssub.s32 %s11, 2
      // Predicated region
      $region49: #{separator_forward.7} parent=47 // pred_check
        %p371 = pneg %p155
      $region50: #{separator_forward.7} parent=47 // pred_check_branch
        %373 = sbr.rel (%p371) target = $region52
      $region51: #{separator_forward.7} parent=47 // pred_region
        %p374 = scmp.lt.s32.totalorder %s17, 1
        %s375 = scalar_select %p374, %s17, 1
        %s376 = smul.addr %s375, 2
        %s377 = smul.addr %s376, 8
        %s378 = scalar_lea.vmem %s5, %s377
      $region52: #{separator_forward.7} parent=47 // pred_fallthru
        _
    $region48: #{separator_forward.7} parent=5 // pred_fallthru
      _
  $region6: #{separator_forward.7} parent=0 // loop_footer
    %s15 = sadd.s32 1, %s11
  $region7: #{separator_forward.7} parent=0 // loop_footer_branch
    %10 = sbr.rel target = $region3
  $region8: #{separator_forward.7} parent=0 // loop_exit
    _

// kernel: separator_forward.10
$region0: #{separator_forward.10}
  #allocation0 [shape = 'u32[]', space=smem, size = 0x4, offset = 0x4, fixed_abs, tag = 'smem constant byte address 0x4 - core index']
  #allocation1 [shape = 'u32[144,128]{1,0:T(1,128)}', space=vmem, size = 0x12000, scoped, tag = 'internal scratch']
  %s0 = inlined_call_operand.vmem [shape: f32[2,16,8], index: 0, kind: input, shape index: {}]
  %s1 = inlined_call_operand.vmem [shape: f32[8,32], index: 1, kind: input, shape index: {}]
  %s2 = inlined_call_operand.vmem [shape: f32[1,32], index: 2, kind: input, shape index: {}]
  %s3 = inlined_call_operand.vmem [shape: f32[8,32], index: 3, kind: input, shape index: {}]
  %s4 = inlined_call_operand.vmem [shape: f32[1,32], index: 4, kind: input, shape index: {}]
  %s5 = inlined_call_operand.vmem [shape: f32[32,16], index: 5, kind: input, shape index: {}]
  %s6 = inlined_call_operand.vmem [shape: f32[1,16], index: 6, kind: input, shape index: {}]
  %s7 = inlined_call_operand.vmem [shape: f32[1,8], index: 7, kind: input, shape index: {}]
  %s8 = inlined_call_operand.vmem [shape: f32[1,8], index: 8, kind: input, shape index: {}]
  %s9 = inlined_call_operand.vmem [shape: f32[2,2,16,8], index: 9, kind: output, shape index: {}]
  %s10 = sld [smem:[#allocation0]]
  $region69: #{separator_forward.10} parent=0
    _
  %s12 = ssub.s32 1, %s10
  %s13 = scalar_select 0, %s12, %s10
  loop: start=0, step=1, limit=4
  $region2: #{separator_forward.10} parent=0 // loop_pre_header
    _
  $region3: #{separator_forward.10} parent=0 // loop_header
    %s15 = sphi 0, %s19
    %p16 = scmp.ge.s32.totalorder %s15, 4
    %s25 = sphi 0, %s27
    %s28 = sphi 0, %s25
    %s29 = sphi 0, %s28
    %s45 = sphi 0, %s29
    %s49 = sphi 0, %s49
    %s51 = sphi 0, %s49
    %s52 = sphi 0, %s51
    %s66 = sphi 0, %s52
    %s70 = sphi 0, %s70
    %s72 = sphi 0, %s70
    %s73 = sphi 0, %s72
    %s87 = sphi 0, %s73
    %s91 = sphi 0, %s91
    %s93 = sphi 0, %s91
    %s94 = sphi 0, %s93
    %s108 = sphi 0, %s94
    %s112 = sphi 0, %s112
    %s114 = sphi 0, %s112
    %s115 = sphi 0, %s114
    %s129 = sphi 0, %s115
    %s133 = sphi 0, %s133
    %s135 = sphi 0, %s133
    %s136 = sphi 0, %s135
    %s150 = sphi 0, %s136
    %s154 = sphi 0, %s154
    %s156 = sphi 0, %s154
    %s157 = sphi 0, %s156
    %s171 = sphi 0, %s157
    %s175 = sphi 0, %s175
    %s177 = sphi 0, %s175
    %s178 = sphi 0, %s177
    %s192 = sphi 0, %s178
    %s196 = sphi 0, %s196
    %s198 = sphi 0, %s196
    %s199 = sphi 0, %s198
    %s213 = sphi 0, %s199
    %s219 = sphi 0, %s221
    %s222 = sphi 0, %s219
    %s223 = sphi 0, %s222
    %s239 = sphi 0, %s223
  $region4: #{separator_forward.10} parent=0 // loop_header_branch
    %18 = sbr.rel (%p16) target = $region8
  $region5: #{separator_forward.10} parent=0 // loop_body
    %s20 = ssub.s32 %s15, 1
    %s21 = ssub.s32 %s15, 2
    %s22 = sadd.s32 %s15, 1
    %s23 = ssub.s32 %s15, %s22
    %p24 = scmp.eq.s32.totalorder %s23, 0
    %s26 = sadd.s32 %s25, 1
    %s27 = scalar_select %p24, %s25, %s26
    %p30 = pneg %p24
    %p31 = scmp.eq.s32.totalorder %s15, 1
    %p32 = por %p30, %p31
    %p33 = scmp.ne.s32.totalorder %s25, %s28
    %p34 = scmp.eq.s32.totalorder %s15, 0
    %p35 = por %p33, %p34
    %p36 = scmp.ne.s32.totalorder %s25, %s28
    %p37 = scmp.eq.s32.totalorder %s20, 1
    %p38 = por %p36, %p37
    %p39 = scmp.ne.s32.totalorder %s28, %s29
    %p40 = scmp.eq.s32.totalorder %s20, 0
    %p41 = por %p39, %p40
    %p42 = scmp.ne.s32.totalorder %s28, %s29
    %p43 = scmp.eq.s32.totalorder %s21, 1
    %p44 = por %p42, %p43
    %p46 = scmp.ne.s32.totalorder %s29, %s45
    %p47 = scmp.eq.s32.totalorder %s21, 0
    %p48 = por %p46, %p47
    %s50 = sadd.s32 %s49, 1
    %p53 = scmp.eq.s32.totalorder %s15, 1
    %p54 = scmp.ne.s32.totalorder %s49, %s51
    %p55 = scmp.eq.s32.totalorder %s15, 0
    %p56 = por %p54, %p55
    %p57 = scmp.ne.s32.totalorder %s49, %s51
    %p58 = scmp.eq.s32.totalorder %s20, 1
    %p59 = por %p57, %p58
    %p60 = scmp.ne.s32.totalorder %s51, %s52
    %p61 = scmp.eq.s32.totalorder %s20, 0
    %p62 = por %p60, %p61
    %p63 = scmp.ne.s32.totalorder %s51, %s52
    %p64 = scmp.eq.s32.totalorder %s21, 1
    %p65 = por %p63, %p64
    %p67 = scmp.ne.s32.totalorder %s52, %s66
    %p68 = scmp.eq.s32.totalorder %s21, 0
    %p69 = por %p67, %p68
    %s71 = sadd.s32 %s70, 1
    %p74 = scmp.eq.s32.totalorder %s15, 1
    %p75 = scmp.ne.s32.totalorder %s70, %s72
    %p76 = scmp.eq.s32.totalorder %s15, 0
    %p77 = por %p75, %p76
    %p78 = scmp.ne.s32.totalorder %s70, %s72
    %p79 = scmp.eq.s32.totalorder %s20, 1
    %p80 = por %p78, %p79
    %p81 = scmp.ne.s32.totalorder %s72, %s73
    %p82 = scmp.eq.s32.totalorder %s20, 0
    %p83 = por %p81, %p82
    %p84 = scmp.ne.s32.totalorder %s72, %s73
    %p85 = scmp.eq.s32.totalorder %s21, 1
    %p86 = por %p84, %p85
    %p88 = scmp.ne.s32.totalorder %s73, %s87
    %p89 = scmp.eq.s32.totalorder %s21, 0
    %p90 = por %p88, %p89
    %s92 = sadd.s32 %s91, 1
    %p95 = scmp.eq.s32.totalorder %s15, 1
    %p96 = scmp.ne.s32.totalorder %s91, %s93
    %p97 = scmp.eq.s32.totalorder %s15, 0
    %p98 = por %p96, %p97
    %p99 = scmp.ne.s32.totalorder %s91, %s93
    %p100 = scmp.eq.s32.totalorder %s20, 1
    %p101 = por %p99, %p100
    %p102 = scmp.ne.s32.totalorder %s93, %s94
    %p103 = scmp.eq.s32.totalorder %s20, 0
    %p104 = por %p102, %p103
    %p105 = scmp.ne.s32.totalorder %s93, %s94
    %p106 = scmp.eq.s32.totalorder %s21, 1
    %p107 = por %p105, %p106
    %p109 = scmp.ne.s32.totalorder %s94, %s108
    %p110 = scmp.eq.s32.totalorder %s21, 0
    %p111 = por %p109, %p110
    %s113 = sadd.s32 %s112, 1
    %p116 = scmp.eq.s32.totalorder %s15, 1
    %p117 = scmp.ne.s32.totalorder %s112, %s114
    %p118 = scmp.eq.s32.totalorder %s15, 0
    %p119 = por %p117, %p118
    %p120 = scmp.ne.s32.totalorder %s112, %s114
    %p121 = scmp.eq.s32.totalorder %s20, 1
    %p122 = por %p120, %p121
    %p123 = scmp.ne.s32.totalorder %s114, %s115
    %p124 = scmp.eq.s32.totalorder %s20, 0
    %p125 = por %p123, %p124
    %p126 = scmp.ne.s32.totalorder %s114, %s115
    %p127 = scmp.eq.s32.totalorder %s21, 1
    %p128 = por %p126, %p127
    %p130 = scmp.ne.s32.totalorder %s115, %s129
    %p131 = scmp.eq.s32.totalorder %s21, 0
    %p132 = por %p130, %p131
    %s134 = sadd.s32 %s133, 1
    %p137 = scmp.eq.s32.totalorder %s15, 1
    %p138 = scmp.ne.s32.totalorder %s133, %s135
    %p139 = scmp.eq.s32.totalorder %s15, 0
    %p140 = por %p138, %p139
    %p141 = scmp.ne.s32.totalorder %s133, %s135
    %p142 = scmp.eq.s32.totalorder %s20, 1
    %p143 = por %p141, %p142
    %p144 = scmp.ne.s32.totalorder %s135, %s136
    %p145 = scmp.eq.s32.totalorder %s20, 0
    %p146 = por %p144, %p145
    %p147 = scmp.ne.s32.totalorder %s135, %s136
    %p148 = scmp.eq.s32.totalorder %s21, 1
    %p149 = por %p147, %p148
    %p151 = scmp.ne.s32.totalorder %s136, %s150
    %p152 = scmp.eq.s32.totalorder %s21, 0
    %p153 = por %p151, %p152
    %s155 = sadd.s32 %s154, 1
    %p158 = scmp.eq.s32.totalorder %s15, 1
    %p159 = scmp.ne.s32.totalorder %s154, %s156
    %p160 = scmp.eq.s32.totalorder %s15, 0
    %p161 = por %p159, %p160
    %p162 = scmp.ne.s32.totalorder %s154, %s156
    %p163 = scmp.eq.s32.totalorder %s20, 1
    %p164 = por %p162, %p163
    %p165 = scmp.ne.s32.totalorder %s156, %s157
    %p166 = scmp.eq.s32.totalorder %s20, 0
    %p167 = por %p165, %p166
    %p168 = scmp.ne.s32.totalorder %s156, %s157
    %p169 = scmp.eq.s32.totalorder %s21, 1
    %p170 = por %p168, %p169
    %p172 = scmp.ne.s32.totalorder %s157, %s171
    %p173 = scmp.eq.s32.totalorder %s21, 0
    %p174 = por %p172, %p173
    %s176 = sadd.s32 %s175, 1
    %p179 = scmp.eq.s32.totalorder %s15, 1
    %p180 = scmp.ne.s32.totalorder %s175, %s177
    %p181 = scmp.eq.s32.totalorder %s15, 0
    %p182 = por %p180, %p181
    %p183 = scmp.ne.s32.totalorder %s175, %s177
    %p184 = scmp.eq.s32.totalorder %s20, 1
    %p185 = por %p183, %p184
    %p186 = scmp.ne.s32.totalorder %s177, %s178
    %p187 = scmp.eq.s32.totalorder %s20, 0
    %p188 = por %p186, %p187
    %p189 = scmp.ne.s32.totalorder %s177, %s178
    %p190 = scmp.eq.s32.totalorder %s21, 1
    %p191 = por %p189, %p190
    %p193 = scmp.ne.s32.totalorder %s178, %s192
    %p194 = scmp.eq.s32.totalorder %s21, 0
    %p195 = por %p193, %p194
    %s197 = sadd.s32 %s196, 1
    %p200 = scmp.eq.s32.totalorder %s15, 1
    %p201 = scmp.ne.s32.totalorder %s196, %s198
    %p202 = scmp.eq.s32.totalorder %s15, 0
    %p203 = por %p201, %p202
    %p204 = scmp.ne.s32.totalorder %s196, %s198
    %p205 = scmp.eq.s32.totalorder %s20, 1
    %p206 = por %p204, %p205
    %p207 = scmp.ne.s32.totalorder %s198, %s199
    %p208 = scmp.eq.s32.totalorder %s20, 0
    %p209 = por %p207, %p208
    %p210 = scmp.ne.s32.totalorder %s198, %s199
    %p211 = scmp.eq.s32.totalorder %s21, 1
    %p212 = por %p210, %p211
    %p214 = scmp.ne.s32.totalorder %s199, %s213
    %p215 = scmp.eq.s32.totalorder %s21, 0
    %p216 = por %p214, %p215
    %s217 = ssub.s32 %s15, %s22
    %p218 = scmp.eq.s32.totalorder %s217, 0
    %s220 = sadd.s32 %s219, 1
    %s221 = scalar_select %p218, %s219, %s220
    %p224 = pneg %p218
    %p225 = scmp.eq.s32.totalorder %s15, 1
    %p226 = por %p224, %p225
    %p227 = scmp.ne.s32.totalorder %s219, %s222
    %p228 = scmp.eq.s32.totalorder %s15, 0
    %p229 = por %p227, %p228
    %p230 = scmp.ne.s32.totalorder %s219, %s222
    %p231 = scmp.eq.s32.totalorder %s20, 1
    %p232 = por %p230, %p231
    %p233 = scmp.ne.s32.totalorder %s222, %s223
    %p234 = scmp.eq.s32.totalorder %s20, 0
    %p235 = por %p233, %p234
    %p236 = scmp.ne.s32.totalorder %s222, %s223
    %p237 = scmp.eq.s32.totalorder %s21, 1
    %p238 = por %p236, %p237
    %p240 = scmp.ne.s32.totalorder %s223, %s239
    %p241 = scmp.eq.s32.totalorder %s21, 0
    %p242 = por %p240, %p241
    %p243 = scmp.le.s32.totalorder 1, %s15
    %p244 = scmp.lt.s32.totalorder %s15, 3
    %p245 = pnand %p243, %p244
    %p246 = pneg %p245
    // Predicated region
    $region9: #{separator_forward.10} parent=5 // pred_check
      _
    $region10: #{separator_forward.10} parent=5 // pred_check_branch
      %248 = sbr.rel (%p245) target = $region12
    $region11: #{separator_forward.10} parent=5 // pred_region
      %s249 = ssub.s32 %s15, 1
      // Predicated region
      $region13: #{separator_forward.10} parent=11 // pred_check
        %p250 = pneg %p62
      $region14: #{separator_forward.10} parent=11 // pred_check_branch
        %252 = sbr.rel (%p250) target = $region16
      $region15: #{separator_forward.10} parent=11 // pred_region
        _
      $region16: #{separator_forward.10} parent=11 // pred_fallthru
        _
      // Predicated region
      $region17: #{separator_forward.10} parent=11 // pred_check
        %p253 = pneg %p83
      $region18: #{separator_forward.10} parent=11 // pred_check_branch
        %255 = sbr.rel (%p253) target = $region20
      $region19: #{separator_forward.10} parent=11 // pred_region
        _
      $region20: #{separator_forward.10} parent=11 // pred_fallthru
        _
      // Predicated region
      $region21: #{separator_forward.10} parent=11 // pred_check
        %p256 = pneg %p104
      $region22: #{separator_forward.10} parent=11 // pred_check_branch
        %258 = sbr.rel (%p256) target = $region24
      $region23: #{separator_forward.10} parent=11 // pred_region
        _
      $region24: #{separator_forward.10} parent=11 // pred_fallthru
        _
      // Predicated region
      $region25: #{separator_forward.10} parent=11 // pred_check
        %p259 = pneg %p125
      $region26: #{separator_forward.10} parent=11 // pred_check_branch
        %261 = sbr.rel (%p259) target = $region28
      $region27: #{separator_forward.10} parent=11 // pred_region
        _
      $region28: #{separator_forward.10} parent=11 // pred_fallthru
        _
      // Predicated region
      $region29: #{separator_forward.10} parent=11 // pred_check
        %p262 = pneg %p146
      $region30: #{separator_forward.10} parent=11 // pred_check_branch
        %264 = sbr.rel (%p262) target = $region32
      $region31: #{separator_forward.10} parent=11 // pred_region
        _
      $region32: #{separator_forward.10} parent=11 // pred_fallthru
        _
      // Predicated region
      $region33: #{separator_forward.10} parent=11 // pred_check
        %p265 = pneg %p167
      $region34: #{separator_forward.10} parent=11 // pred_check_branch
        %267 = sbr.rel (%p265) target = $region36
      $region35: #{separator_forward.10} parent=11 // pred_region
        _
      $region36: #{separator_forward.10} parent=11 // pred_fallthru
        _
      // Predicated region
      $region37: #{separator_forward.10} parent=11 // pred_check
        %p268 = pneg %p188
      $region38: #{separator_forward.10} parent=11 // pred_check_branch
        %270 = sbr.rel (%p268) target = $region40
      $region39: #{separator_forward.10} parent=11 // pred_region
        _
      $region40: #{separator_forward.10} parent=11 // pred_fallthru
        _
      // Predicated region
      $region41: #{separator_forward.10} parent=11 // pred_check
        %p271 = pneg %p209
      $region42: #{separator_forward.10} parent=11 // pred_check_branch
        %273 = sbr.rel (%p271) target = $region44
      $region43: #{separator_forward.10} parent=11 // pred_region
        _
      $region44: #{separator_forward.10} parent=11 // pred_fallthru
        _
    $region12: #{separator_forward.10} parent=5 // pred_fallthru
      _
    %p274 = scmp.lt.s32.totalorder %s15, 2
    // Predicated region
    $region45: #{separator_forward.10} parent=5 // pred_check
      %p275 = pneg %p274
    $region46: #{separator_forward.10} parent=5 // pred_check_branch
      %277 = sbr.rel (%p275) target = $region48
    $region47: #{separator_forward.10} parent=5 // pred_region
      // Predicated region
      $region49: #{separator_forward.10} parent=47 // pred_check
        %p278 = pneg %p35
      $region50: #{separator_forward.10} parent=47 // pred_check_branch
        %280 = sbr.rel (%p278) target = $region52
      $region51: #{separator_forward.10} parent=47 // pred_region
        %p281 = scmp.lt.s32.totalorder %s15, 1
        %s282 = scalar_select %p281, %s15, 1
        %s283 = smul.addr %s282, 2
        %s284 = smul.addr %s283, 8
        %s285 = scalar_lea.vmem %s0, %s284
      $region52: #{separator_forward.10} parent=47 // pred_fallthru
        _
    $region48: #{separator_forward.10} parent=5 // pred_fallthru
      _
    %p286 = scmp.le.s32.totalorder 1, %s15
    %p287 = scmp.lt.s32.totalorder %s15, 3
    %p288 = pnand %p286, %p287
    %p289 = pneg %p288
    // Predicated region
    $region53: #{separator_forward.10} parent=5 // pred_check
      _
    $region54: #{separator_forward.10} parent=5 // pred_check_branch
      %291 = sbr.rel (%p288) target = $region56
    $region55: #{separator_forward.10} parent=5 // pred_region
      %s292 = ssub.s32 %s15, 1
      %p293 = scmp.lt.s32.totalorder %s20, 1
      %s294 = scalar_select %p293, %s20, 1
      %s295 = smul.addr %s294, 2
      %s296 = smul.addr %s295, 8
      %s297 = scalar_lea.vmem %s0, %s296
      %p298 = pneg %p41
      %p299 = pneg %p38
      %p300 = pneg %p62
      %p301 = pneg %p59
      %p302 = pneg %p83
      %p303 = pneg %p80
      %p304 = pneg %p104
      %p305 = pneg %p101
      %p306 = pneg %p125
      %p307 = pneg %p122
      %p308 = pneg %p146
      %p309 = pneg %p143
      %p310 = pneg %p167
      %p311 = pneg %p164
      %p312 = pneg %p188
      %p313 = pneg %p185
      %p314 = pneg %p209
      %p315 = pneg %p206
      %p316 = pneg %p235
      %p317 = pneg %p232
      %p318 = scmp.lt.s32.totalorder %s20, 1
      %s319 = scalar_select %p318, %s20, 1
      %s320 = smul.addr %s319, 4
      %s321 = smul.addr %s320, 8
      %s322 = scalar_lea.vmem %s9, %s321
      %p323 = scmp.lt.s32.totalorder %s20, 1
      %s324 = scalar_select %p323, %s20, 1
      %s325 = smul.addr %s324, 2
      %s326 = smul.addr %s325, 8
      %s327 = scalar_lea.vmem %s0, %s326
      %p328 = scmp.lt.s32.totalorder %s20, 1
      %s329 = scalar_select %p328, %s20, 1
      %s330 = smul.addr %s329, 4
      %s331 = smul.addr %s330, 8
      %s332 = scalar_lea.vmem %s9, %s331
      %v333 = vld [vmem:[%s327] sm:$0xff]
      %v334 = vld [vmem:[%s327 + $0x8] sm:$0xff]
      %v335 = vld [vmem:[%s1] sm:$0xff]
      %v336 = vld [vmem:[%s2] sm:$0x1]
      %v338 = vlaneseq
      %v339 = vshrl.u32 %v338, 7
      %v340 = vsub.s32 0, %v339
      %v341 = vrot.slane %v336, %v340
      %vm343 = vcmask 64512
      %v345 = vsel %vm343, %v333, 0
      %v348 = vsel %vm343, %v334, 0
      %350 = vmatprep.subr.mxu0 0.0
      %351 = vmatpush1.msra.mxu0 %v335
      %352 = vmatprep.subr.mxu0 0.0
      %353 = vmatpush1.msra.mxu0 0.0
      %354 = vmatprep.subr.mxu0 0.0
      %355 = vmatpush1.msra.mxu0 0.0
      %356 = vmatprep.subr.mxu0 0.0
      %357 = vmatpush1.msra.mxu0 0.0
      %358 = vmatprep.subr.mxu0 0.0
      %359 = vmatpush1.msra.mxu0 0.0
      %360 = vmatprep.subr.mxu0 0.0
      %361 = vmatpush1.msra.mxu0 0.0
      %362 = vmatprep.subr.mxu0 0.0
      %363 = vmatpush1.msra.mxu0 0.0
      %364 = vmatprep.subr.mxu0 0.0
      %365 = vmatpush1.msra.mxu0 0.0
      %366 = vmatprep.subr.mxu0 0.0
      %367 = vmatpush1.msra.mxu0 0.0
      %368 = vmatprep.subr.mxu0 0.0
      %369 = vmatpush1.msra.mxu0 0.0
      %370 = vmatprep.subr.mxu0 0.0
      %371 = vmatpush1.msra.mxu0 0.0
      %372 = vmatprep.subr.mxu0 0.0
      %373 = vmatpush1.msra.mxu0 0.0
      %374 = vmatprep.subr.mxu0 0.0
      %375 = vmatpush1.msra.mxu0 0.0
      %376 = vmatprep.subr.mxu0 0.0
      %377 = vmatpush1.msra.mxu0 0.0
      %378 = vmatprep.subr.mxu0 0.0
      %379 = vmatpush1.msra.mxu0 0.0
      %380 = vmatprep.subr.mxu0 0.0
      %381 = vmatpush1.msra.mxu0 0.0
      %382 = vmatprep.subr.mxu0 0.0
      %383 = vmatpush1.msra.mxu0 0.0
      %384 = vmatprep.subr.mxu0 0.0
      %385 = vmatpush1.msra.mxu0 0.0
      %386 = vmatprep.subr.mxu0 0.0
      %387 = vmatpush1.msra.mxu0 0.0
      %388 = vmatprep.subr.mxu0 0.0
      %389 = vmatpush1.msra.mxu0 0.0
      %390 = vmatprep.subr.mxu0 0.0
      %391 = vmatpush1.msra.mxu0 0.0
      %392 = vmatprep.subr.mxu0 0.0
      %393 = vmatpush1.msra.mxu0 0.0
      %394 = vmatprep.subr.mxu0 0.0
      %395 = vmatpush1.msra.mxu0 0.0
      %396 = vmatprep.subr.mxu0 0.0
      %397 = vmatpush1.msra.mxu0 0.0
      %398 = vmatprep.subr.mxu0 0.0
      %399 = vmatpush1.msra.mxu0 0.0
      %400 = vmatprep.subr.mxu0 0.0
      %401 = vmatpush1.msra.mxu0 0.0
      %402 = vmatprep.subr.mxu0 0.0
      %403 = vmatpush1.msra.mxu0 0.0
      %404 = vmatprep.subr.mxu0 0.0
      %405 = vmatpush1.msra.mxu0 0.0
      %406 = vmatprep.subr.mxu0 0.0
      %407 = vmatpush1.msra.mxu0 0.0
      %408 = vmatprep.subr.mxu0 0.0
      %409 = vmatpush1.msra.mxu0 0.0
      %410 = vmatprep.subr.mxu0 0.0
      %411 = vmatpush1.msra.mxu0 0.0
      %412 = vmatprep.subr.mxu0 0.0
      %413 = vmatpush1.msra.mxu0 0.0
      %414 = vmatprep.mubr.f32.mxu0 0.0
      %415 = vmatmul.mubr.f32.gmra.mrb[0].mxu0 %v345
      %v416 = vpop.f32.mrb[0].mxu0
      %v417 = vadd.f32 %v341, %v416
      %v418 = vpop.f32.mrb[0].mxu0
      %419 = vmatprep.mubr.f32.mxu0 0.0
      %420 = vmatmul.mubr.f32.gmra.mrb[0].mxu0 %v348
      %v421 = vpop.f32.mrb[0].mxu0
      %v422 = vadd.f32 %v341, %v421
      %v423 = vpop.f32.mrb[0].mxu0
      %424 = vdwg.mxu0
      %v425 = vld [vmem:[%s3] sm:$0xff]
      %v426 = vld [vmem:[%s4] sm:$0x1]
      %v428 = vlaneseq
      %v429 = vshrl.u32 %v428, 7
      %v430 = vsub.s32 0, %v429
      %v431 = vrot.slane %v426, %v430
      %433 = vmatprep.subr.mxu0 0.0
      %434 = vmatpush1.msra.mxu0 %v425
      %435 = vmatprep.subr.mxu0 0.0
      %436 = vmatpush1.msra.mxu0 0.0
      %437 = vmatprep.subr.mxu0 0.0
      %438 = vmatpush1.msra.mxu0 0.0
      %439 = vmatprep.subr.mxu0 0.0
      %440 = vmatpush1.msra.mxu0 0.0
      %441 = vmatprep.subr.mxu0 0.0
      %442 = vmatpush1.msra.mxu0 0.0
      %443 = vmatprep.subr.mxu0 0.0
      %444 = vmatpush1.msra.mxu0 0.0
      %445 = vmatprep.subr.mxu0 0.0
      %446 = vmatpush1.msra.mxu0 0.0
      %447 = vmatprep.subr.mxu0 0.0
      %448 = vmatpush1.msra.mxu0 0.0
      %449 = vmatprep.subr.mxu0 0.0
      %450 = vmatpush1.msra.mxu0 0.0
      %451 = vmatprep.subr.mxu0 0.0
      %452 = vmatpush1.msra.mxu0 0.0
      %453 = vmatprep.subr.mxu0 0.0
      %454 = vmatpush1.msra.mxu0 0.0
      %455 = vmatprep.subr.mxu0 0.0
      %456 = vmatpush1.msra.mxu0 0.0
      %457 = vmatprep.subr.mxu0 0.0
      %458 = vmatpush1.msra.mxu0 0.0
      %459 = vmatprep.subr.mxu0 0.0
      %460 = vmatpush1.msra.mxu0 0.0
      %461 = vmatprep.subr.mxu0 0.0
      %462 = vmatpush1.msra.mxu0 0.0
      %463 = vmatprep.subr.mxu0 0.0
      %464 = vmatpush1.msra.mxu0 0.0
      %465 = vmatprep.subr.mxu0 0.0
      %466 = vmatpush1.msra.mxu0 0.0
      %467 = vmatprep.subr.mxu0 0.0
      %468 = vmatpush1.msra.mxu0 0.0
      %469 = vmatprep.subr.mxu0 0.0
      %470 = vmatpush1.msra.mxu0 0.0
      %471 = vmatprep.subr.mxu0 0.0
      %472 = vmatpush1.msra.mxu0 0.0
      %473 = vmatprep.subr.mxu0 0.0
      %474 = vmatpush1.msra.mxu0 0.0
      %475 = vmatprep.subr.mxu0 0.0
      %476 = vmatpush1.msra.mxu0 0.0
      %477 = vmatprep.subr.mxu0 0.0
      %478 = vmatpush1.msra.mxu0 0.0
      %479 = vmatprep.subr.mxu0 0.0
      %480 = vmatpush1.msra.mxu0 0.0
      %481 = vmatprep.subr.mxu0 0.0
      %482 = vmatpush1.msra.mxu0 0.0
      %483 = vmatprep.subr.mxu0 0.0
      %484 = vmatpush1.msra.mxu0 0.0
      %485 = vmatprep.subr.mxu0 0.0
      %486 = vmatpush1.msra.mxu0 0.0
      %487 = vmatprep.subr.mxu0 0.0
      %488 = vmatpush1.msra.mxu0 0.0
      %489 = vmatprep.subr.mxu0 0.0
      %490 = vmatpush1.msra.mxu0 0.0
      %491 = vmatprep.subr.mxu0 0.0
      %492 = vmatpush1.msra.mxu0 0.0
      %493 = vmatprep.subr.mxu0 0.0
      %494 = vmatpush1.msra.mxu0 0.0
      %495 = vmatprep.subr.mxu0 0.0
      %496 = vmatpush1.msra.mxu0 0.0
      %497 = vmatprep.mubr.f32.mxu0 0.0
      %498 = vmatmul.mubr.f32.gmra.mrb[0].mxu0 %v345
      %v499 = vpop.f32.mrb[0].mxu0
      %v500 = vadd.f32 %v431, %v499
      %v501 = vpop.f32.mrb[0].mxu0
      %502 = vmatprep.mubr.f32.mxu0 0.0
      %503 = vmatmul.mubr.f32.gmra.mrb[0].mxu0 %v348
      %v504 = vpop.f32.mrb[0].mxu0
      %v505 = vadd.f32 %v431, %v504
      %v506 = vpop.f32.mrb[0].mxu0
      %507 = vdwg.mxu0
      %v508 = vxor.u32 %v500, 2147483648
      %v509 = vxor.u32 %v505, 2147483648
      %v510 = vmul.f32 %v508, 1.442695
      %v511 = vpow.pop %v510
      %v512 = vmul.f32 %v509, 1.442695
      %v513 = vpow.pop %v512
      %v514 = vadd.f32 %v511, 1.0
      %v515 = vadd.f32 %v513, 1.0
      %v516 = vrcp.pop %v514
      %v517 = vmul.f32 1.0, %v516
      %v518 = vrcp.pop %v515
      %v519 = vmul.f32 1.0, %v518
      %v520 = vmul.f32 %v417, %v517
      %v521 = vmul.f32 %v422, %v519
      %v522 = vld [vmem:[%s5] sm:$0xff]
      %v523 = vld [vmem:[%s5 + $0x8] sm:$0xff]
      %v524 = vld [vmem:[%s5 + $0x10] sm:$0xff]
      %v525 = vld [vmem:[%s5 + $0x18] sm:$0xff]
      %v526 = vld [vmem:[%s6] sm:$0x1]
      %v528 = vlaneseq
      %v529 = vshrl.u32 %v528, 7
      %v530 = vsub.s32 0, %v529
      %v531 = vrot.slane %v526, %v530
      %vm533 = vcmask 261120
      %v535 = vsel %vm533, %v520, 0
      %v538 = vsel %vm533, %v521, 0
      %540 = vmatprep.subr.mxu0 0.0
      %541 = vmatpush1.msra.mxu0 %v522
      %542 = vmatprep.subr.mxu0 0.0
      %543 = vmatpush1.msra.mxu0 %v523
      %544 = vmatprep.subr.mxu0 0.0
      %545 = vmatpush1.msra.mxu0 %v524
      %546 = vmatprep.subr.mxu0 0.0
      %547 = vmatpush1.msra.mxu0 %v525
      %548 = vmatprep.subr.mxu0 0.0
      %549 = vmatpush1.msra.mxu0 0.0
      %550 = vmatprep.subr.mxu0 0.0
      %551 = vmatpush1.msra.mxu0 0.0
      %552 = vmatprep.subr.mxu0 0.0
      %553 = vmatpush1.msra.mxu0 0.0
      %554 = vmatprep.subr.mxu0 0.0
      %555 = vmatpush1.msra.mxu0 0.0
      %556 = vmatprep.subr.mxu0 0.0
      %557 = vmatpush1.msra.mxu0 0.0
      %558 = vmatprep.subr.mxu0 0.0
      %559 = vmatpush1.msra.mxu0 0.0
      %560 = vmatprep.subr.mxu0 0.0
      %561 = vmatpush1.msra.mxu0 0.0
      %562 = vmatprep.subr.mxu0 0.0
      %563 = vmatpush1.msra.mxu0 0.0
      %564 = vmatprep.subr.mxu0 0.0
      %565 = vmatpush1.msra.mxu0 0.0
      %566 = vmatprep.subr.mxu0 0.0
      %567 = vmatpush1.msra.mxu0 0.0
      %568 = vmatprep.subr.mxu0 0.0
      %569 = vmatpush1.msra.mxu0 0.0
      %570 = vmatprep.subr.mxu0 0.0
      %571 = vmatpush1.msra.mxu0 0.0
      %572 = vmatprep.subr.mxu0 0.0
      %573 = vmatpush1.msra.mxu0 0.0
      %574 = vmatprep.subr.mxu0 0.0
      %575 = vmatpush1.msra.mxu0 0.0
      %576 = vmatprep.subr.mxu0 0.0
      %577 = vmatpush1.msra.mxu0 0.0
      %578 = vmatprep.subr.mxu0 0.0
      %579 = vmatpush1.msra.mxu0 0.0
      %580 = vmatprep.subr.mxu0 0.0
      %581 = vmatpush1.msra.mxu0 0.0
      %582 = vmatprep.subr.mxu0 0.0
      %583 = vmatpush1.msra.mxu0 0.0
      %584 = vmatprep.subr.mxu0 0.0
      %585 = vmatpush1.msra.mxu0 0.0
      %586 = vmatprep.subr.mxu0 0.0
      %587 = vmatpush1.msra.mxu0 0.0
      %588 = vmatprep.subr.mxu0 0.0
      %589 = vmatpush1.msra.mxu0 0.0
      %590 = vmatprep.subr.mxu0 0.0
      %591 = vmatpush1.msra.mxu0 0.0
      %592 = vmatprep.subr.mxu0 0.0
      %593 = vmatpush1.msra.mxu0 0.0
      %594 = vmatprep.subr.mxu0 0.0
      %595 = vmatpush1.msra.mxu0 0.0
      %596 = vmatprep.subr.mxu0 0.0
      %597 = vmatpush1.msra.mxu0 0.0
      %598 = vmatprep.subr.mxu0 0.0
      %599 = vmatpush1.msra.mxu0 0.0
      %600 = vmatprep.subr.mxu0 0.0
      %601 = vmatpush1.msra.mxu0 0.0
      %602 = vmatprep.subr.mxu0 0.0
      %603 = vmatpush1.msra.mxu0 0.0
      %604 = vmatprep.mubr.f32.mxu0 0.0
      %605 = vmatmul.mubr.f32.gmra.mrb[0].mxu0 %v535
      %v606 = vpop.f32.mrb[0].mxu0
      %v607 = vadd.f32 %v531, %v606
      %v608 = vpop.f32.mrb[0].mxu0
      %609 = vmatprep.mubr.f32.mxu0 0.0
      %610 = vmatmul.mubr.f32.gmra.mrb[0].mxu0 %v538
      %v611 = vpop.f32.mrb[0].mxu0
      %v612 = vadd.f32 %v531, %v611
      %v613 = vpop.f32.mrb[0].mxu0
      %614 = vdwg.mxu0
      %v615 = vsel %vm343, %v607, 0.0
      %v616 = vsel %vm343, %v612, 0.0
      %v617 = vadd.f32 %v615, %v616
      %618 = vadd.xlane.f32.xlu0 %v617
      %v619 = vpop.xlane.xlu0 %618
      %v620 = vrot.slane %v619, 4
      %v621 = vadd.f32 %v619, %v620
      %v622 = vrot.slane %v621, 2
      %v623 = vadd.f32 %v621, %v622
      %v624 = vrot.slane %v623, 1
      %v625 = vadd.f32 %v623, %v624
      %s626 = vtos %v625
      %v627 = vrcp.pop 128.0
      %s628 = vtos %v627
      %s629 = smul.f32 %s626, %s628
      %v630 = vstv %s629
      %v631 = vsub.f32 %v607, %v630
      %v632 = vsub.f32 %v612, %v630
      %v633 = vmul.f32 %v631, %v631
      %v634 = vmul.f32 %v632, %v632
      %v635 = vsel %vm343, %v633, 0.0
      %v636 = vsel %vm343, %v634, 0.0
      %v637 = vadd.f32 %v635, %v636
      %638 = vadd.xlane.f32.xlu0 %v637
      %v639 = vpop.xlane.xlu0 %638
      %v640 = vrot.slane %v639, 4
      %v641 = vadd.f32 %v639, %v640
      %v642 = vrot.slane %v641, 2
      %v643 = vadd.f32 %v641, %v642
      %v644 = vrot.slane %v643, 1
      %v645 = vadd.f32 %v643, %v644
      %s646 = vtos %v645
      %v647 = vrcp.pop 128.0
      %s648 = vtos %v647
      %s649 = smul.f32 %s646, %s648
      %s650 = sadd.f32 %s649, 1e-08
      %v651 = vstv %s650
      %v652 = vrsqrt.pop %v651
      %s653 = vtos %v652
      %v654 = vstv %s653
      %v655 = vmul.f32 %v631, %v654
      %v656 = vmul.f32 %v632, %v654
      %v657 = vld [vmem:[%s7] sm:$0x1]
      %v659 = vlaneseq
      %v660 = vshrl.u32 %v659, 7
      %v661 = vsub.s32 0, %v660
      %v662 = vrot.slane %v657, %v661
      %v664 = vmul.f32 %v655, %v662
      %v665 = vmul.f32 %v656, %v662
      %v666 = vld [vmem:[%s8] sm:$0x1]
      %v668 = vlaneseq
      %v669 = vshrl.u32 %v668, 7
      %v670 = vsub.s32 0, %v669
      %v671 = vrot.slane %v666, %v670
      %v673 = vadd.f32 %v664, %v671
      %v674 = vadd.f32 %v665, %v671
      %675 = vst.msk [vmem:[%s332] sm:$0xff] %vm343, %v673
      %676 = vst.msk [vmem:[%s332 + $0x8] sm:$0xff] %vm343, %v674
      %679 = vrot.lane.b32.xlu0 %v607, 120
      %v680 = vpop.permute.xlu0 %679
      %681 = vrot.lane.b32.xlu0 %v612, 120
      %v682 = vpop.permute.xlu0 %681
      %v685 = vsel %vm343, %v680, 0.0
      %v686 = vsel %vm343, %v682, 0.0
      %v687 = vadd.f32 %v685, %v686
      %688 = vadd.xlane.f32.xlu0 %v687
      %v689 = vpop.xlane.xlu0 %688
      %v690 = vrot.slane %v689, 4
      %v691 = vadd.f32 %v689, %v690
      %v692 = vrot.slane %v691, 2
      %v693 = vadd.f32 %v691, %v692
      %v694 = vrot.slane %v693, 1
      %v695 = vadd.f32 %v693, %v694
      %s696 = vtos %v695
      %v697 = vrcp.pop 128.0
      %s698 = vtos %v697
      %s699 = smul.f32 %s696, %s698
      %v700 = vstv %s699
      %v701 = vsub.f32 %v607, %v700
      %v702 = vsub.f32 %v612, %v700
      %v703 = vmul.f32 %v701, %v701
      %v704 = vmul.f32 %v702, %v702
      %707 = vrot.lane.b32.xlu0 %v703, 120
      %v708 = vpop.permute.xlu0 %707
      %709 = vrot.lane.b32.xlu0 %v704, 120
      %v710 = vpop.permute.xlu0 %709
      %v713 = vsel %vm343, %v708, 0.0
      %v714 = vsel %vm343, %v710, 0.0
      %v715 = vadd.f32 %v713, %v714
      %716 = vadd.xlane.f32.xlu0 %v715
      %v717 = vpop.xlane.xlu0 %716
      %v718 = vrot.slane %v717, 4
      %v719 = vadd.f32 %v717, %v718
      %v720 = vrot.slane %v719, 2
      %v721 = vadd.f32 %v719, %v720
      %v722 = vrot.slane %v721, 1
      %v723 = vadd.f32 %v721, %v722
      %s724 = vtos %v723
      %v725 = vrcp.pop 128.0
      %s726 = vtos %v725
      %s727 = smul.f32 %s724, %s726
      %s728 = sadd.f32 %s727, 1e-08
      %v729 = vstv %s728
      %v730 = vrsqrt.pop %v729
      %s731 = vtos %v730
      %v732 = vstv %s731
      %v733 = vmul.f32 %v701, %v732
      %v734 = vmul.f32 %v702, %v732
      %v735 = vld [vmem:[%s7] sm:$0x1]
      %v737 = vlaneseq
      %v738 = vshrl.u32 %v737, 7
      %v739 = vsub.s32 0, %v738
      %v740 = vrot.slane %v735, %v739
      %741 = vrot.lane.b32.xlu0 %v740, 8
      %v742 = vpop.permute.xlu0 %741
      %v744 = vmul.f32 %v733, %v742
      %v745 = vmul.f32 %v734, %v742
      %v746 = vld [vmem:[%s8] sm:$0x1]
      %v748 = vlaneseq
      %v749 = vshrl.u32 %v748, 7
      %v750 = vsub.s32 0, %v749
      %v751 = vrot.slane %v746, %v750
      %752 = vrot.lane.b32.xlu0 %v751, 8
      %v753 = vpop.permute.xlu0 %752
      %v755 = vadd.f32 %v744, %v753
      %v756 = vadd.f32 %v745, %v753
      %759 = vrot.lane.b32.xlu0 %v755, 120
      %v760 = vpop.permute.xlu0 %759
      %761 = vrot.lane.b32.xlu0 %v756, 120
      %v762 = vpop.permute.xlu0 %761
      %s765 = scalar_lea.vmem %s332, 16
      %766 = vst.msk [vmem:[%s765] sm:$0xff] %vm343, %v760
      %767 = vst.msk [vmem:[%s765 + $0x8] sm:$0xff] %vm343, %v762
      %p768 = scmp.lt.s32.totalorder %s20, 1
      %s769 = scalar_select %p768, %s20, 1
      %s770 = smul.addr %s769, 4
      %s771 = smul.addr %s770, 8
      %s772 = scalar_lea.vmem %s9, %s771
      // Predicated region
      $region57: #{separator_forward.10} parent=55 // pred_check
        %p773 = pneg %p232
      $region58: #{separator_forward.10} parent=55 // pred_check_branch
        %775 = sbr.rel (%p773) target = $region60
      $region59: #{separator_forward.10} parent=55 // pred_region
        _
      $region60: #{separator_forward.10} parent=55 // pred_fallthru
        _
    $region56: #{separator_forward.10} parent=5 // pred_fallthru
      _
    %p776 = scmp.le.s32.totalorder 2, %s15
    // Predicated region
    $region61: #{separator_forward.10} parent=5 // pred_check
      %p777 = pneg %p776
    $region62: #{separator_forward.10} parent=5 // pred_check_branch
      %779 = sbr.rel (%p777) target = $region64
    $region63: #{separator_forward.10} parent=5 // pred_region
      %s780 = ssub.s32 %s15, 2
      // Predicated region
      $region65: #{separator_forward.10} parent=63 // pred_check
        %p781 = pneg %p238
      $region66: #{separator_forward.10} parent=63 // pred_check_branch
        %783 = sbr.rel (%p781) target = $region68
      $region67: #{separator_forward.10} parent=63 // pred_region
        %p784 = scmp.lt.s32.totalorder %s21, 1
        %s785 = scalar_select %p784, %s21, 1
        %s786 = smul.addr %s785, 4
        %s787 = smul.addr %s786, 8
        %s788 = scalar_lea.vmem %s9, %s787
      $region68: #{separator_forward.10} parent=63 // pred_fallthru
        _
    $region64: #{separator_forward.10} parent=5 // pred_fallthru
      _
  $region6: #{separator_forward.10} parent=0 // loop_footer
    %s19 = sadd.s32 1, %s15
  $region7: #{separator_forward.10} parent=0 // loop_footer_branch
    %14 = sbr.rel target = $region3
  $region8: #{separator_forward.10} parent=0 // loop_exit
    _

// kernel: separator_forward.8
$region0: #{separator_forward.8}
  #allocation0 [shape = 'u32[]', space=smem, size = 0x4, offset = 0x4, fixed_abs, tag = 'smem constant byte address 0x4 - core index']
  #allocation1 [shape = 'u32[144,128]{1,0:T(1,128)}', space=vmem, size = 0x12000, scoped, tag = 'internal scratch']
  %s0 = inlined_call_operand.vmem [shape: f32[2,32,8], index: 0, kind: input, shape index: {}]
  %s1 = inlined_call_operand.vmem [shape: f32[8,32], index: 1, kind: input, shape index: {}]
  %s2 = inlined_call_operand.vmem [shape: f32[1,32], index: 2, kind: input, shape index: {}]
  %s3 = inlined_call_operand.vmem [shape: f32[8,32], index: 3, kind: input, shape index: {}]
  %s4 = inlined_call_operand.vmem [shape: f32[1,32], index: 4, kind: input, shape index: {}]
  %s5 = inlined_call_operand.vmem [shape: f32[32,16], index: 5, kind: input, shape index: {}]
  %s6 = inlined_call_operand.vmem [shape: f32[1,16], index: 6, kind: input, shape index: {}]
  %s7 = inlined_call_operand.vmem [shape: f32[1,8], index: 7, kind: input, shape index: {}]
  %s8 = inlined_call_operand.vmem [shape: f32[1,8], index: 8, kind: input, shape index: {}]
  %s9 = inlined_call_operand.vmem [shape: f32[2,2,32,8], index: 9, kind: output, shape index: {}]
  %s10 = sld [smem:[#allocation0]]
  $region69: #{separator_forward.8} parent=0
    _
  %s12 = ssub.s32 1, %s10
  %s13 = scalar_select 0, %s12, %s10
  loop: start=0, step=1, limit=4
  $region2: #{separator_forward.8} parent=0 // loop_pre_header
    _
  $region3: #{separator_forward.8} parent=0 // loop_header
    %s15 = sphi 0, %s19
    %p16 = scmp.ge.s32.totalorder %s15, 4
    %s25 = sphi 0, %s27
    %s28 = sphi 0, %s25
    %s29 = sphi 0, %s28
    %s45 = sphi 0, %s29
    %s49 = sphi 0, %s49
    %s51 = sphi 0, %s49
    %s52 = sphi 0, %s51
    %s66 = sphi 0, %s52
    %s70 = sphi 0, %s70
    %s72 = sphi 0, %s70
    %s73 = sphi 0, %s72
    %s87 = sphi 0, %s73
    %s91 = sphi 0, %s91
    %s93 = sphi 0, %s91
    %s94 = sphi 0, %s93
    %s108 = sphi 0, %s94
    %s112 = sphi 0, %s112
    %s114 = sphi 0, %s112
    %s115 = sphi 0, %s114
    %s129 = sphi 0, %s115
    %s133 = sphi 0, %s133
    %s135 = sphi 0, %s133
    %s136 = sphi 0, %s135
    %s150 = sphi 0, %s136
    %s154 = sphi 0, %s154
    %s156 = sphi 0, %s154
    %s157 = sphi 0, %s156
    %s171 = sphi 0, %s157
    %s175 = sphi 0, %s175
    %s177 = sphi 0, %s175
    %s178 = sphi 0, %s177
    %s192 = sphi 0, %s178
    %s196 = sphi 0, %s196
    %s198 = sphi 0, %s196
    %s199 = sphi 0, %s198
    %s213 = sphi 0, %s199
    %s219 = sphi 0, %s221
    %s222 = sphi 0, %s219
    %s223 = sphi 0, %s222
    %s239 = sphi 0, %s223
  $region4: #{separator_forward.8} parent=0 // loop_header_branch
    %18 = sbr.rel (%p16) target = $region8
  $region5: #{separator_forward.8} parent=0 // loop_body
    %s20 = ssub.s32 %s15, 1
    %s21 = ssub.s32 %s15, 2
    %s22 = sadd.s32 %s15, 1
    %s23 = ssub.s32 %s15, %s22
    %p24 = scmp.eq.s32.totalorder %s23, 0
    %s26 = sadd.s32 %s25, 1
    %s27 = scalar_select %p24, %s25, %s26
    %p30 = pneg %p24
    %p31 = scmp.eq.s32.totalorder %s15, 1
    %p32 = por %p30, %p31
    %p33 = scmp.ne.s32.totalorder %s25, %s28
    %p34 = scmp.eq.s32.totalorder %s15, 0
    %p35 = por %p33, %p34
    %p36 = scmp.ne.s32.totalorder %s25, %s28
    %p37 = scmp.eq.s32.totalorder %s20, 1
    %p38 = por %p36, %p37
    %p39 = scmp.ne.s32.totalorder %s28, %s29
    %p40 = scmp.eq.s32.totalorder %s20, 0
    %p41 = por %p39, %p40
    %p42 = scmp.ne.s32.totalorder %s28, %s29
    %p43 = scmp.eq.s32.totalorder %s21, 1
    %p44 = por %p42, %p43
    %p46 = scmp.ne.s32.totalorder %s29, %s45
    %p47 = scmp.eq.s32.totalorder %s21, 0
    %p48 = por %p46, %p47
    %s50 = sadd.s32 %s49, 1
    %p53 = scmp.eq.s32.totalorder %s15, 1
    %p54 = scmp.ne.s32.totalorder %s49, %s51
    %p55 = scmp.eq.s32.totalorder %s15, 0
    %p56 = por %p54, %p55
    %p57 = scmp.ne.s32.totalorder %s49, %s51
    %p58 = scmp.eq.s32.totalorder %s20, 1
    %p59 = por %p57, %p58
    %p60 = scmp.ne.s32.totalorder %s51, %s52
    %p61 = scmp.eq.s32.totalorder %s20, 0
    %p62 = por %p60, %p61
    %p63 = scmp.ne.s32.totalorder %s51, %s52
    %p64 = scmp.eq.s32.totalorder %s21, 1
    %p65 = por %p63, %p64
    %p67 = scmp.ne.s32.totalorder %s52, %s66
    %p68 = scmp.eq.s32.totalorder %s21, 0
    %p69 = por %p67, %p68
    %s71 = sadd.s32 %s70, 1
    %p74 = scmp.eq.s32.totalorder %s15, 1
    %p75 = scmp.ne.s32.totalorder %s70, %s72
    %p76 = scmp.eq.s32.totalorder %s15, 0
    %p77 = por %p75, %p76
    %p78 = scmp.ne.s32.totalorder %s70, %s72
    %p79 = scmp.eq.s32.totalorder %s20, 1
    %p80 = por %p78, %p79
    %p81 = scmp.ne.s32.totalorder %s72, %s73
    %p82 = scmp.eq.s32.totalorder %s20, 0
    %p83 = por %p81, %p82
    %p84 = scmp.ne.s32.totalorder %s72, %s73
    %p85 = scmp.eq.s32.totalorder %s21, 1
    %p86 = por %p84, %p85
    %p88 = scmp.ne.s32.totalorder %s73, %s87
    %p89 = scmp.eq.s32.totalorder %s21, 0
    %p90 = por %p88, %p89
    %s92 = sadd.s32 %s91, 1
    %p95 = scmp.eq.s32.totalorder %s15, 1
    %p96 = scmp.ne.s32.totalorder %s91, %s93
    %p97 = scmp.eq.s32.totalorder %s15, 0
    %p98 = por %p96, %p97
    %p99 = scmp.ne.s32.totalorder %s91, %s93
    %p100 = scmp.eq.s32.totalorder %s20, 1
    %p101 = por %p99, %p100
    %p102 = scmp.ne.s32.totalorder %s93, %s94
    %p103 = scmp.eq.s32.totalorder %s20, 0
    %p104 = por %p102, %p103
    %p105 = scmp.ne.s32.totalorder %s93, %s94
    %p106 = scmp.eq.s32.totalorder %s21, 1
    %p107 = por %p105, %p106
    %p109 = scmp.ne.s32.totalorder %s94, %s108
    %p110 = scmp.eq.s32.totalorder %s21, 0
    %p111 = por %p109, %p110
    %s113 = sadd.s32 %s112, 1
    %p116 = scmp.eq.s32.totalorder %s15, 1
    %p117 = scmp.ne.s32.totalorder %s112, %s114
    %p118 = scmp.eq.s32.totalorder %s15, 0
    %p119 = por %p117, %p118
    %p120 = scmp.ne.s32.totalorder %s112, %s114
    %p121 = scmp.eq.s32.totalorder %s20, 1
    %p122 = por %p120, %p121
    %p123 = scmp.ne.s32.totalorder %s114, %s115
    %p124 = scmp.eq.s32.totalorder %s20, 0
    %p125 = por %p123, %p124
    %p126 = scmp.ne.s32.totalorder %s114, %s115
    %p127 = scmp.eq.s32.totalorder %s21, 1
    %p128 = por %p126, %p127
    %p130 = scmp.ne.s32.totalorder %s115, %s129
    %p131 = scmp.eq.s32.totalorder %s21, 0
    %p132 = por %p130, %p131
    %s134 = sadd.s32 %s133, 1
    %p137 = scmp.eq.s32.totalorder %s15, 1
    %p138 = scmp.ne.s32.totalorder %s133, %s135
    %p139 = scmp.eq.s32.totalorder %s15, 0
    %p140 = por %p138, %p139
    %p141 = scmp.ne.s32.totalorder %s133, %s135
    %p142 = scmp.eq.s32.totalorder %s20, 1
    %p143 = por %p141, %p142
    %p144 = scmp.ne.s32.totalorder %s135, %s136
    %p145 = scmp.eq.s32.totalorder %s20, 0
    %p146 = por %p144, %p145
    %p147 = scmp.ne.s32.totalorder %s135, %s136
    %p148 = scmp.eq.s32.totalorder %s21, 1
    %p149 = por %p147, %p148
    %p151 = scmp.ne.s32.totalorder %s136, %s150
    %p152 = scmp.eq.s32.totalorder %s21, 0
    %p153 = por %p151, %p152
    %s155 = sadd.s32 %s154, 1
    %p158 = scmp.eq.s32.totalorder %s15, 1
    %p159 = scmp.ne.s32.totalorder %s154, %s156
    %p160 = scmp.eq.s32.totalorder %s15, 0
    %p161 = por %p159, %p160
    %p162 = scmp.ne.s32.totalorder %s154, %s156
    %p163 = scmp.eq.s32.totalorder %s20, 1
    %p164 = por %p162, %p163
    %p165 = scmp.ne.s32.totalorder %s156, %s157
    %p166 = scmp.eq.s32.totalorder %s20, 0
    %p167 = por %p165, %p166
    %p168 = scmp.ne.s32.totalorder %s156, %s157
    %p169 = scmp.eq.s32.totalorder %s21, 1
    %p170 = por %p168, %p169
    %p172 = scmp.ne.s32.totalorder %s157, %s171
    %p173 = scmp.eq.s32.totalorder %s21, 0
    %p174 = por %p172, %p173
    %s176 = sadd.s32 %s175, 1
    %p179 = scmp.eq.s32.totalorder %s15, 1
    %p180 = scmp.ne.s32.totalorder %s175, %s177
    %p181 = scmp.eq.s32.totalorder %s15, 0
    %p182 = por %p180, %p181
    %p183 = scmp.ne.s32.totalorder %s175, %s177
    %p184 = scmp.eq.s32.totalorder %s20, 1
    %p185 = por %p183, %p184
    %p186 = scmp.ne.s32.totalorder %s177, %s178
    %p187 = scmp.eq.s32.totalorder %s20, 0
    %p188 = por %p186, %p187
    %p189 = scmp.ne.s32.totalorder %s177, %s178
    %p190 = scmp.eq.s32.totalorder %s21, 1
    %p191 = por %p189, %p190
    %p193 = scmp.ne.s32.totalorder %s178, %s192
    %p194 = scmp.eq.s32.totalorder %s21, 0
    %p195 = por %p193, %p194
    %s197 = sadd.s32 %s196, 1
    %p200 = scmp.eq.s32.totalorder %s15, 1
    %p201 = scmp.ne.s32.totalorder %s196, %s198
    %p202 = scmp.eq.s32.totalorder %s15, 0
    %p203 = por %p201, %p202
    %p204 = scmp.ne.s32.totalorder %s196, %s198
    %p205 = scmp.eq.s32.totalorder %s20, 1
    %p206 = por %p204, %p205
    %p207 = scmp.ne.s32.totalorder %s198, %s199
    %p208 = scmp.eq.s32.totalorder %s20, 0
    %p209 = por %p207, %p208
    %p210 = scmp.ne.s32.totalorder %s198, %s199
    %p211 = scmp.eq.s32.totalorder %s21, 1
    %p212 = por %p210, %p211
    %p214 = scmp.ne.s32.totalorder %s199, %s213
    %p215 = scmp.eq.s32.totalorder %s21, 0
    %p216 = por %p214, %p215
    %s217 = ssub.s32 %s15, %s22
    %p218 = scmp.eq.s32.totalorder %s217, 0
    %s220 = sadd.s32 %s219, 1
    %s221 = scalar_select %p218, %s219, %s220
    %p224 = pneg %p218
    %p225 = scmp.eq.s32.totalorder %s15, 1
    %p226 = por %p224, %p225
    %p227 = scmp.ne.s32.totalorder %s219, %s222
    %p228 = scmp.eq.s32.totalorder %s15, 0
    %p229 = por %p227, %p228
    %p230 = scmp.ne.s32.totalorder %s219, %s222
    %p231 = scmp.eq.s32.totalorder %s20, 1
    %p232 = por %p230, %p231
    %p233 = scmp.ne.s32.totalorder %s222, %s223
    %p234 = scmp.eq.s32.totalorder %s20, 0
    %p235 = por %p233, %p234
    %p236 = scmp.ne.s32.totalorder %s222, %s223
    %p237 = scmp.eq.s32.totalorder %s21, 1
    %p238 = por %p236, %p237
    %p240 = scmp.ne.s32.totalorder %s223, %s239
    %p241 = scmp.eq.s32.totalorder %s21, 0
    %p242 = por %p240, %p241
    %p243 = scmp.le.s32.totalorder 1, %s15
    %p244 = scmp.lt.s32.totalorder %s15, 3
    %p245 = pnand %p243, %p244
    %p246 = pneg %p245
    // Predicated region
    $region9: #{separator_forward.8} parent=5 // pred_check
      _
    $region10: #{separator_forward.8} parent=5 // pred_check_branch
      %248 = sbr.rel (%p245) target = $region12
    $region11: #{separator_forward.8} parent=5 // pred_region
      %s249 = ssub.s32 %s15, 1
      // Predicated region
      $region13: #{separator_forward.8} parent=11 // pred_check
        %p250 = pneg %p62
      $region14: #{separator_forward.8} parent=11 // pred_check_branch
        %252 = sbr.rel (%p250) target = $region16
      $region15: #{separator_forward.8} parent=11 // pred_region
        _
      $region16: #{separator_forward.8} parent=11 // pred_fallthru
        _
      // Predicated region
      $region17: #{separator_forward.8} parent=11 // pred_check
        %p253 = pneg %p83
      $region18: #{separator_forward.8} parent=11 // pred_check_branch
        %255 = sbr.rel (%p253) target = $region20
      $region19: #{separator_forward.8} parent=11 // pred_region
        _
      $region20: #{separator_forward.8} parent=11 // pred_fallthru
        _
      // Predicated region
      $region21: #{separator_forward.8} parent=11 // pred_check
        %p256 = pneg %p104
      $region22: #{separator_forward.8} parent=11 // pred_check_branch
        %258 = sbr.rel (%p256) target = $region24
      $region23: #{separator_forward.8} parent=11 // pred_region
        _
      $region24: #{separator_forward.8} parent=11 // pred_fallthru
        _
      // Predicated region
      $region25: #{separator_forward.8} parent=11 // pred_check
        %p259 = pneg %p125
      $region26: #{separator_forward.8} parent=11 // pred_check_branch
        %261 = sbr.rel (%p259) target = $region28
      $region27: #{separator_forward.8} parent=11 // pred_region
        _
      $region28: #{separator_forward.8} parent=11 // pred_fallthru
        _
      // Predicated region
      $region29: #{separator_forward.8} parent=11 // pred_check
        %p262 = pneg %p146
      $region30: #{separator_forward.8} parent=11 // pred_check_branch
        %264 = sbr.rel (%p262) target = $region32
      $region31: #{separator_forward.8} parent=11 // pred_region
        _
      $region32: #{separator_forward.8} parent=11 // pred_fallthru
        _
      // Predicated region
      $region33: #{separator_forward.8} parent=11 // pred_check
        %p265 = pneg %p167
      $region34: #{separator_forward.8} parent=11 // pred_check_branch
        %267 = sbr.rel (%p265) target = $region36
      $region35: #{separator_forward.8} parent=11 // pred_region
        _
      $region36: #{separator_forward.8} parent=11 // pred_fallthru
        _
      // Predicated region
      $region37: #{separator_forward.8} parent=11 // pred_check
        %p268 = pneg %p188
      $region38: #{separator_forward.8} parent=11 // pred_check_branch
        %270 = sbr.rel (%p268) target = $region40
      $region39: #{separator_forward.8} parent=11 // pred_region
        _
      $region40: #{separator_forward.8} parent=11 // pred_fallthru
        _
      // Predicated region
      $region41: #{separator_forward.8} parent=11 // pred_check
        %p271 = pneg %p209
      $region42: #{separator_forward.8} parent=11 // pred_check_branch
        %273 = sbr.rel (%p271) target = $region44
      $region43: #{separator_forward.8} parent=11 // pred_region
        _
      $region44: #{separator_forward.8} parent=11 // pred_fallthru
        _
    $region12: #{separator_forward.8} parent=5 // pred_fallthru
      _
    %p274 = scmp.lt.s32.totalorder %s15, 2
    // Predicated region
    $region45: #{separator_forward.8} parent=5 // pred_check
      %p275 = pneg %p274
    $region46: #{separator_forward.8} parent=5 // pred_check_branch
      %277 = sbr.rel (%p275) target = $region48
    $region47: #{separator_forward.8} parent=5 // pred_region
      // Predicated region
      $region49: #{separator_forward.8} parent=47 // pred_check
        %p278 = pneg %p35
      $region50: #{separator_forward.8} parent=47 // pred_check_branch
        %280 = sbr.rel (%p278) target = $region52
      $region51: #{separator_forward.8} parent=47 // pred_region
        %p281 = scmp.lt.s32.totalorder %s15, 1
        %s282 = scalar_select %p281, %s15, 1
        %s283 = smul.addr %s282, 4
        %s284 = smul.addr %s283, 8
        %s285 = scalar_lea.vmem %s0, %s284
      $region52: #{separator_forward.8} parent=47 // pred_fallthru
        _
    $region48: #{separator_forward.8} parent=5 // pred_fallthru
      _
    %p286 = scmp.le.s32.totalorder 1, %s15
    %p287 = scmp.lt.s32.totalorder %s15, 3
    %p288 = pnand %p286, %p287
    %p289 = pneg %p288
    // Predicated region
    $region53: #{separator_forward.8} parent=5 // pred_check
      _
    $region54: #{separator_forward.8} parent=5 // pred_check_branch
      %291 = sbr.rel (%p288) target = $region56
    $region55: #{separator_forward.8} parent=5 // pred_region
      %s292 = ssub.s32 %s15, 1
      %p293 = scmp.lt.s32.totalorder %s20, 1
      %s294 = scalar_select %p293, %s20, 1
      %s295 = smul.addr %s294, 4
      %s296 = smul.addr %s295, 8
      %s297 = scalar_lea.vmem %s0, %s296
      %p298 = pneg %p41
      %p299 = pneg %p38
      %p300 = pneg %p62
      %p301 = pneg %p59
      %p302 = pneg %p83
      %p303 = pneg %p80
      %p304 = pneg %p104
      %p305 = pneg %p101
      %p306 = pneg %p125
      %p307 = pneg %p122
      %p308 = pneg %p146
      %p309 = pneg %p143
      %p310 = pneg %p167
      %p311 = pneg %p164
      %p312 = pneg %p188
      %p313 = pneg %p185
      %p314 = pneg %p209
      %p315 = pneg %p206
      %p316 = pneg %p235
      %p317 = pneg %p232
      %p318 = scmp.lt.s32.totalorder %s20, 1
      %s319 = scalar_select %p318, %s20, 1
      %s320 = smul.addr %s319, 8
      %s321 = smul.addr %s320, 8
      %s322 = scalar_lea.vmem %s9, %s321
      %p323 = scmp.lt.s32.totalorder %s20, 1
      %s324 = scalar_select %p323, %s20, 1
      %s325 = smul.addr %s324, 4
      %s326 = smul.addr %s325, 8
      %s327 = scalar_lea.vmem %s0, %s326
      %p328 = scmp.lt.s32.totalorder %s20, 1
      %s329 = scalar_select %p328, %s20, 1
      %s330 = smul.addr %s329, 8
      %s331 = smul.addr %s330, 8
      %s332 = scalar_lea.vmem %s9, %s331
      %v333 = vld [vmem:[%s327] sm:$0xff]
      %v334 = vld [vmem:[%s327 + $0x8] sm:$0xff]
      %v335 = vld [vmem:[%s327 + $0x10] sm:$0xff]
      %v336 = vld [vmem:[%s327 + $0x18] sm:$0xff]
      %v337 = vld [vmem:[%s1] sm:$0xff]
      %v338 = vld [vmem:[%s2] sm:$0x1]
      %v340 = vlaneseq
      %v341 = vshrl.u32 %v340, 7
      %v342 = vsub.s32 0, %v341
      %v343 = vrot.slane %v338, %v342
      %vm345 = vcmask 64512
      %v347 = vsel %vm345, %v333, 0
      %v350 = vsel %vm345, %v334, 0
      %v353 = vsel %vm345, %v335, 0
      %v356 = vsel %vm345, %v336, 0
      %358 = vmatprep.subr.mxu0 0.0
      %359 = vmatpush1.msra.mxu0 %v337
      %360 = vmatprep.subr.mxu0 0.0
      %361 = vmatpush1.msra.mxu0 0.0
      %362 = vmatprep.subr.mxu0 0.0
      %363 = vmatpush1.msra.mxu0 0.0
      %364 = vmatprep.subr.mxu0 0.0
      %365 = vmatpush1.msra.mxu0 0.0
      %366 = vmatprep.subr.mxu0 0.0
      %367 = vmatpush1.msra.mxu0 0.0
      %368 = vmatprep.subr.mxu0 0.0
      %369 = vmatpush1.msra.mxu0 0.0
      %370 = vmatprep.subr.mxu0 0.0
      %371 = vmatpush1.msra.mxu0 0.0
      %372 = vmatprep.subr.mxu0 0.0
      %373 = vmatpush1.msra.mxu0 0.0
      %374 = vmatprep.subr.mxu0 0.0
      %375 = vmatpush1.msra.mxu0 0.0
      %376 = vmatprep.subr.mxu0 0.0
      %377 = vmatpush1.msra.mxu0 0.0
      %378 = vmatprep.subr.mxu0 0.0
      %379 = vmatpush1.msra.mxu0 0.0
      %380 = vmatprep.subr.mxu0 0.0
      %381 = vmatpush1.msra.mxu0 0.0
      %382 = vmatprep.subr.mxu0 0.0
      %383 = vmatpush1.msra.mxu0 0.0
      %384 = vmatprep.subr.mxu0 0.0
      %385 = vmatpush1.msra.mxu0 0.0
      %386 = vmatprep.subr.mxu0 0.0
      %387 = vmatpush1.msra.mxu0 0.0
      %388 = vmatprep.subr.mxu0 0.0
      %389 = vmatpush1.msra.mxu0 0.0
      %390 = vmatprep.subr.mxu0 0.0
      %391 = vmatpush1.msra.mxu0 0.0
      %392 = vmatprep.subr.mxu0 0.0
      %393 = vmatpush1.msra.mxu0 0.0
      %394 = vmatprep.subr.mxu0 0.0
      %395 = vmatpush1.msra.mxu0 0.0
      %396 = vmatprep.subr.mxu0 0.0
      %397 = vmatpush1.msra.mxu0 0.0
      %398 = vmatprep.subr.mxu0 0.0
      %399 = vmatpush1.msra.mxu0 0.0
      %400 = vmatprep.subr.mxu0 0.0
      %401 = vmatpush1.msra.mxu0 0.0
      %402 = vmatprep.subr.mxu0 0.0
      %403 = vmatpush1.msra.mxu0 0.0
      %404 = vmatprep.subr.mxu0 0.0
      %405 = vmatpush1.msra.mxu0 0.0
      %406 = vmatprep.subr.mxu0 0.0
      %407 = vmatpush1.msra.mxu0 0.0
      %408 = vmatprep.subr.mxu0 0.0
      %409 = vmatpush1.msra.mxu0 0.0
      %410 = vmatprep.subr.mxu0 0.0
      %411 = vmatpush1.msra.mxu0 0.0
      %412 = vmatprep.subr.mxu0 0.0
      %413 = vmatpush1.msra.mxu0 0.0
      %414 = vmatprep.subr.mxu0 0.0
      %415 = vmatpush1.msra.mxu0 0.0
      %416 = vmatprep.subr.mxu0 0.0
      %417 = vmatpush1.msra.mxu0 0.0
      %418 = vmatprep.subr.mxu0 0.0
      %419 = vmatpush1.msra.mxu0 0.0
      %420 = vmatprep.subr.mxu0 0.0
      %421 = vmatpush1.msra.mxu0 0.0
      %422 = vmatprep.mubr.f32.mxu0 0.0
      %423 = vmatmul.mubr.f32.gmra.mrb[0].mxu0 %v347
      %v424 = vpop.f32.mrb[0].mxu0
      %v425 = vadd.f32 %v343, %v424
      %v426 = vpop.f32.mrb[0].mxu0
      %427 = vmatprep.mubr.f32.mxu0 0.0
      %428 = vmatmul.mubr.f32.gmra.mrb[0].mxu0 %v350
      %v429 = vpop.f32.mrb[0].mxu0
      %v430 = vadd.f32 %v343, %v429
      %v431 = vpop.f32.mrb[0].mxu0
      %432 = vmatprep.mubr.f32.mxu0 0.0
      %433 = vmatmul.mubr.f32.gmra.mrb[0].mxu0 %v353
      %v434 = vpop.f32.mrb[0].mxu0
      %v435 = vadd.f32 %v343, %v434
      %v436 = vpop.f32.mrb[0].mxu0
      %437 = vmatprep.mubr.f32.mxu0 0.0
      %438 = vmatmul.mubr.f32.gmra.mrb[0].mxu0 %v356
      %v439 = vpop.f32.mrb[0].mxu0
      %v440 = vadd.f32 %v343, %v439
      %v441 = vpop.f32.mrb[0].mxu0
      %442 = vdwg.mxu0
      %v443 = vld [vmem:[%s3] sm:$0xff]
      %v444 = vld [vmem:[%s4] sm:$0x1]
      %v446 = vlaneseq
      %v447 = vshrl.u32 %v446, 7
      %v448 = vsub.s32 0, %v447
      %v449 = vrot.slane %v444, %v448
      %451 = vmatprep.subr.mxu0 0.0
      %452 = vmatpush1.msra.mxu0 %v443
      %453 = vmatprep.subr.mxu0 0.0
      %454 = vmatpush1.msra.mxu0 0.0
      %455 = vmatprep.subr.mxu0 0.0
      %456 = vmatpush1.msra.mxu0 0.0
      %457 = vmatprep.subr.mxu0 0.0
      %458 = vmatpush1.msra.mxu0 0.0
      %459 = vmatprep.subr.mxu0 0.0
      %460 = vmatpush1.msra.mxu0 0.0
      %461 = vmatprep.subr.mxu0 0.0
      %462 = vmatpush1.msra.mxu0 0.0
      %463 = vmatprep.subr.mxu0 0.0
      %464 = vmatpush1.msra.mxu0 0.0
      %465 = vmatprep.subr.mxu0 0.0
      %466 = vmatpush1.msra.mxu0 0.0
      %467 = vmatprep.subr.mxu0 0.0
      %468 = vmatpush1.msra.mxu0 0.0
      %469 = vmatprep.subr.mxu0 0.0
      %470 = vmatpush1.msra.mxu0 0.0
      %471 = vmatprep.subr.mxu0 0.0
      %472 = vmatpush1.msra.mxu0 0.0
      %473 = vmatprep.subr.mxu0 0.0
      %474 = vmatpush1.msra.mxu0 0.0
      %475 = vmatprep.subr.mxu0 0.0
      %476 = vmatpush1.msra.mxu0 0.0
      %477 = vmatprep.subr.mxu0 0.0
      %478 = vmatpush1.msra.mxu0 0.0
      %479 = vmatprep.subr.mxu0 0.0
      %480 = vmatpush1.msra.mxu0 0.0
      %481 = vmatprep.subr.mxu0 0.0
      %482 = vmatpush1.msra.mxu0 0.0
      %483 = vmatprep.subr.mxu0 0.0
      %484 = vmatpush1.msra.mxu0 0.0
      %485 = vmatprep.subr.mxu0 0.0
      %486 = vmatpush1.msra.mxu0 0.0
      %487 = vmatprep.subr.mxu0 0.0
      %488 = vmatpush1.msra.mxu0 0.0
      %489 = vmatprep.subr.mxu0 0.0
      %490 = vmatpush1.msra.mxu0 0.0
      %491 = vmatprep.subr.mxu0 0.0
      %492 = vmatpush1.msra.mxu0 0.0
      %493 = vmatprep.subr.mxu0 0.0
      %494 = vmatpush1.msra.mxu0 0.0
      %495 = vmatprep.subr.mxu0 0.0
      %496 = vmatpush1.msra.mxu0 0.0
      %497 = vmatprep.subr.mxu0 0.0
      %498 = vmatpush1.msra.mxu0 0.0
      %499 = vmatprep.subr.mxu0 0.0
      %500 = vmatpush1.msra.mxu0 0.0
      %501 = vmatprep.subr.mxu0 0.0
      %502 = vmatpush1.msra.mxu0 0.0
      %503 = vmatprep.subr.mxu0 0.0
      %504 = vmatpush1.msra.mxu0 0.0
      %505 = vmatprep.subr.mxu0 0.0
      %506 = vmatpush1.msra.mxu0 0.0
      %507 = vmatprep.subr.mxu0 0.0
      %508 = vmatpush1.msra.mxu0 0.0
      %509 = vmatprep.subr.mxu0 0.0
      %510 = vmatpush1.msra.mxu0 0.0
      %511 = vmatprep.subr.mxu0 0.0
      %512 = vmatpush1.msra.mxu0 0.0
      %513 = vmatprep.subr.mxu0 0.0
      %514 = vmatpush1.msra.mxu0 0.0
      %515 = vmatprep.mubr.f32.mxu0 0.0
      %516 = vmatmul.mubr.f32.gmra.mrb[0].mxu0 %v347
      %v517 = vpop.f32.mrb[0].mxu0
      %v518 = vadd.f32 %v449, %v517
      %v519 = vpop.f32.mrb[0].mxu0
      %520 = vmatprep.mubr.f32.mxu0 0.0
      %521 = vmatmul.mubr.f32.gmra.mrb[0].mxu0 %v350
      %v522 = vpop.f32.mrb[0].mxu0
      %v523 = vadd.f32 %v449, %v522
      %v524 = vpop.f32.mrb[0].mxu0
      %525 = vmatprep.mubr.f32.mxu0 0.0
      %526 = vmatmul.mubr.f32.gmra.mrb[0].mxu0 %v353
      %v527 = vpop.f32.mrb[0].mxu0
      %v528 = vadd.f32 %v449, %v527
      %v529 = vpop.f32.mrb[0].mxu0
      %530 = vmatprep.mubr.f32.mxu0 0.0
      %531 = vmatmul.mubr.f32.gmra.mrb[0].mxu0 %v356
      %v532 = vpop.f32.mrb[0].mxu0
      %v533 = vadd.f32 %v449, %v532
      %v534 = vpop.f32.mrb[0].mxu0
      %535 = vdwg.mxu0
      %v536 = vxor.u32 %v518, 2147483648
      %v537 = vxor.u32 %v523, 2147483648
      %v538 = vxor.u32 %v528, 2147483648
      %v539 = vxor.u32 %v533, 2147483648
      %v540 = vmul.f32 %v536, 1.442695
      %v541 = vpow.pop %v540
      %v542 = vmul.f32 %v537, 1.442695
      %v543 = vpow.pop %v542
      %v544 = vmul.f32 %v538, 1.442695
      %v545 = vpow.pop %v544
      %v546 = vmul.f32 %v539, 1.442695
      %v547 = vpow.pop %v546
      %v548 = vadd.f32 %v541, 1.0
      %v549 = vadd.f32 %v543, 1.0
      %v550 = vadd.f32 %v545, 1.0
      %v551 = vadd.f32 %v547, 1.0
      %v552 = vrcp.pop %v548
      %v553 = vmul.f32 1.0, %v552
      %v554 = vrcp.pop %v549
      %v555 = vmul.f32 1.0, %v554
      %v556 = vrcp.pop %v550
      %v557 = vmul.f32 1.0, %v556
      %v558 = vrcp.pop %v551
      %v559 = vmul.f32 1.0, %v558
      %v560 = vmul.f32 %v425, %v553
      %v561 = vmul.f32 %v430, %v555
      %v562 = vmul.f32 %v435, %v557
      %v563 = vmul.f32 %v440, %v559
      %v564 = vld [vmem:[%s5] sm:$0xff]
      %v565 = vld [vmem:[%s5 + $0x8] sm:$0xff]
      %v566 = vld [vmem:[%s5 + $0x10] sm:$0xff]
      %v567 = vld [vmem:[%s5 + $0x18] sm:$0xff]
      %v568 = vld [vmem:[%s6] sm:$0x1]
      %v570 = vlaneseq
      %v571 = vshrl.u32 %v570, 7
      %v572 = vsub.s32 0, %v571
      %v573 = vrot.slane %v568, %v572
      %vm575 = vcmask 261120
      %v577 = vsel %vm575, %v560, 0
      %v580 = vsel %vm575, %v561, 0
      %v583 = vsel %vm575, %v562, 0
      %v586 = vsel %vm575, %v563, 0
      %588 = vmatprep.subr.mxu0 0.0
      %589 = vmatpush1.msra.mxu0 %v564
      %590 = vmatprep.subr.mxu0 0.0
      %591 = vmatpush1.msra.mxu0 %v565
      %592 = vmatprep.subr.mxu0 0.0
      %593 = vmatpush1.msra.mxu0 %v566
      %594 = vmatprep.subr.mxu0 0.0
      %595 = vmatpush1.msra.mxu0 %v567
      %596 = vmatprep.subr.mxu0 0.0
      %597 = vmatpush1.msra.mxu0 0.0
      %598 = vmatprep.subr.mxu0 0.0
      %599 = vmatpush1.msra.mxu0 0.0
      %600 = vmatprep.subr.mxu0 0.0
      %601 = vmatpush1.msra.mxu0 0.0
      %602 = vmatprep.subr.mxu0 0.0
      %603 = vmatpush1.msra.mxu0 0.0
      %604 = vmatprep.subr.mxu0 0.0
      %605 = vmatpush1.msra.mxu0 0.0
      %606 = vmatprep.subr.mxu0 0.0
      %607 = vmatpush1.msra.mxu0 0.0
      %608 = vmatprep.subr.mxu0 0.0
      %609 = vmatpush1.msra.mxu0 0.0
      %610 = vmatprep.subr.mxu0 0.0
      %611 = vmatpush1.msra.mxu0 0.0
      %612 = vmatprep.subr.mxu0 0.0
      %613 = vmatpush1.msra.mxu0 0.0
      %614 = vmatprep.subr.mxu0 0.0
      %615 = vmatpush1.msra.mxu0 0.0
      %616 = vmatprep.subr.mxu0 0.0
      %617 = vmatpush1.msra.mxu0 0.0
      %618 = vmatprep.subr.mxu0 0.0
      %619 = vmatpush1.msra.mxu0 0.0
      %620 = vmatprep.subr.mxu0 0.0
      %621 = vmatpush1.msra.mxu0 0.0
      %622 = vmatprep.subr.mxu0 0.0
      %623 = vmatpush1.msra.mxu0 0.0
      %624 = vmatprep.subr.mxu0 0.0
      %625 = vmatpush1.msra.mxu0 0.0
      %626 = vmatprep.subr.mxu0 0.0
      %627 = vmatpush1.msra.mxu0 0.0
      %628 = vmatprep.subr.mxu0 0.0
      %629 = vmatpush1.msra.mxu0 0.0
      %630 = vmatprep.subr.mxu0 0.0
      %631 = vmatpush1.msra.mxu0 0.0
      %632 = vmatprep.subr.mxu0 0.0
      %633 = vmatpush1.msra.mxu0 0.0
      %634 = vmatprep.subr.mxu0 0.0
      %635 = vmatpush1.msra.mxu0 0.0
      %636 = vmatprep.subr.mxu0 0.0
      %637 = vmatpush1.msra.mxu0 0.0
      %638 = vmatprep.subr.mxu0 0.0
      %639 = vmatpush1.msra.mxu0 0.0
      %640 = vmatprep.subr.mxu0 0.0
      %641 = vmatpush1.msra.mxu0 0.0
      %642 = vmatprep.subr.mxu0 0.0
      %643 = vmatpush1.msra.mxu0 0.0
      %644 = vmatprep.subr.mxu0 0.0
      %645 = vmatpush1.msra.mxu0 0.0
      %646 = vmatprep.subr.mxu0 0.0
      %647 = vmatpush1.msra.mxu0 0.0
      %648 = vmatprep.subr.mxu0 0.0
      %649 = vmatpush1.msra.mxu0 0.0
      %650 = vmatprep.subr.mxu0 0.0
      %651 = vmatpush1.msra.mxu0 0.0
      %652 = vmatprep.mubr.f32.mxu0 0.0
      %653 = vmatmul.mubr.f32.gmra.mrb[0].mxu0 %v577
      %v654 = vpop.f32.mrb[0].mxu0
      %v655 = vadd.f32 %v573, %v654
      %v656 = vpop.f32.mrb[0].mxu0
      %657 = vmatprep.mubr.f32.mxu0 0.0
      %658 = vmatmul.mubr.f32.gmra.mrb[0].mxu0 %v580
      %v659 = vpop.f32.mrb[0].mxu0
      %v660 = vadd.f32 %v573, %v659
      %v661 = vpop.f32.mrb[0].mxu0
      %662 = vmatprep.mubr.f32.mxu0 0.0
      %663 = vmatmul.mubr.f32.gmra.mrb[0].mxu0 %v583
      %v664 = vpop.f32.mrb[0].mxu0
      %v665 = vadd.f32 %v573, %v664
      %v666 = vpop.f32.mrb[0].mxu0
      %667 = vmatprep.mubr.f32.mxu0 0.0
      %668 = vmatmul.mubr.f32.gmra.mrb[0].mxu0 %v586
      %v669 = vpop.f32.mrb[0].mxu0
      %v670 = vadd.f32 %v573, %v669
      %v671 = vpop.f32.mrb[0].mxu0
      %672 = vdwg.mxu0
      %v673 = vsel %vm345, %v655, 0.0
      %v674 = vsel %vm345, %v660, 0.0
      %v675 = vadd.f32 %v673, %v674
      %v676 = vsel %vm345, %v665, 0.0
      %v677 = vadd.f32 %v675, %v676
      %v678 = vsel %vm345, %v670, 0.0
      %v679 = vadd.f32 %v677, %v678
      %680 = vadd.xlane.f32.xlu0 %v679
      %v681 = vpop.xlane.xlu0 %680
      %v682 = vrot.slane %v681, 4
      %v683 = vadd.f32 %v681, %v682
      %v684 = vrot.slane %v683, 2
      %v685 = vadd.f32 %v683, %v684
      %v686 = vrot.slane %v685, 1
      %v687 = vadd.f32 %v685, %v686
      %s688 = vtos %v687
      %v689 = vrcp.pop 256.0
      %s690 = vtos %v689
      %s691 = smul.f32 %s688, %s690
      %v692 = vstv %s691
      %v693 = vsub.f32 %v655, %v692
      %v694 = vsub.f32 %v660, %v692
      %v695 = vsub.f32 %v665, %v692
      %v696 = vsub.f32 %v670, %v692
      %v697 = vmul.f32 %v693, %v693
      %v698 = vmul.f32 %v694, %v694
      %v699 = vmul.f32 %v695, %v695
      %v700 = vmul.f32 %v696, %v696
      %v701 = vsel %vm345, %v697, 0.0
      %v702 = vsel %vm345, %v698, 0.0
      %v703 = vadd.f32 %v701, %v702
      %v704 = vsel %vm345, %v699, 0.0
      %v705 = vadd.f32 %v703, %v704
      %v706 = vsel %vm345, %v700, 0.0
      %v707 = vadd.f32 %v705, %v706
      %708 = vadd.xlane.f32.xlu0 %v707
      %v709 = vpop.xlane.xlu0 %708
      %v710 = vrot.slane %v709, 4
      %v711 = vadd.f32 %v709, %v710
      %v712 = vrot.slane %v711, 2
      %v713 = vadd.f32 %v711, %v712
      %v714 = vrot.slane %v713, 1
      %v715 = vadd.f32 %v713, %v714
      %s716 = vtos %v715
      %v717 = vrcp.pop 256.0
      %s718 = vtos %v717
      %s719 = smul.f32 %s716, %s718
      %s720 = sadd.f32 %s719, 1e-08
      %v721 = vstv %s720
      %v722 = vrsqrt.pop %v721
      %s723 = vtos %v722
      %v724 = vstv %s723
      %v725 = vmul.f32 %v693, %v724
      %v726 = vmul.f32 %v694, %v724
      %v727 = vmul.f32 %v695, %v724
      %v728 = vmul.f32 %v696, %v724
      %v729 = vld [vmem:[%s7] sm:$0x1]
      %v731 = vlaneseq
      %v732 = vshrl.u32 %v731, 7
      %v733 = vsub.s32 0, %v732
      %v734 = vrot.slane %v729, %v733
      %v736 = vmul.f32 %v725, %v734
      %v737 = vmul.f32 %v726, %v734
      %v738 = vmul.f32 %v727, %v734
      %v739 = vmul.f32 %v728, %v734
      %v740 = vld [vmem:[%s8] sm:$0x1]
      %v742 = vlaneseq
      %v743 = vshrl.u32 %v742, 7
      %v744 = vsub.s32 0, %v743
      %v745 = vrot.slane %v740, %v744
      %v747 = vadd.f32 %v736, %v745
      %v748 = vadd.f32 %v737, %v745
      %v749 = vadd.f32 %v738, %v745
      %v750 = vadd.f32 %v739, %v745
      %751 = vst.msk [vmem:[%s332] sm:$0xff] %vm345, %v747
      %752 = vst.msk [vmem:[%s332 + $0x8] sm:$0xff] %vm345, %v748
      %753 = vst.msk [vmem:[%s332 + $0x10] sm:$0xff] %vm345, %v749
      %754 = vst.msk [vmem:[%s332 + $0x18] sm:$0xff] %vm345, %v750
      %759 = vrot.lane.b32.xlu0 %v655, 120
      %v760 = vpop.permute.xlu0 %759
      %761 = vrot.lane.b32.xlu0 %v660, 120
      %v762 = vpop.permute.xlu0 %761
      %763 = vrot.lane.b32.xlu0 %v665, 120
      %v764 = vpop.permute.xlu0 %763
      %765 = vrot.lane.b32.xlu0 %v670, 120
      %v766 = vpop.permute.xlu0 %765
      %v771 = vsel %vm345, %v760, 0.0
      %v772 = vsel %vm345, %v762, 0.0
      %v773 = vadd.f32 %v771, %v772
      %v774 = vsel %vm345, %v764, 0.0
      %v775 = vadd.f32 %v773, %v774
      %v776 = vsel %vm345, %v766, 0.0
      %v777 = vadd.f32 %v775, %v776
      %778 = vadd.xlane.f32.xlu0 %v777
      %v779 = vpop.xlane.xlu0 %778
      %v780 = vrot.slane %v779, 4
      %v781 = vadd.f32 %v779, %v780
      %v782 = vrot.slane %v781, 2
      %v783 = vadd.f32 %v781, %v782
      %v784 = vrot.slane %v783, 1
      %v785 = vadd.f32 %v783, %v784
      %s786 = vtos %v785
      %v787 = vrcp.pop 256.0
      %s788 = vtos %v787
      %s789 = smul.f32 %s786, %s788
      %v790 = vstv %s789
      %v791 = vsub.f32 %v655, %v790
      %v792 = vsub.f32 %v660, %v790
      %v793 = vsub.f32 %v665, %v790
      %v794 = vsub.f32 %v670, %v790
      %v795 = vmul.f32 %v791, %v791
      %v796 = vmul.f32 %v792, %v792
      %v797 = vmul.f32 %v793, %v793
      %v798 = vmul.f32 %v794, %v794
      %803 = vrot.lane.b32.xlu0 %v795, 120
      %v804 = vpop.permute.xlu0 %803
      %805 = vrot.lane.b32.xlu0 %v796, 120
      %v806 = vpop.permute.xlu0 %805
      %807 = vrot.lane.b32.xlu0 %v797, 120
      %v808 = vpop.permute.xlu0 %807
      %809 = vrot.lane.b32.xlu0 %v798, 120
      %v810 = vpop.permute.xlu0 %809
      %v815 = vsel %vm345, %v804, 0.0
      %v816 = vsel %vm345, %v806, 0.0
      %v817 = vadd.f32 %v815, %v816
      %v818 = vsel %vm345, %v808, 0.0
      %v819 = vadd.f32 %v817, %v818
      %v820 = vsel %vm345, %v810, 0.0
      %v821 = vadd.f32 %v819, %v820
      %822 = vadd.xlane.f32.xlu0 %v821
      %v823 = vpop.xlane.xlu0 %822
      %v824 = vrot.slane %v823, 4
      %v825 = vadd.f32 %v823, %v824
      %v826 = vrot.slane %v825, 2
      %v827 = vadd.f32 %v825, %v826
      %v828 = vrot.slane %v827, 1
      %v829 = vadd.f32 %v827, %v828
      %s830 = vtos %v829
      %v831 = vrcp.pop 256.0
      %s832 = vtos %v831
      %s833 = smul.f32 %s830, %s832
      %s834 = sadd.f32 %s833, 1e-08
      %v835 = vstv %s834
      %v836 = vrsqrt.pop %v835
      %s837 = vtos %v836
      %v838 = vstv %s837
      %v839 = vmul.f32 %v791, %v838
      %v840 = vmul.f32 %v792, %v838
      %v841 = vmul.f32 %v793, %v838
      %v842 = vmul.f32 %v794, %v838
      %v843 = vld [vmem:[%s7] sm:$0x1]
      %v845 = vlaneseq
      %v846 = vshrl.u32 %v845, 7
      %v847 = vsub.s32 0, %v846
      %v848 = vrot.slane %v843, %v847
      %849 = vrot.lane.b32.xlu0 %v848, 8
      %v850 = vpop.permute.xlu0 %849
      %v852 = vmul.f32 %v839, %v850
      %v853 = vmul.f32 %v840, %v850
      %v854 = vmul.f32 %v841, %v850
      %v855 = vmul.f32 %v842, %v850
      %v856 = vld [vmem:[%s8] sm:$0x1]
      %v858 = vlaneseq
      %v859 = vshrl.u32 %v858, 7
      %v860 = vsub.s32 0, %v859
      %v861 = vrot.slane %v856, %v860
      %862 = vrot.lane.b32.xlu0 %v861, 8
      %v863 = vpop.permute.xlu0 %862
      %v865 = vadd.f32 %v852, %v863
      %v866 = vadd.f32 %v853, %v863
      %v867 = vadd.f32 %v854, %v863
      %v868 = vadd.f32 %v855, %v863
      %873 = vrot.lane.b32.xlu0 %v865, 120
      %v874 = vpop.permute.xlu0 %873
      %875 = vrot.lane.b32.xlu0 %v866, 120
      %v876 = vpop.permute.xlu0 %875
      %877 = vrot.lane.b32.xlu0 %v867, 120
      %v878 = vpop.permute.xlu0 %877
      %879 = vrot.lane.b32.xlu0 %v868, 120
      %v880 = vpop.permute.xlu0 %879
      %s885 = scalar_lea.vmem %s332, 32
      %886 = vst.msk [vmem:[%s885] sm:$0xff] %vm345, %v874
      %887 = vst.msk [vmem:[%s885 + $0x8] sm:$0xff] %vm345, %v876
      %888 = vst.msk [vmem:[%s885 + $0x10] sm:$0xff] %vm345, %v878
      %889 = vst.msk [vmem:[%s885 + $0x18] sm:$0xff] %vm345, %v880
      %p890 = scmp.lt.s32.totalorder %s20, 1
      %s891 = scalar_select %p890, %s20, 1
      %s892 = smul.addr %s891, 8
      %s893 = smul.addr %s892, 8
      %s894 = scalar_lea.vmem %s9, %s893
      // Predicated region
      $region57: #{separator_forward.8} parent=55 // pred_check
        %p895 = pneg %p232
      $region58: #{separator_forward.8} parent=55 // pred_check_branch
        %897 = sbr.rel (%p895) target = $region60
      $region59: #{separator_forward.8} parent=55 // pred_region
        _
      $region60: #{separator_forward.8} parent=55 // pred_fallthru
        _
    $region56: #{separator_forward.8} parent=5 // pred_fallthru
      _
    %p898 = scmp.le.s32.totalorder 2, %s15
    // Predicated region
    $region61: #{separator_forward.8} parent=5 // pred_check
      %p899 = pneg %p898
    $region62: #{separator_forward.8} parent=5 // pred_check_branch
      %901 = sbr.rel (%p899) target = $region64
    $region63: #{separator_forward.8} parent=5 // pred_region
      %s902 = ssub.s32 %s15, 2
      // Predicated region
      $region65: #{separator_forward.8} parent=63 // pred_check
        %p903 = pneg %p238
      $region66: #{separator_forward.8} parent=63 // pred_check_branch
        %905 = sbr.rel (%p903) target = $region68
      $region67: #{separator_forward.8} parent=63 // pred_region
        %p906 = scmp.lt.s32.totalorder %s21, 1
        %s907 = scalar_select %p906, %s21, 1
        %s908 = smul.addr %s907, 8
        %s909 = smul.addr %s908, 8
        %s910 = scalar_lea.vmem %s9, %s909
      $region68: #{separator_forward.8} parent=63 // pred_fallthru
        _
    $region64: #{separator_forward.8} parent=5 // pred_fallthru
      _
  $region6: #{separator_forward.8} parent=0 // loop_footer
    %s19 = sadd.s32 1, %s15
  $region7: #{separator_forward.8} parent=0 // loop_footer_branch
    %14 = sbr.rel target = $region3
  $region8: #{separator_forward.8} parent=0 // loop_exit
    _

// kernel: separator_forward.9
$region0: #{separator_forward.9}
  #allocation0 [shape = 'u32[]', space=smem, size = 0x4, offset = 0x4, fixed_abs, tag = 'smem constant byte address 0x4 - core index']
  #allocation1 [shape = 'u32[144,128]{1,0:T(1,128)}', space=vmem, size = 0x12000, scoped, tag = 'internal scratch']
  %s0 = inlined_call_operand.vmem [shape: f32[2,10,8], index: 0, kind: input, shape index: {}]
  %s1 = inlined_call_operand.vmem [shape: f32[2,10,8], index: 1, kind: input, shape index: {}]
  %s2 = inlined_call_operand.vmem [shape: f32[5,8], index: 2, kind: input, shape index: {}]
  %s3 = inlined_call_operand.vmem [shape: f32[1,8], index: 3, kind: input, shape index: {}]
  %s4 = inlined_call_operand.vmem [shape: f32[1,8], index: 4, kind: input, shape index: {}]
  %s5 = inlined_call_operand.vmem [shape: f32[2,8,8], index: 5, kind: output, shape index: {}]
  %s6 = sld [smem:[#allocation0]]
  $region53: #{separator_forward.9} parent=0
    _
  %s8 = ssub.s32 1, %s6
  %s9 = scalar_select 0, %s8, %s6
  loop: start=0, step=1, limit=4
  $region2: #{separator_forward.9} parent=0 // loop_pre_header
    _
  $region3: #{separator_forward.9} parent=0 // loop_header
    %s11 = sphi 0, %s15
    %p12 = scmp.ge.s32.totalorder %s11, 4
    %s21 = sphi 0, %s23
    %s24 = sphi 0, %s21
    %s25 = sphi 0, %s24
    %s41 = sphi 0, %s25
    %s47 = sphi 0, %s49
    %s50 = sphi 0, %s47
    %s51 = sphi 0, %s50
    %s67 = sphi 0, %s51
    %s71 = sphi 0, %s71
    %s73 = sphi 0, %s71
    %s74 = sphi 0, %s73
    %s88 = sphi 0, %s74
    %s92 = sphi 0, %s92
    %s94 = sphi 0, %s92
    %s95 = sphi 0, %s94
    %s109 = sphi 0, %s95
    %s113 = sphi 0, %s113
    %s115 = sphi 0, %s113
    %s116 = sphi 0, %s115
    %s130 = sphi 0, %s116
    %s136 = sphi 0, %s138
    %s139 = sphi 0, %s136
    %s140 = sphi 0, %s139
    %s156 = sphi 0, %s140
  $region4: #{separator_forward.9} parent=0 // loop_header_branch
    %14 = sbr.rel (%p12) target = $region8
  $region5: #{separator_forward.9} parent=0 // loop_body
    %s16 = ssub.s32 %s11, 1
    %s17 = ssub.s32 %s11, 2
    %s18 = sadd.s32 %s11, 1
    %s19 = ssub.s32 %s11, %s18
    %p20 = scmp.eq.s32.totalorder %s19, 0
    %s22 = sadd.s32 %s21, 1
    %s23 = scalar_select %p20, %s21, %s22
    %p26 = pneg %p20
    %p27 = scmp.eq.s32.totalorder %s11, 1
    %p28 = por %p26, %p27
    %p29 = scmp.ne.s32.totalorder %s21, %s24
    %p30 = scmp.eq.s32.totalorder %s11, 0
    %p31 = por %p29, %p30
    %p32 = scmp.ne.s32.totalorder %s21, %s24
    %p33 = scmp.eq.s32.totalorder %s16, 1
    %p34 = por %p32, %p33
    %p35 = scmp.ne.s32.totalorder %s24, %s25
    %p36 = scmp.eq.s32.totalorder %s16, 0
    %p37 = por %p35, %p36
    %p38 = scmp.ne.s32.totalorder %s24, %s25
    %p39 = scmp.eq.s32.totalorder %s17, 1
    %p40 = por %p38, %p39
    %p42 = scmp.ne.s32.totalorder %s25, %s41
    %p43 = scmp.eq.s32.totalorder %s17, 0
    %p44 = por %p42, %p43
    %s45 = ssub.s32 %s11, %s18
    %p46 = scmp.eq.s32.totalorder %s45, 0
    %s48 = sadd.s32 %s47, 1
    %s49 = scalar_select %p46, %s47, %s48
    %p52 = pneg %p46
    %p53 = scmp.eq.s32.totalorder %s11, 1
    %p54 = por %p52, %p53
    %p55 = scmp.ne.s32.totalorder %s47, %s50
    %p56 = scmp.eq.s32.totalorder %s11, 0
    %p57 = por %p55, %p56
    %p58 = scmp.ne.s32.totalorder %s47, %s50
    %p59 = scmp.eq.s32.totalorder %s16, 1
    %p60 = por %p58, %p59
    %p61 = scmp.ne.s32.totalorder %s50, %s51
    %p62 = scmp.eq.s32.totalorder %s16, 0
    %p63 = por %p61, %p62
    %p64 = scmp.ne.s32.totalorder %s50, %s51
    %p65 = scmp.eq.s32.totalorder %s17, 1
    %p66 = por %p64, %p65
    %p68 = scmp.ne.s32.totalorder %s51, %s67
    %p69 = scmp.eq.s32.totalorder %s17, 0
    %p70 = por %p68, %p69
    %s72 = sadd.s32 %s71, 1
    %p75 = scmp.eq.s32.totalorder %s11, 1
    %p76 = scmp.ne.s32.totalorder %s71, %s73
    %p77 = scmp.eq.s32.totalorder %s11, 0
    %p78 = por %p76, %p77
    %p79 = scmp.ne.s32.totalorder %s71, %s73
    %p80 = scmp.eq.s32.totalorder %s16, 1
    %p81 = por %p79, %p80
    %p82 = scmp.ne.s32.totalorder %s73, %s74
    %p83 = scmp.eq.s32.totalorder %s16, 0
    %p84 = por %p82, %p83
    %p85 = scmp.ne.s32.totalorder %s73, %s74
    %p86 = scmp.eq.s32.totalorder %s17, 1
    %p87 = por %p85, %p86
    %p89 = scmp.ne.s32.totalorder %s74, %s88
    %p90 = scmp.eq.s32.totalorder %s17, 0
    %p91 = por %p89, %p90
    %s93 = sadd.s32 %s92, 1
    %p96 = scmp.eq.s32.totalorder %s11, 1
    %p97 = scmp.ne.s32.totalorder %s92, %s94
    %p98 = scmp.eq.s32.totalorder %s11, 0
    %p99 = por %p97, %p98
    %p100 = scmp.ne.s32.totalorder %s92, %s94
    %p101 = scmp.eq.s32.totalorder %s16, 1
    %p102 = por %p100, %p101
    %p103 = scmp.ne.s32.totalorder %s94, %s95
    %p104 = scmp.eq.s32.totalorder %s16, 0
    %p105 = por %p103, %p104
    %p106 = scmp.ne.s32.totalorder %s94, %s95
    %p107 = scmp.eq.s32.totalorder %s17, 1
    %p108 = por %p106, %p107
    %p110 = scmp.ne.s32.totalorder %s95, %s109
    %p111 = scmp.eq.s32.totalorder %s17, 0
    %p112 = por %p110, %p111
    %s114 = sadd.s32 %s113, 1
    %p117 = scmp.eq.s32.totalorder %s11, 1
    %p118 = scmp.ne.s32.totalorder %s113, %s115
    %p119 = scmp.eq.s32.totalorder %s11, 0
    %p120 = por %p118, %p119
    %p121 = scmp.ne.s32.totalorder %s113, %s115
    %p122 = scmp.eq.s32.totalorder %s16, 1
    %p123 = por %p121, %p122
    %p124 = scmp.ne.s32.totalorder %s115, %s116
    %p125 = scmp.eq.s32.totalorder %s16, 0
    %p126 = por %p124, %p125
    %p127 = scmp.ne.s32.totalorder %s115, %s116
    %p128 = scmp.eq.s32.totalorder %s17, 1
    %p129 = por %p127, %p128
    %p131 = scmp.ne.s32.totalorder %s116, %s130
    %p132 = scmp.eq.s32.totalorder %s17, 0
    %p133 = por %p131, %p132
    %s134 = ssub.s32 %s11, %s18
    %p135 = scmp.eq.s32.totalorder %s134, 0
    %s137 = sadd.s32 %s136, 1
    %s138 = scalar_select %p135, %s136, %s137
    %p141 = pneg %p135
    %p142 = scmp.eq.s32.totalorder %s11, 1
    %p143 = por %p141, %p142
    %p144 = scmp.ne.s32.totalorder %s136, %s139
    %p145 = scmp.eq.s32.totalorder %s11, 0
    %p146 = por %p144, %p145
    %p147 = scmp.ne.s32.totalorder %s136, %s139
    %p148 = scmp.eq.s32.totalorder %s16, 1
    %p149 = por %p147, %p148
    %p150 = scmp.ne.s32.totalorder %s139, %s140
    %p151 = scmp.eq.s32.totalorder %s16, 0
    %p152 = por %p150, %p151
    %p153 = scmp.ne.s32.totalorder %s139, %s140
    %p154 = scmp.eq.s32.totalorder %s17, 1
    %p155 = por %p153, %p154
    %p157 = scmp.ne.s32.totalorder %s140, %s156
    %p158 = scmp.eq.s32.totalorder %s17, 0
    %p159 = por %p157, %p158
    %p160 = scmp.le.s32.totalorder 1, %s11
    %p161 = scmp.lt.s32.totalorder %s11, 3
    %p162 = pnand %p160, %p161
    %p163 = pneg %p162
    // Predicated region
    $region9: #{separator_forward.9} parent=5 // pred_check
      _
    $region10: #{separator_forward.9} parent=5 // pred_check_branch
      %165 = sbr.rel (%p162) target = $region12
    $region11: #{separator_forward.9} parent=5 // pred_region
      %s166 = ssub.s32 %s11, 1
      // Predicated region
      $region13: #{separator_forward.9} parent=11 // pred_check
        %p167 = pneg %p84
      $region14: #{separator_forward.9} parent=11 // pred_check_branch
        %169 = sbr.rel (%p167) target = $region16
      $region15: #{separator_forward.9} parent=11 // pred_region
        _
      $region16: #{separator_forward.9} parent=11 // pred_fallthru
        _
      // Predicated region
      $region17: #{separator_forward.9} parent=11 // pred_check
        %p170 = pneg %p105
      $region18: #{separator_forward.9} parent=11 // pred_check_branch
        %172 = sbr.rel (%p170) target = $region20
      $region19: #{separator_forward.9} parent=11 // pred_region
        _
      $region20: #{separator_forward.9} parent=11 // pred_fallthru
        _
      // Predicated region
      $region21: #{separator_forward.9} parent=11 // pred_check
        %p173 = pneg %p126
      $region22: #{separator_forward.9} parent=11 // pred_check_branch
        %175 = sbr.rel (%p173) target = $region24
      $region23: #{separator_forward.9} parent=11 // pred_region
        _
      $region24: #{separator_forward.9} parent=11 // pred_fallthru
        _
    $region12: #{separator_forward.9} parent=5 // pred_fallthru
      _
    %p176 = scmp.lt.s32.totalorder %s11, 2
    // Predicated region
    $region25: #{separator_forward.9} parent=5 // pred_check
      %p177 = pneg %p176
    $region26: #{separator_forward.9} parent=5 // pred_check_branch
      %179 = sbr.rel (%p177) target = $region28
    $region27: #{separator_forward.9} parent=5 // pred_region
      // Predicated region
      $region29: #{separator_forward.9} parent=27 // pred_check
        %p180 = pneg %p31
      $region30: #{separator_forward.9} parent=27 // pred_check_branch
        %182 = sbr.rel (%p180) target = $region32
      $region31: #{separator_forward.9} parent=27 // pred_region
        %p183 = scmp.lt.s32.totalorder %s11, 1
        %s184 = scalar_select %p183, %s11, 1
        %s185 = smul.addr %s184, 2
        %s186 = smul.addr %s185, 8
        %s187 = scalar_lea.vmem %s0, %s186
      $region32: #{separator_forward.9} parent=27 // pred_fallthru
        _
      // Predicated region
      $region33: #{separator_forward.9} parent=27 // pred_check
        %p188 = pneg %p57
      $region34: #{separator_forward.9} parent=27 // pred_check_branch
        %190 = sbr.rel (%p188) target = $region36
      $region35: #{separator_forward.9} parent=27 // pred_region
        %p191 = scmp.lt.s32.totalorder %s11, 1
        %s192 = scalar_select %p191, %s11, 1
        %s193 = smul.addr %s192, 2
        %s194 = smul.addr %s193, 8
        %s195 = scalar_lea.vmem %s1, %s194
      $region36: #{separator_forward.9} parent=27 // pred_fallthru
        _
    $region28: #{separator_forward.9} parent=5 // pred_fallthru
      _
    %p196 = scmp.le.s32.totalorder 1, %s11
    %p197 = scmp.lt.s32.totalorder %s11, 3
    %p198 = pnand %p196, %p197
    %p199 = pneg %p198
    // Predicated region
    $region37: #{separator_forward.9} parent=5 // pred_check
      _
    $region38: #{separator_forward.9} parent=5 // pred_check_branch
      %201 = sbr.rel (%p198) target = $region40
    $region39: #{separator_forward.9} parent=5 // pred_region
      %s202 = ssub.s32 %s11, 1
      %p203 = scmp.lt.s32.totalorder %s16, 1
      %s204 = scalar_select %p203, %s16, 1
      %s205 = smul.addr %s204, 2
      %s206 = smul.addr %s205, 8
      %s207 = scalar_lea.vmem %s0, %s206
      %p208 = pneg %p37
      %p209 = pneg %p34
      %p210 = scmp.lt.s32.totalorder %s16, 1
      %s211 = scalar_select %p210, %s16, 1
      %s212 = smul.addr %s211, 2
      %s213 = smul.addr %s212, 8
      %s214 = scalar_lea.vmem %s1, %s213
      %p215 = pneg %p63
      %p216 = pneg %p60
      %p217 = pneg %p84
      %p218 = pneg %p81
      %p219 = pneg %p105
      %p220 = pneg %p102
      %p221 = pneg %p126
      %p222 = pneg %p123
      %p223 = pneg %p152
      %p224 = pneg %p149
      %p225 = scmp.lt.s32.totalorder %s16, 1
      %s226 = scalar_select %p225, %s16, 1
      %s227 = smul.addr %s226, 8
      %s228 = scalar_lea.vmem %s5, %s227
      %p229 = scmp.lt.s32.totalorder %s16, 1
      %s230 = scalar_select %p229, %s16, 1
      %s231 = smul.addr %s230, 2
      %s232 = smul.addr %s231, 8
      %s233 = scalar_lea.vmem %s0, %s232
      %p234 = scmp.lt.s32.totalorder %s16, 1
      %s235 = scalar_select %p234, %s16, 1
      %s236 = smul.addr %s235, 2
      %s237 = smul.addr %s236, 8
      %s238 = scalar_lea.vmem %s1, %s237
      %p239 = scmp.lt.s32.totalorder %s16, 1
      %s240 = scalar_select %p239, %s16, 1
      %s241 = smul.addr %s240, 8
      %s242 = scalar_lea.vmem %s5, %s241
      %v243 = vld [vmem:[%s233] sm:$0xff]
      %v244 = vld [vmem:[%s233 + $0x8] sm:$0x3]
      %v245 = vld [vmem:[%s238] sm:$0xff]
      %v246 = vld [vmem:[%s238 + $0x8] sm:$0x3]
      %v247 = vld [vmem:[%s2] sm:$0x1f]
      %v248 = vlaneseq
      %v249 = vshrl.u32 %v248, 7
      %v250 = vsub.s32 0, %v249
      %v251 = vrot.slane %v247, %v250
      %v252 = vmul.f32 %v243, %v251
      %v253 = vadd.f32 %v252, 0.0
      %v254 = vlaneseq
      %v255 = vshrl.u32 %v254, 7
      %v256 = vsub.s32 1, %v255
      %v257 = vrot.slane %v247, %v256
      %v258 = vmul.f32 %v245, %v257
      %v259 = vadd.f32 %v253, %v258
      %v260 = vlaneseq
      %v261 = vshrl.u32 %v260, 7
      %v262 = vsub.s32 2, %v261
      %v263 = vrot.slane %v247, %v262
      %v264 = vmul.f32 %v243, %v263
      %v265 = vmul.f32 %v244, %v263
      %vm268 = vcmask 1046528
      %v269 = vrot.slane %v264, 1
      %v270 = vrot.slane %v265, 1
      %v271 = vsel %vm268, %v269, %v270
      %v273 = vadd.f32 %v259, %v271
      %v274 = vlaneseq
      %v275 = vshrl.u32 %v274, 7
      %v276 = vsub.s32 3, %v275
      %v277 = vrot.slane %v247, %v276
      %v278 = vmul.f32 %v245, %v277
      %v279 = vmul.f32 %v246, %v277
      %v282 = vrot.slane %v278, 1
      %v283 = vrot.slane %v279, 1
      %v284 = vsel %vm268, %v282, %v283
      %v286 = vadd.f32 %v273, %v284
      %v287 = vlaneseq
      %v288 = vshrl.u32 %v287, 7
      %v289 = vsub.s32 4, %v288
      %v290 = vrot.slane %v247, %v289
      %v291 = vmul.f32 %v243, %v290
      %v292 = vmul.f32 %v244, %v290
      %vm295 = vcmask 1045504
      %v296 = vrot.slane %v291, 2
      %v297 = vrot.slane %v292, 2
      %v298 = vsel %vm295, %v296, %v297
      %v300 = vadd.f32 %v286, %v298
      %v301 = vld [vmem:[%s3] sm:$0x1]
      %v303 = vlaneseq
      %v304 = vshrl.u32 %v303, 7
      %v305 = vsub.s32 0, %v304
      %v306 = vrot.slane %v301, %v305
      %v308 = vmul.f32 %v300, %v306
      %v309 = vld [vmem:[%s4] sm:$0x1]
      %v311 = vlaneseq
      %v312 = vshrl.u32 %v311, 7
      %v313 = vsub.s32 0, %v312
      %v314 = vrot.slane %v309, %v313
      %v316 = vadd.f32 %v308, %v314
      %v317 = vmul.f32 %v316, 0.5
      %v318 = vmul.f32 %v316, 0.70710677
      %v319 = verf.f32.pop %v318
      %v320 = vadd.f32 %v319, 1.0
      %v321 = vmul.f32 %v317, %v320
      %vm322 = vcmask 64512
      %323 = vst.msk [vmem:[%s242] sm:$0xff] %vm322, %v321
      %p324 = scmp.lt.s32.totalorder %s16, 1
      %s325 = scalar_select %p324, %s16, 1
      %s326 = smul.addr %s325, 8
      %s327 = scalar_lea.vmem %s5, %s326
      // Predicated region
      $region41: #{separator_forward.9} parent=39 // pred_check
        %p328 = pneg %p149
      $region42: #{separator_forward.9} parent=39 // pred_check_branch
        %330 = sbr.rel (%p328) target = $region44
      $region43: #{separator_forward.9} parent=39 // pred_region
        _
      $region44: #{separator_forward.9} parent=39 // pred_fallthru
        _
    $region40: #{separator_forward.9} parent=5 // pred_fallthru
      _
    %p331 = scmp.le.s32.totalorder 2, %s11
    // Predicated region
    $region45: #{separator_forward.9} parent=5 // pred_check
      %p332 = pneg %p331
    $region46: #{separator_forward.9} parent=5 // pred_check_branch
      %334 = sbr.rel (%p332) target = $region48
    $region47: #{separator_forward.9} parent=5 // pred_region
      %s335 = ssub.s32 %s11, 2
      // Predicated region
      $region49: #{separator_forward.9} parent=47 // pred_check
        %p336 = pneg %p155
      $region50: #{separator_forward.9} parent=47 // pred_check_branch
        %338 = sbr.rel (%p336) target = $region52
      $region51: #{separator_forward.9} parent=47 // pred_region
        %p339 = scmp.lt.s32.totalorder %s17, 1
        %s340 = scalar_select %p339, %s17, 1
        %s341 = smul.addr %s340, 8
        %s342 = scalar_lea.vmem %s5, %s341
      $region52: #{separator_forward.9} parent=47 // pred_fallthru
        _
    $region48: #{separator_forward.9} parent=5 // pred_fallthru
      _
  $region6: #{separator_forward.9} parent=0 // loop_footer
    %s15 = sadd.s32 1, %s11
  $region7: #{separator_forward.9} parent=0 // loop_footer_branch
    %10 = sbr.rel target = $region3
  $region8: #{separator_forward.9} parent=0 // loop_exit
    _

// kernel: separator_forward.13
$region0: #{separator_forward.13}
  #allocation0 [shape = 'u32[]', space=smem, size = 0x4, offset = 0x4, fixed_abs, tag = 'smem constant byte address 0x4 - core index']
  #allocation1 [shape = 'u32[144,128]{1,0:T(1,128)}', space=vmem, size = 0x12000, scoped, tag = 'internal scratch']
  %s0 = inlined_call_operand.vmem [shape: f32[128,8], index: 0, kind: input, shape index: {}]
  %s1 = inlined_call_operand.vmem [shape: f32[128,8], index: 1, kind: input, shape index: {}]
  %s2 = inlined_call_operand.vmem [shape: f32[8,8], index: 2, kind: input, shape index: {}]
  %s3 = inlined_call_operand.vmem [shape: f32[8,8], index: 3, kind: input, shape index: {}]
  %s4 = inlined_call_operand.vmem [shape: f32[1,8], index: 4, kind: input, shape index: {}]
  %s5 = inlined_call_operand.vmem [shape: f32[128,8], index: 5, kind: output, shape index: {}]
  %s6 = sld [smem:[#allocation0]]
  $region30: #{separator_forward.13} parent=0
    _
  %s8 = ssub.s32 1, %s6
  %s9 = scalar_select 0, %s8, %s6
  // Predicated region
  $region2: #{separator_forward.13} parent=0 // pred_check
    _
  $region3: #{separator_forward.13} parent=0 // pred_check_branch
    %11 = sbr.rel (0) target = $region5
  $region4: #{separator_forward.13} parent=0 // pred_region
    _
  $region5: #{separator_forward.13} parent=0 // pred_fallthru
    _
  // Predicated region
  $region6: #{separator_forward.13} parent=0 // pred_check
    _
  $region7: #{separator_forward.13} parent=0 // pred_check_branch
    %13 = sbr.rel (0) target = $region9
  $region8: #{separator_forward.13} parent=0 // pred_region
    _
  $region9: #{separator_forward.13} parent=0 // pred_fallthru
    _
  // Predicated region
  $region10: #{separator_forward.13} parent=0 // pred_check
    _
  $region11: #{separator_forward.13} parent=0 // pred_check_branch
    %15 = sbr.rel (0) target = $region13
  $region12: #{separator_forward.13} parent=0 // pred_region
    _
  $region13: #{separator_forward.13} parent=0 // pred_fallthru
    _
  // Predicated region
  $region14: #{separator_forward.13} parent=0 // pred_check
    _
  $region15: #{separator_forward.13} parent=0 // pred_check_branch
    %17 = sbr.rel (0) target = $region17
  $region16: #{separator_forward.13} parent=0 // pred_region
    _
  $region17: #{separator_forward.13} parent=0 // pred_fallthru
    _
  // Predicated region
  $region18: #{separator_forward.13} parent=0 // pred_check
    _
  $region19: #{separator_forward.13} parent=0 // pred_check_branch
    %19 = sbr.rel (0) target = $region21
  $region20: #{separator_forward.13} parent=0 // pred_region
    _
  $region21: #{separator_forward.13} parent=0 // pred_fallthru
    _
  %v20 = vld [vmem:[%s0] sm:$0xff]
  %v21 = vld [vmem:[%s0 + $0x8] sm:$0xff]
  %v22 = vld [vmem:[%s0 + $0x10] sm:$0xff]
  %v23 = vld [vmem:[%s0 + $0x18] sm:$0xff]
  %v24 = vld [vmem:[%s0 + $0x20] sm:$0xff]
  %v25 = vld [vmem:[%s0 + $0x28] sm:$0xff]
  %v26 = vld [vmem:[%s0 + $0x30] sm:$0xff]
  %v27 = vld [vmem:[%s0 + $0x38] sm:$0xff]
  %v28 = vld [vmem:[%s0 + $0x40] sm:$0xff]
  %v29 = vld [vmem:[%s0 + $0x48] sm:$0xff]
  %v30 = vld [vmem:[%s0 + $0x50] sm:$0xff]
  %v31 = vld [vmem:[%s0 + $0x58] sm:$0xff]
  %v32 = vld [vmem:[%s0 + $0x60] sm:$0xff]
  %v33 = vld [vmem:[%s0 + $0x68] sm:$0xff]
  %v34 = vld [vmem:[%s0 + $0x70] sm:$0xff]
  %v35 = vld [vmem:[%s0 + $0x78] sm:$0xff]
  %v36 = vld [vmem:[%s2] sm:$0xff]
  %v37 = vld [vmem:[%s1] sm:$0xff]
  %v38 = vld [vmem:[%s1 + $0x8] sm:$0xff]
  %v39 = vld [vmem:[%s1 + $0x10] sm:$0xff]
  %v40 = vld [vmem:[%s1 + $0x18] sm:$0xff]
  %v41 = vld [vmem:[%s1 + $0x20] sm:$0xff]
  %v42 = vld [vmem:[%s1 + $0x28] sm:$0xff]
  %v43 = vld [vmem:[%s1 + $0x30] sm:$0xff]
  %v44 = vld [vmem:[%s1 + $0x38] sm:$0xff]
  %v45 = vld [vmem:[%s1 + $0x40] sm:$0xff]
  %v46 = vld [vmem:[%s1 + $0x48] sm:$0xff]
  %v47 = vld [vmem:[%s1 + $0x50] sm:$0xff]
  %v48 = vld [vmem:[%s1 + $0x58] sm:$0xff]
  %v49 = vld [vmem:[%s1 + $0x60] sm:$0xff]
  %v50 = vld [vmem:[%s1 + $0x68] sm:$0xff]
  %v51 = vld [vmem:[%s1 + $0x70] sm:$0xff]
  %v52 = vld [vmem:[%s1 + $0x78] sm:$0xff]
  %v53 = vld [vmem:[%s3] sm:$0xff]
  %vm54 = vcmask 64512
  %v56 = vsel %vm54, %v37, 0
  %v59 = vsel %vm54, %v38, 0
  %v62 = vsel %vm54, %v39, 0
  %v65 = vsel %vm54, %v40, 0
  %v68 = vsel %vm54, %v41, 0
  %v71 = vsel %vm54, %v42, 0
  %v74 = vsel %vm54, %v43, 0
  %v77 = vsel %vm54, %v44, 0
  %v80 = vsel %vm54, %v45, 0
  %v83 = vsel %vm54, %v46, 0
  %v86 = vsel %vm54, %v47, 0
  %v89 = vsel %vm54, %v48, 0
  %v92 = vsel %vm54, %v49, 0
  %v95 = vsel %vm54, %v50, 0
  %v98 = vsel %vm54, %v51, 0
  %v101 = vsel %vm54, %v52, 0
  %103 = vmatprep.subr.mxu0 0.0
  %104 = vmatpush1.msra.mxu0 %v53
  %105 = vmatprep.subr.mxu0 0.0
  %106 = vmatpush1.msra.mxu0 0.0
  %107 = vmatprep.subr.mxu0 0.0
  %108 = vmatpush1.msra.mxu0 0.0
  %109 = vmatprep.subr.mxu0 0.0
  %110 = vmatpush1.msra.mxu0 0.0
  %111 = vmatprep.subr.mxu0 0.0
  %112 = vmatpush1.msra.mxu0 0.0
  %113 = vmatprep.subr.mxu0 0.0
  %114 = vmatpush1.msra.mxu0 0.0
  %115 = vmatprep.subr.mxu0 0.0
  %116 = vmatpush1.msra.mxu0 0.0
  %117 = vmatprep.subr.mxu0 0.0
  %118 = vmatpush1.msra.mxu0 0.0
  %119 = vmatprep.subr.mxu0 0.0
  %120 = vmatpush1.msra.mxu0 0.0
  %121 = vmatprep.subr.mxu0 0.0
  %122 = vmatpush1.msra.mxu0 0.0
  %123 = vmatprep.subr.mxu0 0.0
  %124 = vmatpush1.msra.mxu0 0.0
  %125 = vmatprep.subr.mxu0 0.0
  %126 = vmatpush1.msra.mxu0 0.0
  %127 = vmatprep.subr.mxu0 0.0
  %128 = vmatpush1.msra.mxu0 0.0
  %129 = vmatprep.subr.mxu0 0.0
  %130 = vmatpush1.msra.mxu0 0.0
  %131 = vmatprep.subr.mxu0 0.0
  %132 = vmatpush1.msra.mxu0 0.0
  %133 = vmatprep.subr.mxu0 0.0
  %134 = vmatpush1.msra.mxu0 0.0
  %135 = vmatprep.subr.mxu0 0.0
  %136 = vmatpush1.msra.mxu0 0.0
  %137 = vmatprep.subr.mxu0 0.0
  %138 = vmatpush1.msra.mxu0 0.0
  %139 = vmatprep.subr.mxu0 0.0
  %140 = vmatpush1.msra.mxu0 0.0
  %141 = vmatprep.subr.mxu0 0.0
  %142 = vmatpush1.msra.mxu0 0.0
  %143 = vmatprep.subr.mxu0 0.0
  %144 = vmatpush1.msra.mxu0 0.0
  %145 = vmatprep.subr.mxu0 0.0
  %146 = vmatpush1.msra.mxu0 0.0
  %147 = vmatprep.subr.mxu0 0.0
  %148 = vmatpush1.msra.mxu0 0.0
  %149 = vmatprep.subr.mxu0 0.0
  %150 = vmatpush1.msra.mxu0 0.0
  %151 = vmatprep.subr.mxu0 0.0
  %152 = vmatpush1.msra.mxu0 0.0
  %153 = vmatprep.subr.mxu0 0.0
  %154 = vmatpush1.msra.mxu0 0.0
  %155 = vmatprep.subr.mxu0 0.0
  %156 = vmatpush1.msra.mxu0 0.0
  %157 = vmatprep.subr.mxu0 0.0
  %158 = vmatpush1.msra.mxu0 0.0
  %159 = vmatprep.subr.mxu0 0.0
  %160 = vmatpush1.msra.mxu0 0.0
  %161 = vmatprep.subr.mxu0 0.0
  %162 = vmatpush1.msra.mxu0 0.0
  %163 = vmatprep.subr.mxu0 0.0
  %164 = vmatpush1.msra.mxu0 0.0
  %165 = vmatprep.subr.mxu0 0.0
  %166 = vmatpush1.msra.mxu0 0.0
  %167 = vmatprep.mubr.f32.mxu0 0.0
  %168 = vmatmul.mubr.f32.gmra.mrb[0].mxu0 %v56
  %v169 = vpop.f32.mrb[0].mxu0
  %v170 = vadd.f32 0.0, %v169
  %v171 = vpop.f32.mrb[0].mxu0
  %172 = vmatprep.mubr.f32.mxu0 0.0
  %173 = vmatmul.mubr.f32.gmra.mrb[0].mxu0 %v59
  %v174 = vpop.f32.mrb[0].mxu0
  %v175 = vadd.f32 0.0, %v174
  %v176 = vpop.f32.mrb[0].mxu0
  %177 = vmatprep.mubr.f32.mxu0 0.0
  %178 = vmatmul.mubr.f32.gmra.mrb[0].mxu0 %v62
  %v179 = vpop.f32.mrb[0].mxu0
  %v180 = vadd.f32 0.0, %v179
  %v181 = vpop.f32.mrb[0].mxu0
  %182 = vmatprep.mubr.f32.mxu0 0.0
  %183 = vmatmul.mubr.f32.gmra.mrb[0].mxu0 %v65
  %v184 = vpop.f32.mrb[0].mxu0
  %v185 = vadd.f32 0.0, %v184
  %v186 = vpop.f32.mrb[0].mxu0
  %187 = vmatprep.mubr.f32.mxu0 0.0
  %188 = vmatmul.mubr.f32.gmra.mrb[0].mxu0 %v68
  %v189 = vpop.f32.mrb[0].mxu0
  %v190 = vadd.f32 0.0, %v189
  %v191 = vpop.f32.mrb[0].mxu0
  %192 = vmatprep.mubr.f32.mxu0 0.0
  %193 = vmatmul.mubr.f32.gmra.mrb[0].mxu0 %v71
  %v194 = vpop.f32.mrb[0].mxu0
  %v195 = vadd.f32 0.0, %v194
  %v196 = vpop.f32.mrb[0].mxu0
  %197 = vmatprep.mubr.f32.mxu0 0.0
  %198 = vmatmul.mubr.f32.gmra.mrb[0].mxu0 %v74
  %v199 = vpop.f32.mrb[0].mxu0
  %v200 = vadd.f32 0.0, %v199
  %v201 = vpop.f32.mrb[0].mxu0
  %202 = vmatprep.mubr.f32.mxu0 0.0
  %203 = vmatmul.mubr.f32.gmra.mrb[0].mxu0 %v77
  %v204 = vpop.f32.mrb[0].mxu0
  %v205 = vadd.f32 0.0, %v204
  %v206 = vpop.f32.mrb[0].mxu0
  %207 = vmatprep.mubr.f32.mxu0 0.0
  %208 = vmatmul.mubr.f32.gmra.mrb[0].mxu0 %v80
  %v209 = vpop.f32.mrb[0].mxu0
  %v210 = vadd.f32 0.0, %v209
  %v211 = vpop.f32.mrb[0].mxu0
  %212 = vmatprep.mubr.f32.mxu0 0.0
  %213 = vmatmul.mubr.f32.gmra.mrb[0].mxu0 %v83
  %v214 = vpop.f32.mrb[0].mxu0
  %v215 = vadd.f32 0.0, %v214
  %v216 = vpop.f32.mrb[0].mxu0
  %217 = vmatprep.mubr.f32.mxu0 0.0
  %218 = vmatmul.mubr.f32.gmra.mrb[0].mxu0 %v86
  %v219 = vpop.f32.mrb[0].mxu0
  %v220 = vadd.f32 0.0, %v219
  %v221 = vpop.f32.mrb[0].mxu0
  %222 = vmatprep.mubr.f32.mxu0 0.0
  %223 = vmatmul.mubr.f32.gmra.mrb[0].mxu0 %v89
  %v224 = vpop.f32.mrb[0].mxu0
  %v225 = vadd.f32 0.0, %v224
  %v226 = vpop.f32.mrb[0].mxu0
  %227 = vmatprep.mubr.f32.mxu0 0.0
  %228 = vmatmul.mubr.f32.gmra.mrb[0].mxu0 %v92
  %v229 = vpop.f32.mrb[0].mxu0
  %v230 = vadd.f32 0.0, %v229
  %v231 = vpop.f32.mrb[0].mxu0
  %232 = vmatprep.mubr.f32.mxu0 0.0
  %233 = vmatmul.mubr.f32.gmra.mrb[0].mxu0 %v95
  %v234 = vpop.f32.mrb[0].mxu0
  %v235 = vadd.f32 0.0, %v234
  %v236 = vpop.f32.mrb[0].mxu0
  %237 = vmatprep.mubr.f32.mxu0 0.0
  %238 = vmatmul.mubr.f32.gmra.mrb[0].mxu0 %v98
  %v239 = vpop.f32.mrb[0].mxu0
  %v240 = vadd.f32 0.0, %v239
  %v241 = vpop.f32.mrb[0].mxu0
  %242 = vmatprep.mubr.f32.mxu0 0.0
  %243 = vmatmul.mubr.f32.gmra.mrb[0].mxu0 %v101
  %v244 = vpop.f32.mrb[0].mxu0
  %v245 = vadd.f32 0.0, %v244
  %v246 = vpop.f32.mrb[0].mxu0
  %247 = vdwg.mxu0
  %v249 = vsel %vm54, %v20, 0
  %v252 = vsel %vm54, %v21, 0
  %v255 = vsel %vm54, %v22, 0
  %v258 = vsel %vm54, %v23, 0
  %v261 = vsel %vm54, %v24, 0
  %v264 = vsel %vm54, %v25, 0
  %v267 = vsel %vm54, %v26, 0
  %v270 = vsel %vm54, %v27, 0
  %v273 = vsel %vm54, %v28, 0
  %v276 = vsel %vm54, %v29, 0
  %v279 = vsel %vm54, %v30, 0
  %v282 = vsel %vm54, %v31, 0
  %v285 = vsel %vm54, %v32, 0
  %v288 = vsel %vm54, %v33, 0
  %v291 = vsel %vm54, %v34, 0
  %v294 = vsel %vm54, %v35, 0
  %296 = vmatprep.subr.mxu0 0.0
  %297 = vmatpush1.msra.mxu0 %v36
  %298 = vmatprep.subr.mxu0 0.0
  %299 = vmatpush1.msra.mxu0 0.0
  %300 = vmatprep.subr.mxu0 0.0
  %301 = vmatpush1.msra.mxu0 0.0
  %302 = vmatprep.subr.mxu0 0.0
  %303 = vmatpush1.msra.mxu0 0.0
  %304 = vmatprep.subr.mxu0 0.0
  %305 = vmatpush1.msra.mxu0 0.0
  %306 = vmatprep.subr.mxu0 0.0
  %307 = vmatpush1.msra.mxu0 0.0
  %308 = vmatprep.subr.mxu0 0.0
  %309 = vmatpush1.msra.mxu0 0.0
  %310 = vmatprep.subr.mxu0 0.0
  %311 = vmatpush1.msra.mxu0 0.0
  %312 = vmatprep.subr.mxu0 0.0
  %313 = vmatpush1.msra.mxu0 0.0
  %314 = vmatprep.subr.mxu0 0.0
  %315 = vmatpush1.msra.mxu0 0.0
  %316 = vmatprep.subr.mxu0 0.0
  %317 = vmatpush1.msra.mxu0 0.0
  %318 = vmatprep.subr.mxu0 0.0
  %319 = vmatpush1.msra.mxu0 0.0
  %320 = vmatprep.subr.mxu0 0.0
  %321 = vmatpush1.msra.mxu0 0.0
  %322 = vmatprep.subr.mxu0 0.0
  %323 = vmatpush1.msra.mxu0 0.0
  %324 = vmatprep.subr.mxu0 0.0
  %325 = vmatpush1.msra.mxu0 0.0
  %326 = vmatprep.subr.mxu0 0.0
  %327 = vmatpush1.msra.mxu0 0.0
  %328 = vmatprep.subr.mxu0 0.0
  %329 = vmatpush1.msra.mxu0 0.0
  %330 = vmatprep.subr.mxu0 0.0
  %331 = vmatpush1.msra.mxu0 0.0
  %332 = vmatprep.subr.mxu0 0.0
  %333 = vmatpush1.msra.mxu0 0.0
  %334 = vmatprep.subr.mxu0 0.0
  %335 = vmatpush1.msra.mxu0 0.0
  %336 = vmatprep.subr.mxu0 0.0
  %337 = vmatpush1.msra.mxu0 0.0
  %338 = vmatprep.subr.mxu0 0.0
  %339 = vmatpush1.msra.mxu0 0.0
  %340 = vmatprep.subr.mxu0 0.0
  %341 = vmatpush1.msra.mxu0 0.0
  %342 = vmatprep.subr.mxu0 0.0
  %343 = vmatpush1.msra.mxu0 0.0
  %344 = vmatprep.subr.mxu0 0.0
  %345 = vmatpush1.msra.mxu0 0.0
  %346 = vmatprep.subr.mxu0 0.0
  %347 = vmatpush1.msra.mxu0 0.0
  %348 = vmatprep.subr.mxu0 0.0
  %349 = vmatpush1.msra.mxu0 0.0
  %350 = vmatprep.subr.mxu0 0.0
  %351 = vmatpush1.msra.mxu0 0.0
  %352 = vmatprep.subr.mxu0 0.0
  %353 = vmatpush1.msra.mxu0 0.0
  %354 = vmatprep.subr.mxu0 0.0
  %355 = vmatpush1.msra.mxu0 0.0
  %356 = vmatprep.subr.mxu0 0.0
  %357 = vmatpush1.msra.mxu0 0.0
  %358 = vmatprep.subr.mxu0 0.0
  %359 = vmatpush1.msra.mxu0 0.0
  %360 = vmatprep.mubr.f32.mxu0 0.0
  %361 = vmatmul.mubr.f32.gmra.mrb[0].mxu0 %v249
  %v362 = vpop.f32.mrb[0].mxu0
  %v363 = vadd.f32 %v170, %v362
  %v364 = vpop.f32.mrb[0].mxu0
  %365 = vmatprep.mubr.f32.mxu0 0.0
  %366 = vmatmul.mubr.f32.gmra.mrb[0].mxu0 %v252
  %v367 = vpop.f32.mrb[0].mxu0
  %v368 = vadd.f32 %v175, %v367
  %v369 = vpop.f32.mrb[0].mxu0
  %370 = vmatprep.mubr.f32.mxu0 0.0
  %371 = vmatmul.mubr.f32.gmra.mrb[0].mxu0 %v255
  %v372 = vpop.f32.mrb[0].mxu0
  %v373 = vadd.f32 %v180, %v372
  %v374 = vpop.f32.mrb[0].mxu0
  %375 = vmatprep.mubr.f32.mxu0 0.0
  %376 = vmatmul.mubr.f32.gmra.mrb[0].mxu0 %v258
  %v377 = vpop.f32.mrb[0].mxu0
  %v378 = vadd.f32 %v185, %v377
  %v379 = vpop.f32.mrb[0].mxu0
  %380 = vmatprep.mubr.f32.mxu0 0.0
  %381 = vmatmul.mubr.f32.gmra.mrb[0].mxu0 %v261
  %v382 = vpop.f32.mrb[0].mxu0
  %v383 = vadd.f32 %v190, %v382
  %v384 = vpop.f32.mrb[0].mxu0
  %385 = vmatprep.mubr.f32.mxu0 0.0
  %386 = vmatmul.mubr.f32.gmra.mrb[0].mxu0 %v264
  %v387 = vpop.f32.mrb[0].mxu0
  %v388 = vadd.f32 %v195, %v387
  %v389 = vpop.f32.mrb[0].mxu0
  %390 = vmatprep.mubr.f32.mxu0 0.0
  %391 = vmatmul.mubr.f32.gmra.mrb[0].mxu0 %v267
  %v392 = vpop.f32.mrb[0].mxu0
  %v393 = vadd.f32 %v200, %v392
  %v394 = vpop.f32.mrb[0].mxu0
  %395 = vmatprep.mubr.f32.mxu0 0.0
  %396 = vmatmul.mubr.f32.gmra.mrb[0].mxu0 %v270
  %v397 = vpop.f32.mrb[0].mxu0
  %v398 = vadd.f32 %v205, %v397
  %v399 = vpop.f32.mrb[0].mxu0
  %400 = vmatprep.mubr.f32.mxu0 0.0
  %401 = vmatmul.mubr.f32.gmra.mrb[0].mxu0 %v273
  %v402 = vpop.f32.mrb[0].mxu0
  %v403 = vadd.f32 %v210, %v402
  %v404 = vpop.f32.mrb[0].mxu0
  %405 = vmatprep.mubr.f32.mxu0 0.0
  %406 = vmatmul.mubr.f32.gmra.mrb[0].mxu0 %v276
  %v407 = vpop.f32.mrb[0].mxu0
  %v408 = vadd.f32 %v215, %v407
  %v409 = vpop.f32.mrb[0].mxu0
  %410 = vmatprep.mubr.f32.mxu0 0.0
  %411 = vmatmul.mubr.f32.gmra.mrb[0].mxu0 %v279
  %v412 = vpop.f32.mrb[0].mxu0
  %v413 = vadd.f32 %v220, %v412
  %v414 = vpop.f32.mrb[0].mxu0
  %415 = vmatprep.mubr.f32.mxu0 0.0
  %416 = vmatmul.mubr.f32.gmra.mrb[0].mxu0 %v282
  %v417 = vpop.f32.mrb[0].mxu0
  %v418 = vadd.f32 %v225, %v417
  %v419 = vpop.f32.mrb[0].mxu0
  %420 = vmatprep.mubr.f32.mxu0 0.0
  %421 = vmatmul.mubr.f32.gmra.mrb[0].mxu0 %v285
  %v422 = vpop.f32.mrb[0].mxu0
  %v423 = vadd.f32 %v230, %v422
  %v424 = vpop.f32.mrb[0].mxu0
  %425 = vmatprep.mubr.f32.mxu0 0.0
  %426 = vmatmul.mubr.f32.gmra.mrb[0].mxu0 %v288
  %v427 = vpop.f32.mrb[0].mxu0
  %v428 = vadd.f32 %v235, %v427
  %v429 = vpop.f32.mrb[0].mxu0
  %430 = vmatprep.mubr.f32.mxu0 0.0
  %431 = vmatmul.mubr.f32.gmra.mrb[0].mxu0 %v291
  %v432 = vpop.f32.mrb[0].mxu0
  %v433 = vadd.f32 %v240, %v432
  %v434 = vpop.f32.mrb[0].mxu0
  %435 = vmatprep.mubr.f32.mxu0 0.0
  %436 = vmatmul.mubr.f32.gmra.mrb[0].mxu0 %v294
  %v437 = vpop.f32.mrb[0].mxu0
  %v438 = vadd.f32 %v245, %v437
  %v439 = vpop.f32.mrb[0].mxu0
  %440 = vdwg.mxu0
  %v441 = vld [vmem:[%s4] sm:$0x1]
  %v443 = vlaneseq
  %v444 = vshrl.u32 %v443, 7
  %v445 = vsub.s32 0, %v444
  %v446 = vrot.slane %v441, %v445
  %v448 = vadd.f32 %v363, %v446
  %v449 = vadd.f32 %v368, %v446
  %v450 = vadd.f32 %v373, %v446
  %v451 = vadd.f32 %v378, %v446
  %v452 = vadd.f32 %v383, %v446
  %v453 = vadd.f32 %v388, %v446
  %v454 = vadd.f32 %v393, %v446
  %v455 = vadd.f32 %v398, %v446
  %v456 = vadd.f32 %v403, %v446
  %v457 = vadd.f32 %v408, %v446
  %v458 = vadd.f32 %v413, %v446
  %v459 = vadd.f32 %v418, %v446
  %v460 = vadd.f32 %v423, %v446
  %v461 = vadd.f32 %v428, %v446
  %v462 = vadd.f32 %v433, %v446
  %v463 = vadd.f32 %v438, %v446
  %464 = vst.msk [vmem:[%s5] sm:$0xff] %vm54, %v448
  %465 = vst.msk [vmem:[%s5 + $0x8] sm:$0xff] %vm54, %v449
  %466 = vst.msk [vmem:[%s5 + $0x10] sm:$0xff] %vm54, %v450
  %467 = vst.msk [vmem:[%s5 + $0x18] sm:$0xff] %vm54, %v451
  %468 = vst.msk [vmem:[%s5 + $0x20] sm:$0xff] %vm54, %v452
  %469 = vst.msk [vmem:[%s5 + $0x28] sm:$0xff] %vm54, %v453
  %470 = vst.msk [vmem:[%s5 + $0x30] sm:$0xff] %vm54, %v454
  %471 = vst.msk [vmem:[%s5 + $0x38] sm:$0xff] %vm54, %v455
  %472 = vst.msk [vmem:[%s5 + $0x40] sm:$0xff] %vm54, %v456
  %473 = vst.msk [vmem:[%s5 + $0x48] sm:$0xff] %vm54, %v457
  %474 = vst.msk [vmem:[%s5 + $0x50] sm:$0xff] %vm54, %v458
  %475 = vst.msk [vmem:[%s5 + $0x58] sm:$0xff] %vm54, %v459
  %476 = vst.msk [vmem:[%s5 + $0x60] sm:$0xff] %vm54, %v460
  %477 = vst.msk [vmem:[%s5 + $0x68] sm:$0xff] %vm54, %v461
  %478 = vst.msk [vmem:[%s5 + $0x70] sm:$0xff] %vm54, %v462
  %479 = vst.msk [vmem:[%s5 + $0x78] sm:$0xff] %vm54, %v463
  // Predicated region
  $region22: #{separator_forward.13} parent=0 // pred_check
    _
  $region23: #{separator_forward.13} parent=0 // pred_check_branch
    %481 = sbr.rel (0) target = $region25
  $region24: #{separator_forward.13} parent=0 // pred_region
    _
  $region25: #{separator_forward.13} parent=0 // pred_fallthru
    _
  // Predicated region
  $region26: #{separator_forward.13} parent=0 // pred_check
    _
  $region27: #{separator_forward.13} parent=0 // pred_check_branch
    %483 = sbr.rel (0) target = $region29
  $region28: #{separator_forward.13} parent=0 // pred_region
    _
  $region29: #{separator_forward.13} parent=0 // pred_fallthru
    _

// kernel: separator_forward.12
$region0: #{separator_forward.12}
  #allocation0 [shape = 'u32[]', space=smem, size = 0x4, offset = 0x4, fixed_abs, tag = 'smem constant byte address 0x4 - core index']
  #allocation1 [shape = 'u32[144,128]{1,0:T(1,128)}', space=vmem, size = 0x12000, scoped, tag = 'internal scratch']
  %s0 = inlined_call_operand.vmem [shape: f32[64,8], index: 0, kind: input, shape index: {}]
  %s1 = inlined_call_operand.vmem [shape: f32[64,8], index: 1, kind: input, shape index: {}]
  %s2 = inlined_call_operand.vmem [shape: f32[8,8], index: 2, kind: input, shape index: {}]
  %s3 = inlined_call_operand.vmem [shape: f32[8,8], index: 3, kind: input, shape index: {}]
  %s4 = inlined_call_operand.vmem [shape: f32[1,8], index: 4, kind: input, shape index: {}]
  %s5 = inlined_call_operand.vmem [shape: f32[64,8], index: 5, kind: output, shape index: {}]
  %s6 = sld [smem:[#allocation0]]
  $region30: #{separator_forward.12} parent=0
    _
  %s8 = ssub.s32 1, %s6
  %s9 = scalar_select 0, %s8, %s6
  // Predicated region
  $region2: #{separator_forward.12} parent=0 // pred_check
    _
  $region3: #{separator_forward.12} parent=0 // pred_check_branch
    %11 = sbr.rel (0) target = $region5
  $region4: #{separator_forward.12} parent=0 // pred_region
    _
  $region5: #{separator_forward.12} parent=0 // pred_fallthru
    _
  // Predicated region
  $region6: #{separator_forward.12} parent=0 // pred_check
    _
  $region7: #{separator_forward.12} parent=0 // pred_check_branch
    %13 = sbr.rel (0) target = $region9
  $region8: #{separator_forward.12} parent=0 // pred_region
    _
  $region9: #{separator_forward.12} parent=0 // pred_fallthru
    _
  // Predicated region
  $region10: #{separator_forward.12} parent=0 // pred_check
    _
  $region11: #{separator_forward.12} parent=0 // pred_check_branch
    %15 = sbr.rel (0) target = $region13
  $region12: #{separator_forward.12} parent=0 // pred_region
    _
  $region13: #{separator_forward.12} parent=0 // pred_fallthru
    _
  // Predicated region
  $region14: #{separator_forward.12} parent=0 // pred_check
    _
  $region15: #{separator_forward.12} parent=0 // pred_check_branch
    %17 = sbr.rel (0) target = $region17
  $region16: #{separator_forward.12} parent=0 // pred_region
    _
  $region17: #{separator_forward.12} parent=0 // pred_fallthru
    _
  // Predicated region
  $region18: #{separator_forward.12} parent=0 // pred_check
    _
  $region19: #{separator_forward.12} parent=0 // pred_check_branch
    %19 = sbr.rel (0) target = $region21
  $region20: #{separator_forward.12} parent=0 // pred_region
    _
  $region21: #{separator_forward.12} parent=0 // pred_fallthru
    _
  %v20 = vld [vmem:[%s0] sm:$0xff]
  %v21 = vld [vmem:[%s0 + $0x8] sm:$0xff]
  %v22 = vld [vmem:[%s0 + $0x10] sm:$0xff]
  %v23 = vld [vmem:[%s0 + $0x18] sm:$0xff]
  %v24 = vld [vmem:[%s0 + $0x20] sm:$0xff]
  %v25 = vld [vmem:[%s0 + $0x28] sm:$0xff]
  %v26 = vld [vmem:[%s0 + $0x30] sm:$0xff]
  %v27 = vld [vmem:[%s0 + $0x38] sm:$0xff]
  %v28 = vld [vmem:[%s2] sm:$0xff]
  %v29 = vld [vmem:[%s1] sm:$0xff]
  %v30 = vld [vmem:[%s1 + $0x8] sm:$0xff]
  %v31 = vld [vmem:[%s1 + $0x10] sm:$0xff]
  %v32 = vld [vmem:[%s1 + $0x18] sm:$0xff]
  %v33 = vld [vmem:[%s1 + $0x20] sm:$0xff]
  %v34 = vld [vmem:[%s1 + $0x28] sm:$0xff]
  %v35 = vld [vmem:[%s1 + $0x30] sm:$0xff]
  %v36 = vld [vmem:[%s1 + $0x38] sm:$0xff]
  %v37 = vld [vmem:[%s3] sm:$0xff]
  %vm38 = vcmask 64512
  %v40 = vsel %vm38, %v29, 0
  %v43 = vsel %vm38, %v30, 0
  %v46 = vsel %vm38, %v31, 0
  %v49 = vsel %vm38, %v32, 0
  %v52 = vsel %vm38, %v33, 0
  %v55 = vsel %vm38, %v34, 0
  %v58 = vsel %vm38, %v35, 0
  %v61 = vsel %vm38, %v36, 0
  %63 = vmatprep.subr.mxu0 0.0
  %64 = vmatpush1.msra.mxu0 %v37
  %65 = vmatprep.subr.mxu0 0.0
  %66 = vmatpush1.msra.mxu0 0.0
  %67 = vmatprep.subr.mxu0 0.0
  %68 = vmatpush1.msra.mxu0 0.0
  %69 = vmatprep.subr.mxu0 0.0
  %70 = vmatpush1.msra.mxu0 0.0
  %71 = vmatprep.subr.mxu0 0.0
  %72 = vmatpush1.msra.mxu0 0.0
  %73 = vmatprep.subr.mxu0 0.0
  %74 = vmatpush1.msra.mxu0 0.0
  %75 = vmatprep.subr.mxu0 0.0
  %76 = vmatpush1.msra.mxu0 0.0
  %77 = vmatprep.subr.mxu0 0.0
  %78 = vmatpush1.msra.mxu0 0.0
  %79 = vmatprep.subr.mxu0 0.0
  %80 = vmatpush1.msra.mxu0 0.0
  %81 = vmatprep.subr.mxu0 0.0
  %82 = vmatpush1.msra.mxu0 0.0
  %83 = vmatprep.subr.mxu0 0.0
  %84 = vmatpush1.msra.mxu0 0.0
  %85 = vmatprep.subr.mxu0 0.0
  %86 = vmatpush1.msra.mxu0 0.0
  %87 = vmatprep.subr.mxu0 0.0
  %88 = vmatpush1.msra.mxu0 0.0
  %89 = vmatprep.subr.mxu0 0.0
  %90 = vmatpush1.msra.mxu0 0.0
  %91 = vmatprep.subr.mxu0 0.0
  %92 = vmatpush1.msra.mxu0 0.0
  %93 = vmatprep.subr.mxu0 0.0
  %94 = vmatpush1.msra.mxu0 0.0
  %95 = vmatprep.subr.mxu0 0.0
  %96 = vmatpush1.msra.mxu0 0.0
  %97 = vmatprep.subr.mxu0 0.0
  %98 = vmatpush1.msra.mxu0 0.0
  %99 = vmatprep.subr.mxu0 0.0
  %100 = vmatpush1.msra.mxu0 0.0
  %101 = vmatprep.subr.mxu0 0.0
  %102 = vmatpush1.msra.mxu0 0.0
  %103 = vmatprep.subr.mxu0 0.0
  %104 = vmatpush1.msra.mxu0 0.0
  %105 = vmatprep.subr.mxu0 0.0
  %106 = vmatpush1.msra.mxu0 0.0
  %107 = vmatprep.subr.mxu0 0.0
  %108 = vmatpush1.msra.mxu0 0.0
  %109 = vmatprep.subr.mxu0 0.0
  %110 = vmatpush1.msra.mxu0 0.0
  %111 = vmatprep.subr.mxu0 0.0
  %112 = vmatpush1.msra.mxu0 0.0
  %113 = vmatprep.subr.mxu0 0.0
  %114 = vmatpush1.msra.mxu0 0.0
  %115 = vmatprep.subr.mxu0 0.0
  %116 = vmatpush1.msra.mxu0 0.0
  %117 = vmatprep.subr.mxu0 0.0
  %118 = vmatpush1.msra.mxu0 0.0
  %119 = vmatprep.subr.mxu0 0.0
  %120 = vmatpush1.msra.mxu0 0.0
  %121 = vmatprep.subr.mxu0 0.0
  %122 = vmatpush1.msra.mxu0 0.0
  %123 = vmatprep.subr.mxu0 0.0
  %124 = vmatpush1.msra.mxu0 0.0
  %125 = vmatprep.subr.mxu0 0.0
  %126 = vmatpush1.msra.mxu0 0.0
  %127 = vmatprep.mubr.f32.mxu0 0.0
  %128 = vmatmul.mubr.f32.gmra.mrb[0].mxu0 %v40
  %v129 = vpop.f32.mrb[0].mxu0
  %v130 = vadd.f32 0.0, %v129
  %v131 = vpop.f32.mrb[0].mxu0
  %132 = vmatprep.mubr.f32.mxu0 0.0
  %133 = vmatmul.mubr.f32.gmra.mrb[0].mxu0 %v43
  %v134 = vpop.f32.mrb[0].mxu0
  %v135 = vadd.f32 0.0, %v134
  %v136 = vpop.f32.mrb[0].mxu0
  %137 = vmatprep.mubr.f32.mxu0 0.0
  %138 = vmatmul.mubr.f32.gmra.mrb[0].mxu0 %v46
  %v139 = vpop.f32.mrb[0].mxu0
  %v140 = vadd.f32 0.0, %v139
  %v141 = vpop.f32.mrb[0].mxu0
  %142 = vmatprep.mubr.f32.mxu0 0.0
  %143 = vmatmul.mubr.f32.gmra.mrb[0].mxu0 %v49
  %v144 = vpop.f32.mrb[0].mxu0
  %v145 = vadd.f32 0.0, %v144
  %v146 = vpop.f32.mrb[0].mxu0
  %147 = vmatprep.mubr.f32.mxu0 0.0
  %148 = vmatmul.mubr.f32.gmra.mrb[0].mxu0 %v52
  %v149 = vpop.f32.mrb[0].mxu0
  %v150 = vadd.f32 0.0, %v149
  %v151 = vpop.f32.mrb[0].mxu0
  %152 = vmatprep.mubr.f32.mxu0 0.0
  %153 = vmatmul.mubr.f32.gmra.mrb[0].mxu0 %v55
  %v154 = vpop.f32.mrb[0].mxu0
  %v155 = vadd.f32 0.0, %v154
  %v156 = vpop.f32.mrb[0].mxu0
  %157 = vmatprep.mubr.f32.mxu0 0.0
  %158 = vmatmul.mubr.f32.gmra.mrb[0].mxu0 %v58
  %v159 = vpop.f32.mrb[0].mxu0
  %v160 = vadd.f32 0.0, %v159
  %v161 = vpop.f32.mrb[0].mxu0
  %162 = vmatprep.mubr.f32.mxu0 0.0
  %163 = vmatmul.mubr.f32.gmra.mrb[0].mxu0 %v61
  %v164 = vpop.f32.mrb[0].mxu0
  %v165 = vadd.f32 0.0, %v164
  %v166 = vpop.f32.mrb[0].mxu0
  %167 = vdwg.mxu0
  %v169 = vsel %vm38, %v20, 0
  %v172 = vsel %vm38, %v21, 0
  %v175 = vsel %vm38, %v22, 0
  %v178 = vsel %vm38, %v23, 0
  %v181 = vsel %vm38, %v24, 0
  %v184 = vsel %vm38, %v25, 0
  %v187 = vsel %vm38, %v26, 0
  %v190 = vsel %vm38, %v27, 0
  %192 = vmatprep.subr.mxu0 0.0
  %193 = vmatpush1.msra.mxu0 %v28
  %194 = vmatprep.subr.mxu0 0.0
  %195 = vmatpush1.msra.mxu0 0.0
  %196 = vmatprep.subr.mxu0 0.0
  %197 = vmatpush1.msra.mxu0 0.0
  %198 = vmatprep.subr.mxu0 0.0
  %199 = vmatpush1.msra.mxu0 0.0
  %200 = vmatprep.subr.mxu0 0.0
  %201 = vmatpush1.msra.mxu0 0.0
  %202 = vmatprep.subr.mxu0 0.0
  %203 = vmatpush1.msra.mxu0 0.0
  %204 = vmatprep.subr.mxu0 0.0
  %205 = vmatpush1.msra.mxu0 0.0
  %206 = vmatprep.subr.mxu0 0.0
  %207 = vmatpush1.msra.mxu0 0.0
  %208 = vmatprep.subr.mxu0 0.0
  %209 = vmatpush1.msra.mxu0 0.0
  %210 = vmatprep.subr.mxu0 0.0
  %211 = vmatpush1.msra.mxu0 0.0
  %212 = vmatprep.subr.mxu0 0.0
  %213 = vmatpush1.msra.mxu0 0.0
  %214 = vmatprep.subr.mxu0 0.0
  %215 = vmatpush1.msra.mxu0 0.0
  %216 = vmatprep.subr.mxu0 0.0
  %217 = vmatpush1.msra.mxu0 0.0
  %218 = vmatprep.subr.mxu0 0.0
  %219 = vmatpush1.msra.mxu0 0.0
  %220 = vmatprep.subr.mxu0 0.0
  %221 = vmatpush1.msra.mxu0 0.0
  %222 = vmatprep.subr.mxu0 0.0
  %223 = vmatpush1.msra.mxu0 0.0
  %224 = vmatprep.subr.mxu0 0.0
  %225 = vmatpush1.msra.mxu0 0.0
  %226 = vmatprep.subr.mxu0 0.0
  %227 = vmatpush1.msra.mxu0 0.0
  %228 = vmatprep.subr.mxu0 0.0
  %229 = vmatpush1.msra.mxu0 0.0
  %230 = vmatprep.subr.mxu0 0.0
  %231 = vmatpush1.msra.mxu0 0.0
  %232 = vmatprep.subr.mxu0 0.0
  %233 = vmatpush1.msra.mxu0 0.0
  %234 = vmatprep.subr.mxu0 0.0
  %235 = vmatpush1.msra.mxu0 0.0
  %236 = vmatprep.subr.mxu0 0.0
  %237 = vmatpush1.msra.mxu0 0.0
  %238 = vmatprep.subr.mxu0 0.0
  %239 = vmatpush1.msra.mxu0 0.0
  %240 = vmatprep.subr.mxu0 0.0
  %241 = vmatpush1.msra.mxu0 0.0
  %242 = vmatprep.subr.mxu0 0.0
  %243 = vmatpush1.msra.mxu0 0.0
  %244 = vmatprep.subr.mxu0 0.0
  %245 = vmatpush1.msra.mxu0 0.0
  %246 = vmatprep.subr.mxu0 0.0
  %247 = vmatpush1.msra.mxu0 0.0
  %248 = vmatprep.subr.mxu0 0.0
  %249 = vmatpush1.msra.mxu0 0.0
  %250 = vmatprep.subr.mxu0 0.0
  %251 = vmatpush1.msra.mxu0 0.0
  %252 = vmatprep.subr.mxu0 0.0
  %253 = vmatpush1.msra.mxu0 0.0
  %254 = vmatprep.subr.mxu0 0.0
  %255 = vmatpush1.msra.mxu0 0.0
  %256 = vmatprep.mubr.f32.mxu0 0.0
  %257 = vmatmul.mubr.f32.gmra.mrb[0].mxu0 %v169
  %v258 = vpop.f32.mrb[0].mxu0
  %v259 = vadd.f32 %v130, %v258
  %v260 = vpop.f32.mrb[0].mxu0
  %261 = vmatprep.mubr.f32.mxu0 0.0
  %262 = vmatmul.mubr.f32.gmra.mrb[0].mxu0 %v172
  %v263 = vpop.f32.mrb[0].mxu0
  %v264 = vadd.f32 %v135, %v263
  %v265 = vpop.f32.mrb[0].mxu0
  %266 = vmatprep.mubr.f32.mxu0 0.0
  %267 = vmatmul.mubr.f32.gmra.mrb[0].mxu0 %v175
  %v268 = vpop.f32.mrb[0].mxu0
  %v269 = vadd.f32 %v140, %v268
  %v270 = vpop.f32.mrb[0].mxu0
  %271 = vmatprep.mubr.f32.mxu0 0.0
  %272 = vmatmul.mubr.f32.gmra.mrb[0].mxu0 %v178
  %v273 = vpop.f32.mrb[0].mxu0
  %v274 = vadd.f32 %v145, %v273
  %v275 = vpop.f32.mrb[0].mxu0
  %276 = vmatprep.mubr.f32.mxu0 0.0
  %277 = vmatmul.mubr.f32.gmra.mrb[0].mxu0 %v181
  %v278 = vpop.f32.mrb[0].mxu0
  %v279 = vadd.f32 %v150, %v278
  %v280 = vpop.f32.mrb[0].mxu0
  %281 = vmatprep.mubr.f32.mxu0 0.0
  %282 = vmatmul.mubr.f32.gmra.mrb[0].mxu0 %v184
  %v283 = vpop.f32.mrb[0].mxu0
  %v284 = vadd.f32 %v155, %v283
  %v285 = vpop.f32.mrb[0].mxu0
  %286 = vmatprep.mubr.f32.mxu0 0.0
  %287 = vmatmul.mubr.f32.gmra.mrb[0].mxu0 %v187
  %v288 = vpop.f32.mrb[0].mxu0
  %v289 = vadd.f32 %v160, %v288
  %v290 = vpop.f32.mrb[0].mxu0
  %291 = vmatprep.mubr.f32.mxu0 0.0
  %292 = vmatmul.mubr.f32.gmra.mrb[0].mxu0 %v190
  %v293 = vpop.f32.mrb[0].mxu0
  %v294 = vadd.f32 %v165, %v293
  %v295 = vpop.f32.mrb[0].mxu0
  %296 = vdwg.mxu0
  %v297 = vld [vmem:[%s4] sm:$0x1]
  %v299 = vlaneseq
  %v300 = vshrl.u32 %v299, 7
  %v301 = vsub.s32 0, %v300
  %v302 = vrot.slane %v297, %v301
  %v304 = vadd.f32 %v259, %v302
  %v305 = vadd.f32 %v264, %v302
  %v306 = vadd.f32 %v269, %v302
  %v307 = vadd.f32 %v274, %v302
  %v308 = vadd.f32 %v279, %v302
  %v309 = vadd.f32 %v284, %v302
  %v310 = vadd.f32 %v289, %v302
  %v311 = vadd.f32 %v294, %v302
  %312 = vst.msk [vmem:[%s5] sm:$0xff] %vm38, %v304
  %313 = vst.msk [vmem:[%s5 + $0x8] sm:$0xff] %vm38, %v305
  %314 = vst.msk [vmem:[%s5 + $0x10] sm:$0xff] %vm38, %v306
  %315 = vst.msk [vmem:[%s5 + $0x18] sm:$0xff] %vm38, %v307
  %316 = vst.msk [vmem:[%s5 + $0x20] sm:$0xff] %vm38, %v308
  %317 = vst.msk [vmem:[%s5 + $0x28] sm:$0xff] %vm38, %v309
  %318 = vst.msk [vmem:[%s5 + $0x30] sm:$0xff] %vm38, %v310
  %319 = vst.msk [vmem:[%s5 + $0x38] sm:$0xff] %vm38, %v311
  // Predicated region
  $region22: #{separator_forward.12} parent=0 // pred_check
    _
  $region23: #{separator_forward.12} parent=0 // pred_check_branch
    %321 = sbr.rel (0) target = $region25
  $region24: #{separator_forward.12} parent=0 // pred_region
    _
  $region25: #{separator_forward.12} parent=0 // pred_fallthru
    _
  // Predicated region
  $region26: #{separator_forward.12} parent=0 // pred_check
    _
  $region27: #{separator_forward.12} parent=0 // pred_check_branch
    %323 = sbr.rel (0) target = $region29
  $region28: #{separator_forward.12} parent=0 // pred_region
    _
  $region29: #{separator_forward.12} parent=0 // pred_fallthru
    _

// kernel: separator_forward.11
$region0: #{separator_forward.11}
  #allocation0 [shape = 'u32[]', space=smem, size = 0x4, offset = 0x4, fixed_abs, tag = 'smem constant byte address 0x4 - core index']
  #allocation1 [shape = 'u32[144,128]{1,0:T(1,128)}', space=vmem, size = 0x12000, scoped, tag = 'internal scratch']
  %s0 = inlined_call_operand.vmem [shape: f32[2,8,8], index: 0, kind: input, shape index: {}]
  %s1 = inlined_call_operand.vmem [shape: f32[8,32], index: 1, kind: input, shape index: {}]
  %s2 = inlined_call_operand.vmem [shape: f32[1,32], index: 2, kind: input, shape index: {}]
  %s3 = inlined_call_operand.vmem [shape: f32[8,32], index: 3, kind: input, shape index: {}]
  %s4 = inlined_call_operand.vmem [shape: f32[1,32], index: 4, kind: input, shape index: {}]
  %s5 = inlined_call_operand.vmem [shape: f32[32,16], index: 5, kind: input, shape index: {}]
  %s6 = inlined_call_operand.vmem [shape: f32[1,16], index: 6, kind: input, shape index: {}]
  %s7 = inlined_call_operand.vmem [shape: f32[1,8], index: 7, kind: input, shape index: {}]
  %s8 = inlined_call_operand.vmem [shape: f32[1,8], index: 8, kind: input, shape index: {}]
  %s9 = inlined_call_operand.vmem [shape: f32[2,2,8,8], index: 9, kind: output, shape index: {}]
  %s10 = sld [smem:[#allocation0]]
  $region69: #{separator_forward.11} parent=0
    _
  %s12 = ssub.s32 1, %s10
  %s13 = scalar_select 0, %s12, %s10
  loop: start=0, step=1, limit=4
  $region2: #{separator_forward.11} parent=0 // loop_pre_header
    _
  $region3: #{separator_forward.11} parent=0 // loop_header
    %s15 = sphi 0, %s19
    %p16 = scmp.ge.s32.totalorder %s15, 4
    %s25 = sphi 0, %s27
    %s28 = sphi 0, %s25
    %s29 = sphi 0, %s28
    %s45 = sphi 0, %s29
    %s49 = sphi 0, %s49
    %s51 = sphi 0, %s49
    %s52 = sphi 0, %s51
    %s66 = sphi 0, %s52
    %s70 = sphi 0, %s70
    %s72 = sphi 0, %s70
    %s73 = sphi 0, %s72
    %s87 = sphi 0, %s73
    %s91 = sphi 0, %s91
    %s93 = sphi 0, %s91
    %s94 = sphi 0, %s93
    %s108 = sphi 0, %s94
    %s112 = sphi 0, %s112
    %s114 = sphi 0, %s112
    %s115 = sphi 0, %s114
    %s129 = sphi 0, %s115
    %s133 = sphi 0, %s133
    %s135 = sphi 0, %s133
    %s136 = sphi 0, %s135
    %s150 = sphi 0, %s136
    %s154 = sphi 0, %s154
    %s156 = sphi 0, %s154
    %s157 = sphi 0, %s156
    %s171 = sphi 0, %s157
    %s175 = sphi 0, %s175
    %s177 = sphi 0, %s175
    %s178 = sphi 0, %s177
    %s192 = sphi 0, %s178
    %s196 = sphi 0, %s196
    %s198 = sphi 0, %s196
    %s199 = sphi 0, %s198
    %s213 = sphi 0, %s199
    %s219 = sphi 0, %s221
    %s222 = sphi 0, %s219
    %s223 = sphi 0, %s222
    %s239 = sphi 0, %s223
  $region4: #{separator_forward.11} parent=0 // loop_header_branch
    %18 = sbr.rel (%p16) target = $region8
  $region5: #{separator_forward.11} parent=0 // loop_body
    %s20 = ssub.s32 %s15, 1
    %s21 = ssub.s32 %s15, 2
    %s22 = sadd.s32 %s15, 1
    %s23 = ssub.s32 %s15, %s22
    %p24 = scmp.eq.s32.totalorder %s23, 0
    %s26 = sadd.s32 %s25, 1
    %s27 = scalar_select %p24, %s25, %s26
    %p30 = pneg %p24
    %p31 = scmp.eq.s32.totalorder %s15, 1
    %p32 = por %p30, %p31
    %p33 = scmp.ne.s32.totalorder %s25, %s28
    %p34 = scmp.eq.s32.totalorder %s15, 0
    %p35 = por %p33, %p34
    %p36 = scmp.ne.s32.totalorder %s25, %s28
    %p37 = scmp.eq.s32.totalorder %s20, 1
    %p38 = por %p36, %p37
    %p39 = scmp.ne.s32.totalorder %s28, %s29
    %p40 = scmp.eq.s32.totalorder %s20, 0
    %p41 = por %p39, %p40
    %p42 = scmp.ne.s32.totalorder %s28, %s29
    %p43 = scmp.eq.s32.totalorder %s21, 1
    %p44 = por %p42, %p43
    %p46 = scmp.ne.s32.totalorder %s29, %s45
    %p47 = scmp.eq.s32.totalorder %s21, 0
    %p48 = por %p46, %p47
    %s50 = sadd.s32 %s49, 1
    %p53 = scmp.eq.s32.totalorder %s15, 1
    %p54 = scmp.ne.s32.totalorder %s49, %s51
    %p55 = scmp.eq.s32.totalorder %s15, 0
    %p56 = por %p54, %p55
    %p57 = scmp.ne.s32.totalorder %s49, %s51
    %p58 = scmp.eq.s32.totalorder %s20, 1
    %p59 = por %p57, %p58
    %p60 = scmp.ne.s32.totalorder %s51, %s52
    %p61 = scmp.eq.s32.totalorder %s20, 0
    %p62 = por %p60, %p61
    %p63 = scmp.ne.s32.totalorder %s51, %s52
    %p64 = scmp.eq.s32.totalorder %s21, 1
    %p65 = por %p63, %p64
    %p67 = scmp.ne.s32.totalorder %s52, %s66
    %p68 = scmp.eq.s32.totalorder %s21, 0
    %p69 = por %p67, %p68
    %s71 = sadd.s32 %s70, 1
    %p74 = scmp.eq.s32.totalorder %s15, 1
    %p75 = scmp.ne.s32.totalorder %s70, %s72
    %p76 = scmp.eq.s32.totalorder %s15, 0
    %p77 = por %p75, %p76
    %p78 = scmp.ne.s32.totalorder %s70, %s72
    %p79 = scmp.eq.s32.totalorder %s20, 1
    %p80 = por %p78, %p79
    %p81 = scmp.ne.s32.totalorder %s72, %s73
    %p82 = scmp.eq.s32.totalorder %s20, 0
    %p83 = por %p81, %p82
    %p84 = scmp.ne.s32.totalorder %s72, %s73
    %p85 = scmp.eq.s32.totalorder %s21, 1
    %p86 = por %p84, %p85
    %p88 = scmp.ne.s32.totalorder %s73, %s87
    %p89 = scmp.eq.s32.totalorder %s21, 0
    %p90 = por %p88, %p89
    %s92 = sadd.s32 %s91, 1
    %p95 = scmp.eq.s32.totalorder %s15, 1
    %p96 = scmp.ne.s32.totalorder %s91, %s93
    %p97 = scmp.eq.s32.totalorder %s15, 0
    %p98 = por %p96, %p97
    %p99 = scmp.ne.s32.totalorder %s91, %s93
    %p100 = scmp.eq.s32.totalorder %s20, 1
    %p101 = por %p99, %p100
    %p102 = scmp.ne.s32.totalorder %s93, %s94
    %p103 = scmp.eq.s32.totalorder %s20, 0
    %p104 = por %p102, %p103
    %p105 = scmp.ne.s32.totalorder %s93, %s94
    %p106 = scmp.eq.s32.totalorder %s21, 1
    %p107 = por %p105, %p106
    %p109 = scmp.ne.s32.totalorder %s94, %s108
    %p110 = scmp.eq.s32.totalorder %s21, 0
    %p111 = por %p109, %p110
    %s113 = sadd.s32 %s112, 1
    %p116 = scmp.eq.s32.totalorder %s15, 1
    %p117 = scmp.ne.s32.totalorder %s112, %s114
    %p118 = scmp.eq.s32.totalorder %s15, 0
    %p119 = por %p117, %p118
    %p120 = scmp.ne.s32.totalorder %s112, %s114
    %p121 = scmp.eq.s32.totalorder %s20, 1
    %p122 = por %p120, %p121
    %p123 = scmp.ne.s32.totalorder %s114, %s115
    %p124 = scmp.eq.s32.totalorder %s20, 0
    %p125 = por %p123, %p124
    %p126 = scmp.ne.s32.totalorder %s114, %s115
    %p127 = scmp.eq.s32.totalorder %s21, 1
    %p128 = por %p126, %p127
    %p130 = scmp.ne.s32.totalorder %s115, %s129
    %p131 = scmp.eq.s32.totalorder %s21, 0
    %p132 = por %p130, %p131
    %s134 = sadd.s32 %s133, 1
    %p137 = scmp.eq.s32.totalorder %s15, 1
    %p138 = scmp.ne.s32.totalorder %s133, %s135
    %p139 = scmp.eq.s32.totalorder %s15, 0
    %p140 = por %p138, %p139
    %p141 = scmp.ne.s32.totalorder %s133, %s135
    %p142 = scmp.eq.s32.totalorder %s20, 1
    %p143 = por %p141, %p142
    %p144 = scmp.ne.s32.totalorder %s135, %s136
    %p145 = scmp.eq.s32.totalorder %s20, 0
    %p146 = por %p144, %p145
    %p147 = scmp.ne.s32.totalorder %s135, %s136
    %p148 = scmp.eq.s32.totalorder %s21, 1
    %p149 = por %p147, %p148
    %p151 = scmp.ne.s32.totalorder %s136, %s150
    %p152 = scmp.eq.s32.totalorder %s21, 0
    %p153 = por %p151, %p152
    %s155 = sadd.s32 %s154, 1
    %p158 = scmp.eq.s32.totalorder %s15, 1
    %p159 = scmp.ne.s32.totalorder %s154, %s156
    %p160 = scmp.eq.s32.totalorder %s15, 0
    %p161 = por %p159, %p160
    %p162 = scmp.ne.s32.totalorder %s154, %s156
    %p163 = scmp.eq.s32.totalorder %s20, 1
    %p164 = por %p162, %p163
    %p165 = scmp.ne.s32.totalorder %s156, %s157
    %p166 = scmp.eq.s32.totalorder %s20, 0
    %p167 = por %p165, %p166
    %p168 = scmp.ne.s32.totalorder %s156, %s157
    %p169 = scmp.eq.s32.totalorder %s21, 1
    %p170 = por %p168, %p169
    %p172 = scmp.ne.s32.totalorder %s157, %s171
    %p173 = scmp.eq.s32.totalorder %s21, 0
    %p174 = por %p172, %p173
    %s176 = sadd.s32 %s175, 1
    %p179 = scmp.eq.s32.totalorder %s15, 1
    %p180 = scmp.ne.s32.totalorder %s175, %s177
    %p181 = scmp.eq.s32.totalorder %s15, 0
    %p182 = por %p180, %p181
    %p183 = scmp.ne.s32.totalorder %s175, %s177
    %p184 = scmp.eq.s32.totalorder %s20, 1
    %p185 = por %p183, %p184
    %p186 = scmp.ne.s32.totalorder %s177, %s178
    %p187 = scmp.eq.s32.totalorder %s20, 0
    %p188 = por %p186, %p187
    %p189 = scmp.ne.s32.totalorder %s177, %s178
    %p190 = scmp.eq.s32.totalorder %s21, 1
    %p191 = por %p189, %p190
    %p193 = scmp.ne.s32.totalorder %s178, %s192
    %p194 = scmp.eq.s32.totalorder %s21, 0
    %p195 = por %p193, %p194
    %s197 = sadd.s32 %s196, 1
    %p200 = scmp.eq.s32.totalorder %s15, 1
    %p201 = scmp.ne.s32.totalorder %s196, %s198
    %p202 = scmp.eq.s32.totalorder %s15, 0
    %p203 = por %p201, %p202
    %p204 = scmp.ne.s32.totalorder %s196, %s198
    %p205 = scmp.eq.s32.totalorder %s20, 1
    %p206 = por %p204, %p205
    %p207 = scmp.ne.s32.totalorder %s198, %s199
    %p208 = scmp.eq.s32.totalorder %s20, 0
    %p209 = por %p207, %p208
    %p210 = scmp.ne.s32.totalorder %s198, %s199
    %p211 = scmp.eq.s32.totalorder %s21, 1
    %p212 = por %p210, %p211
    %p214 = scmp.ne.s32.totalorder %s199, %s213
    %p215 = scmp.eq.s32.totalorder %s21, 0
    %p216 = por %p214, %p215
    %s217 = ssub.s32 %s15, %s22
    %p218 = scmp.eq.s32.totalorder %s217, 0
    %s220 = sadd.s32 %s219, 1
    %s221 = scalar_select %p218, %s219, %s220
    %p224 = pneg %p218
    %p225 = scmp.eq.s32.totalorder %s15, 1
    %p226 = por %p224, %p225
    %p227 = scmp.ne.s32.totalorder %s219, %s222
    %p228 = scmp.eq.s32.totalorder %s15, 0
    %p229 = por %p227, %p228
    %p230 = scmp.ne.s32.totalorder %s219, %s222
    %p231 = scmp.eq.s32.totalorder %s20, 1
    %p232 = por %p230, %p231
    %p233 = scmp.ne.s32.totalorder %s222, %s223
    %p234 = scmp.eq.s32.totalorder %s20, 0
    %p235 = por %p233, %p234
    %p236 = scmp.ne.s32.totalorder %s222, %s223
    %p237 = scmp.eq.s32.totalorder %s21, 1
    %p238 = por %p236, %p237
    %p240 = scmp.ne.s32.totalorder %s223, %s239
    %p241 = scmp.eq.s32.totalorder %s21, 0
    %p242 = por %p240, %p241
    %p243 = scmp.le.s32.totalorder 1, %s15
    %p244 = scmp.lt.s32.totalorder %s15, 3
    %p245 = pnand %p243, %p244
    %p246 = pneg %p245
    // Predicated region
    $region9: #{separator_forward.11} parent=5 // pred_check
      _
    $region10: #{separator_forward.11} parent=5 // pred_check_branch
      %248 = sbr.rel (%p245) target = $region12
    $region11: #{separator_forward.11} parent=5 // pred_region
      %s249 = ssub.s32 %s15, 1
      // Predicated region
      $region13: #{separator_forward.11} parent=11 // pred_check
        %p250 = pneg %p62
      $region14: #{separator_forward.11} parent=11 // pred_check_branch
        %252 = sbr.rel (%p250) target = $region16
      $region15: #{separator_forward.11} parent=11 // pred_region
        _
      $region16: #{separator_forward.11} parent=11 // pred_fallthru
        _
      // Predicated region
      $region17: #{separator_forward.11} parent=11 // pred_check
        %p253 = pneg %p83
      $region18: #{separator_forward.11} parent=11 // pred_check_branch
        %255 = sbr.rel (%p253) target = $region20
      $region19: #{separator_forward.11} parent=11 // pred_region
        _
      $region20: #{separator_forward.11} parent=11 // pred_fallthru
        _
      // Predicated region
      $region21: #{separator_forward.11} parent=11 // pred_check
        %p256 = pneg %p104
      $region22: #{separator_forward.11} parent=11 // pred_check_branch
        %258 = sbr.rel (%p256) target = $region24
      $region23: #{separator_forward.11} parent=11 // pred_region
        _
      $region24: #{separator_forward.11} parent=11 // pred_fallthru
        _
      // Predicated region
      $region25: #{separator_forward.11} parent=11 // pred_check
        %p259 = pneg %p125
      $region26: #{separator_forward.11} parent=11 // pred_check_branch
        %261 = sbr.rel (%p259) target = $region28
      $region27: #{separator_forward.11} parent=11 // pred_region
        _
      $region28: #{separator_forward.11} parent=11 // pred_fallthru
        _
      // Predicated region
      $region29: #{separator_forward.11} parent=11 // pred_check
        %p262 = pneg %p146
      $region30: #{separator_forward.11} parent=11 // pred_check_branch
        %264 = sbr.rel (%p262) target = $region32
      $region31: #{separator_forward.11} parent=11 // pred_region
        _
      $region32: #{separator_forward.11} parent=11 // pred_fallthru
        _
      // Predicated region
      $region33: #{separator_forward.11} parent=11 // pred_check
        %p265 = pneg %p167
      $region34: #{separator_forward.11} parent=11 // pred_check_branch
        %267 = sbr.rel (%p265) target = $region36
      $region35: #{separator_forward.11} parent=11 // pred_region
        _
      $region36: #{separator_forward.11} parent=11 // pred_fallthru
        _
      // Predicated region
      $region37: #{separator_forward.11} parent=11 // pred_check
        %p268 = pneg %p188
      $region38: #{separator_forward.11} parent=11 // pred_check_branch
        %270 = sbr.rel (%p268) target = $region40
      $region39: #{separator_forward.11} parent=11 // pred_region
        _
      $region40: #{separator_forward.11} parent=11 // pred_fallthru
        _
      // Predicated region
      $region41: #{separator_forward.11} parent=11 // pred_check
        %p271 = pneg %p209
      $region42: #{separator_forward.11} parent=11 // pred_check_branch
        %273 = sbr.rel (%p271) target = $region44
      $region43: #{separator_forward.11} parent=11 // pred_region
        _
      $region44: #{separator_forward.11} parent=11 // pred_fallthru
        _
    $region12: #{separator_forward.11} parent=5 // pred_fallthru
      _
    %p274 = scmp.lt.s32.totalorder %s15, 2
    // Predicated region
    $region45: #{separator_forward.11} parent=5 // pred_check
      %p275 = pneg %p274
    $region46: #{separator_forward.11} parent=5 // pred_check_branch
      %277 = sbr.rel (%p275) target = $region48
    $region47: #{separator_forward.11} parent=5 // pred_region
      // Predicated region
      $region49: #{separator_forward.11} parent=47 // pred_check
        %p278 = pneg %p35
      $region50: #{separator_forward.11} parent=47 // pred_check_branch
        %280 = sbr.rel (%p278) target = $region52
      $region51: #{separator_forward.11} parent=47 // pred_region
        %p281 = scmp.lt.s32.totalorder %s15, 1
        %s282 = scalar_select %p281, %s15, 1
        %s283 = smul.addr %s282, 8
        %s284 = scalar_lea.vmem %s0, %s283
      $region52: #{separator_forward.11} parent=47 // pred_fallthru
        _
    $region48: #{separator_forward.11} parent=5 // pred_fallthru
      _
    %p285 = scmp.le.s32.totalorder 1, %s15
    %p286 = scmp.lt.s32.totalorder %s15, 3
    %p287 = pnand %p285, %p286
    %p288 = pneg %p287
    // Predicated region
    $region53: #{separator_forward.11} parent=5 // pred_check
      _
    $region54: #{separator_forward.11} parent=5 // pred_check_branch
      %290 = sbr.rel (%p287) target = $region56
    $region55: #{separator_forward.11} parent=5 // pred_region
      %s291 = ssub.s32 %s15, 1
      %p292 = scmp.lt.s32.totalorder %s20, 1
      %s293 = scalar_select %p292, %s20, 1
      %s294 = smul.addr %s293, 8
      %s295 = scalar_lea.vmem %s0, %s294
      %p296 = pneg %p41
      %p297 = pneg %p38
      %p298 = pneg %p62
      %p299 = pneg %p59
      %p300 = pneg %p83
      %p301 = pneg %p80
      %p302 = pneg %p104
      %p303 = pneg %p101
      %p304 = pneg %p125
      %p305 = pneg %p122
      %p306 = pneg %p146
      %p307 = pneg %p143
      %p308 = pneg %p167
      %p309 = pneg %p164
      %p310 = pneg %p188
      %p311 = pneg %p185
      %p312 = pneg %p209
      %p313 = pneg %p206
      %p314 = pneg %p235
      %p315 = pneg %p232
      %p316 = scmp.lt.s32.totalorder %s20, 1
      %s317 = scalar_select %p316, %s20, 1
      %s318 = smul.addr %s317, 2
      %s319 = smul.addr %s318, 8
      %s320 = scalar_lea.vmem %s9, %s319
      %p321 = scmp.lt.s32.totalorder %s20, 1
      %s322 = scalar_select %p321, %s20, 1
      %s323 = smul.addr %s322, 8
      %s324 = scalar_lea.vmem %s0, %s323
      %p325 = scmp.lt.s32.totalorder %s20, 1
      %s326 = scalar_select %p325, %s20, 1
      %s327 = smul.addr %s326, 2
      %s328 = smul.addr %s327, 8
      %s329 = scalar_lea.vmem %s9, %s328
      %v330 = vld [vmem:[%s324] sm:$0xff]
      %v331 = vld [vmem:[%s1] sm:$0xff]
      %v332 = vld [vmem:[%s2] sm:$0x1]
      %v334 = vlaneseq
      %v335 = vshrl.u32 %v334, 7
      %v336 = vsub.s32 0, %v335
      %v337 = vrot.slane %v332, %v336
      %vm339 = vcmask 64512
      %v341 = vsel %vm339, %v330, 0
      %343 = vmatprep.subr.mxu0 0.0
      %344 = vmatpush1.msra.mxu0 %v331
      %345 = vmatprep.subr.mxu0 0.0
      %346 = vmatpush1.msra.mxu0 0.0
      %347 = vmatprep.subr.mxu0 0.0
      %348 = vmatpush1.msra.mxu0 0.0
      %349 = vmatprep.subr.mxu0 0.0
      %350 = vmatpush1.msra.mxu0 0.0
      %351 = vmatprep.subr.mxu0 0.0
      %352 = vmatpush1.msra.mxu0 0.0
      %353 = vmatprep.subr.mxu0 0.0
      %354 = vmatpush1.msra.mxu0 0.0
      %355 = vmatprep.subr.mxu0 0.0
      %356 = vmatpush1.msra.mxu0 0.0
      %357 = vmatprep.subr.mxu0 0.0
      %358 = vmatpush1.msra.mxu0 0.0
      %359 = vmatprep.subr.mxu0 0.0
      %360 = vmatpush1.msra.mxu0 0.0
      %361 = vmatprep.subr.mxu0 0.0
      %362 = vmatpush1.msra.mxu0 0.0
      %363 = vmatprep.subr.mxu0 0.0
      %364 = vmatpush1.msra.mxu0 0.0
      %365 = vmatprep.subr.mxu0 0.0
      %366 = vmatpush1.msra.mxu0 0.0
      %367 = vmatprep.subr.mxu0 0.0
      %368 = vmatpush1.msra.mxu0 0.0
      %369 = vmatprep.subr.mxu0 0.0
      %370 = vmatpush1.msra.mxu0 0.0
      %371 = vmatprep.subr.mxu0 0.0
      %372 = vmatpush1.msra.mxu0 0.0
      %373 = vmatprep.subr.mxu0 0.0
      %374 = vmatpush1.msra.mxu0 0.0
      %375 = vmatprep.subr.mxu0 0.0
      %376 = vmatpush1.msra.mxu0 0.0
      %377 = vmatprep.subr.mxu0 0.0
      %378 = vmatpush1.msra.mxu0 0.0
      %379 = vmatprep.subr.mxu0 0.0
      %380 = vmatpush1.msra.mxu0 0.0
      %381 = vmatprep.subr.mxu0 0.0
      %382 = vmatpush1.msra.mxu0 0.0
      %383 = vmatprep.subr.mxu0 0.0
      %384 = vmatpush1.msra.mxu0 0.0
      %385 = vmatprep.subr.mxu0 0.0
      %386 = vmatpush1.msra.mxu0 0.0
      %387 = vmatprep.subr.mxu0 0.0
      %388 = vmatpush1.msra.mxu0 0.0
      %389 = vmatprep.subr.mxu0 0.0
      %390 = vmatpush1.msra.mxu0 0.0
      %391 = vmatprep.subr.mxu0 0.0
      %392 = vmatpush1.msra.mxu0 0.0
      %393 = vmatprep.subr.mxu0 0.0
      %394 = vmatpush1.msra.mxu0 0.0
      %395 = vmatprep.subr.mxu0 0.0
      %396 = vmatpush1.msra.mxu0 0.0
      %397 = vmatprep.subr.mxu0 0.0
      %398 = vmatpush1.msra.mxu0 0.0
      %399 = vmatprep.subr.mxu0 0.0
      %400 = vmatpush1.msra.mxu0 0.0
      %401 = vmatprep.subr.mxu0 0.0
      %402 = vmatpush1.msra.mxu0 0.0
      %403 = vmatprep.subr.mxu0 0.0
      %404 = vmatpush1.msra.mxu0 0.0
      %405 = vmatprep.subr.mxu0 0.0
      %406 = vmatpush1.msra.mxu0 0.0
      %407 = vmatprep.mubr.f32.mxu0 0.0
      %408 = vmatmul.mubr.f32.gmra.mrb[0].mxu0 %v341
      %v409 = vpop.f32.mrb[0].mxu0
      %v410 = vadd.f32 %v337, %v409
      %v411 = vpop.f32.mrb[0].mxu0
      %412 = vdwg.mxu0
      %v413 = vld [vmem:[%s3] sm:$0xff]
      %v414 = vld [vmem:[%s4] sm:$0x1]
      %v416 = vlaneseq
      %v417 = vshrl.u32 %v416, 7
      %v418 = vsub.s32 0, %v417
      %v419 = vrot.slane %v414, %v418
      %421 = vmatprep.subr.mxu0 0.0
      %422 = vmatpush1.msra.mxu0 %v413
      %423 = vmatprep.subr.mxu0 0.0
      %424 = vmatpush1.msra.mxu0 0.0
      %425 = vmatprep.subr.mxu0 0.0
      %426 = vmatpush1.msra.mxu0 0.0
      %427 = vmatprep.subr.mxu0 0.0
      %428 = vmatpush1.msra.mxu0 0.0
      %429 = vmatprep.subr.mxu0 0.0
      %430 = vmatpush1.msra.mxu0 0.0
      %431 = vmatprep.subr.mxu0 0.0
      %432 = vmatpush1.msra.mxu0 0.0
      %433 = vmatprep.subr.mxu0 0.0
      %434 = vmatpush1.msra.mxu0 0.0
      %435 = vmatprep.subr.mxu0 0.0
      %436 = vmatpush1.msra.mxu0 0.0
      %437 = vmatprep.subr.mxu0 0.0
      %438 = vmatpush1.msra.mxu0 0.0
      %439 = vmatprep.subr.mxu0 0.0
      %440 = vmatpush1.msra.mxu0 0.0
      %441 = vmatprep.subr.mxu0 0.0
      %442 = vmatpush1.msra.mxu0 0.0
      %443 = vmatprep.subr.mxu0 0.0
      %444 = vmatpush1.msra.mxu0 0.0
      %445 = vmatprep.subr.mxu0 0.0
      %446 = vmatpush1.msra.mxu0 0.0
      %447 = vmatprep.subr.mxu0 0.0
      %448 = vmatpush1.msra.mxu0 0.0
      %449 = vmatprep.subr.mxu0 0.0
      %450 = vmatpush1.msra.mxu0 0.0
      %451 = vmatprep.subr.mxu0 0.0
      %452 = vmatpush1.msra.mxu0 0.0
      %453 = vmatprep.subr.mxu0 0.0
      %454 = vmatpush1.msra.mxu0 0.0
      %455 = vmatprep.subr.mxu0 0.0
      %456 = vmatpush1.msra.mxu0 0.0
      %457 = vmatprep.subr.mxu0 0.0
      %458 = vmatpush1.msra.mxu0 0.0
      %459 = vmatprep.subr.mxu0 0.0
      %460 = vmatpush1.msra.mxu0 0.0
      %461 = vmatprep.subr.mxu0 0.0
      %462 = vmatpush1.msra.mxu0 0.0
      %463 = vmatprep.subr.mxu0 0.0
      %464 = vmatpush1.msra.mxu0 0.0
      %465 = vmatprep.subr.mxu0 0.0
      %466 = vmatpush1.msra.mxu0 0.0
      %467 = vmatprep.subr.mxu0 0.0
      %468 = vmatpush1.msra.mxu0 0.0
      %469 = vmatprep.subr.mxu0 0.0
      %470 = vmatpush1.msra.mxu0 0.0
      %471 = vmatprep.subr.mxu0 0.0
      %472 = vmatpush1.msra.mxu0 0.0
      %473 = vmatprep.subr.mxu0 0.0
      %474 = vmatpush1.msra.mxu0 0.0
      %475 = vmatprep.subr.mxu0 0.0
      %476 = vmatpush1.msra.mxu0 0.0
      %477 = vmatprep.subr.mxu0 0.0
      %478 = vmatpush1.msra.mxu0 0.0
      %479 = vmatprep.subr.mxu0 0.0
      %480 = vmatpush1.msra.mxu0 0.0
      %481 = vmatprep.subr.mxu0 0.0
      %482 = vmatpush1.msra.mxu0 0.0
      %483 = vmatprep.subr.mxu0 0.0
      %484 = vmatpush1.msra.mxu0 0.0
      %485 = vmatprep.mubr.f32.mxu0 0.0
      %486 = vmatmul.mubr.f32.gmra.mrb[0].mxu0 %v341
      %v487 = vpop.f32.mrb[0].mxu0
      %v488 = vadd.f32 %v419, %v487
      %v489 = vpop.f32.mrb[0].mxu0
      %490 = vdwg.mxu0
      %v491 = vxor.u32 %v488, 2147483648
      %v492 = vmul.f32 %v491, 1.442695
      %v493 = vpow.pop %v492
      %v494 = vadd.f32 %v493, 1.0
      %v495 = vrcp.pop %v494
      %v496 = vmul.f32 1.0, %v495
      %v497 = vmul.f32 %v410, %v496
      %v498 = vld [vmem:[%s5] sm:$0xff]
      %v499 = vld [vmem:[%s5 + $0x8] sm:$0xff]
      %v500 = vld [vmem:[%s5 + $0x10] sm:$0xff]
      %v501 = vld [vmem:[%s5 + $0x18] sm:$0xff]
      %v502 = vld [vmem:[%s6] sm:$0x1]
      %v504 = vlaneseq
      %v505 = vshrl.u32 %v504, 7
      %v506 = vsub.s32 0, %v505
      %v507 = vrot.slane %v502, %v506
      %vm509 = vcmask 261120
      %v511 = vsel %vm509, %v497, 0
      %513 = vmatprep.subr.mxu0 0.0
      %514 = vmatpush1.msra.mxu0 %v498
      %515 = vmatprep.subr.mxu0 0.0
      %516 = vmatpush1.msra.mxu0 %v499
      %517 = vmatprep.subr.mxu0 0.0
      %518 = vmatpush1.msra.mxu0 %v500
      %519 = vmatprep.subr.mxu0 0.0
      %520 = vmatpush1.msra.mxu0 %v501
      %521 = vmatprep.subr.mxu0 0.0
      %522 = vmatpush1.msra.mxu0 0.0
      %523 = vmatprep.subr.mxu0 0.0
      %524 = vmatpush1.msra.mxu0 0.0
      %525 = vmatprep.subr.mxu0 0.0
      %526 = vmatpush1.msra.mxu0 0.0
      %527 = vmatprep.subr.mxu0 0.0
      %528 = vmatpush1.msra.mxu0 0.0
      %529 = vmatprep.subr.mxu0 0.0
      %530 = vmatpush1.msra.mxu0 0.0
      %531 = vmatprep.subr.mxu0 0.0
      %532 = vmatpush1.msra.mxu0 0.0
      %533 = vmatprep.subr.mxu0 0.0
      %534 = vmatpush1.msra.mxu0 0.0
      %535 = vmatprep.subr.mxu0 0.0
      %536 = vmatpush1.msra.mxu0 0.0
      %537 = vmatprep.subr.mxu0 0.0
      %538 = vmatpush1.msra.mxu0 0.0
      %539 = vmatprep.subr.mxu0 0.0
      %540 = vmatpush1.msra.mxu0 0.0
      %541 = vmatprep.subr.mxu0 0.0
      %542 = vmatpush1.msra.mxu0 0.0
      %543 = vmatprep.subr.mxu0 0.0
      %544 = vmatpush1.msra.mxu0 0.0
      %545 = vmatprep.subr.mxu0 0.0
      %546 = vmatpush1.msra.mxu0 0.0
      %547 = vmatprep.subr.mxu0 0.0
      %548 = vmatpush1.msra.mxu0 0.0
      %549 = vmatprep.subr.mxu0 0.0
      %550 = vmatpush1.msra.mxu0 0.0
      %551 = vmatprep.subr.mxu0 0.0
      %552 = vmatpush1.msra.mxu0 0.0
      %553 = vmatprep.subr.mxu0 0.0
      %554 = vmatpush1.msra.mxu0 0.0
      %555 = vmatprep.subr.mxu0 0.0
      %556 = vmatpush1.msra.mxu0 0.0
      %557 = vmatprep.subr.mxu0 0.0
      %558 = vmatpush1.msra.mxu0 0.0
      %559 = vmatprep.subr.mxu0 0.0
      %560 = vmatpush1.msra.mxu0 0.0
      %561 = vmatprep.subr.mxu0 0.0
      %562 = vmatpush1.msra.mxu0 0.0
      %563 = vmatprep.subr.mxu0 0.0
      %564 = vmatpush1.msra.mxu0 0.0
      %565 = vmatprep.subr.mxu0 0.0
      %566 = vmatpush1.msra.mxu0 0.0
      %567 = vmatprep.subr.mxu0 0.0
      %568 = vmatpush1.msra.mxu0 0.0
      %569 = vmatprep.subr.mxu0 0.0
      %570 = vmatpush1.msra.mxu0 0.0
      %571 = vmatprep.subr.mxu0 0.0
      %572 = vmatpush1.msra.mxu0 0.0
      %573 = vmatprep.subr.mxu0 0.0
      %574 = vmatpush1.msra.mxu0 0.0
      %575 = vmatprep.subr.mxu0 0.0
      %576 = vmatpush1.msra.mxu0 0.0
      %577 = vmatprep.mubr.f32.mxu0 0.0
      %578 = vmatmul.mubr.f32.gmra.mrb[0].mxu0 %v511
      %v579 = vpop.f32.mrb[0].mxu0
      %v580 = vadd.f32 %v507, %v579
      %v581 = vpop.f32.mrb[0].mxu0
      %582 = vdwg.mxu0
      %v583 = vsel %vm339, %v580, 0.0
      %584 = vadd.xlane.f32.xlu0 %v583
      %v585 = vpop.xlane.xlu0 %584
      %v586 = vrot.slane %v585, 4
      %v587 = vadd.f32 %v585, %v586
      %v588 = vrot.slane %v587, 2
      %v589 = vadd.f32 %v587, %v588
      %v590 = vrot.slane %v589, 1
      %v591 = vadd.f32 %v589, %v590
      %s592 = vtos %v591
      %v593 = vrcp.pop 64.0
      %s594 = vtos %v593
      %s595 = smul.f32 %s592, %s594
      %v596 = vstv %s595
      %v597 = vsub.f32 %v580, %v596
      %v598 = vmul.f32 %v597, %v597
      %v599 = vsel %vm339, %v598, 0.0
      %600 = vadd.xlane.f32.xlu0 %v599
      %v601 = vpop.xlane.xlu0 %600
      %v602 = vrot.slane %v601, 4
      %v603 = vadd.f32 %v601, %v602
      %v604 = vrot.slane %v603, 2
      %v605 = vadd.f32 %v603, %v604
      %v606 = vrot.slane %v605, 1
      %v607 = vadd.f32 %v605, %v606
      %s608 = vtos %v607
      %v609 = vrcp.pop 64.0
      %s610 = vtos %v609
      %s611 = smul.f32 %s608, %s610
      %s612 = sadd.f32 %s611, 1e-08
      %v613 = vstv %s612
      %v614 = vrsqrt.pop %v613
      %s615 = vtos %v614
      %v616 = vstv %s615
      %v617 = vmul.f32 %v597, %v616
      %v618 = vld [vmem:[%s7] sm:$0x1]
      %v620 = vlaneseq
      %v621 = vshrl.u32 %v620, 7
      %v622 = vsub.s32 0, %v621
      %v623 = vrot.slane %v618, %v622
      %v625 = vmul.f32 %v617, %v623
      %v626 = vld [vmem:[%s8] sm:$0x1]
      %v628 = vlaneseq
      %v629 = vshrl.u32 %v628, 7
      %v630 = vsub.s32 0, %v629
      %v631 = vrot.slane %v626, %v630
      %v633 = vadd.f32 %v625, %v631
      %634 = vst.msk [vmem:[%s329] sm:$0xff] %vm339, %v633
      %636 = vrot.lane.b32.xlu0 %v580, 120
      %v637 = vpop.permute.xlu0 %636
      %v639 = vsel %vm339, %v637, 0.0
      %640 = vadd.xlane.f32.xlu0 %v639
      %v641 = vpop.xlane.xlu0 %640
      %v642 = vrot.slane %v641, 4
      %v643 = vadd.f32 %v641, %v642
      %v644 = vrot.slane %v643, 2
      %v645 = vadd.f32 %v643, %v644
      %v646 = vrot.slane %v645, 1
      %v647 = vadd.f32 %v645, %v646
      %s648 = vtos %v647
      %v649 = vrcp.pop 64.0
      %s650 = vtos %v649
      %s651 = smul.f32 %s648, %s650
      %v652 = vstv %s651
      %v653 = vsub.f32 %v580, %v652
      %v654 = vmul.f32 %v653, %v653
      %656 = vrot.lane.b32.xlu0 %v654, 120
      %v657 = vpop.permute.xlu0 %656
      %v659 = vsel %vm339, %v657, 0.0
      %660 = vadd.xlane.f32.xlu0 %v659
      %v661 = vpop.xlane.xlu0 %660
      %v662 = vrot.slane %v661, 4
      %v663 = vadd.f32 %v661, %v662
      %v664 = vrot.slane %v663, 2
      %v665 = vadd.f32 %v663, %v664
      %v666 = vrot.slane %v665, 1
      %v667 = vadd.f32 %v665, %v666
      %s668 = vtos %v667
      %v669 = vrcp.pop 64.0
      %s670 = vtos %v669
      %s671 = smul.f32 %s668, %s670
      %s672 = sadd.f32 %s671, 1e-08
      %v673 = vstv %s672
      %v674 = vrsqrt.pop %v673
      %s675 = vtos %v674
      %v676 = vstv %s675
      %v677 = vmul.f32 %v653, %v676
      %v678 = vld [vmem:[%s7] sm:$0x1]
      %v680 = vlaneseq
      %v681 = vshrl.u32 %v680, 7
      %v682 = vsub.s32 0, %v681
      %v683 = vrot.slane %v678, %v682
      %684 = vrot.lane.b32.xlu0 %v683, 8
      %v685 = vpop.permute.xlu0 %684
      %v687 = vmul.f32 %v677, %v685
      %v688 = vld [vmem:[%s8] sm:$0x1]
      %v690 = vlaneseq
      %v691 = vshrl.u32 %v690, 7
      %v692 = vsub.s32 0, %v691
      %v693 = vrot.slane %v688, %v692
      %694 = vrot.lane.b32.xlu0 %v693, 8
      %v695 = vpop.permute.xlu0 %694
      %v697 = vadd.f32 %v687, %v695
      %699 = vrot.lane.b32.xlu0 %v697, 120
      %v700 = vpop.permute.xlu0 %699
      %s702 = scalar_lea.vmem %s329, 8
      %703 = vst.msk [vmem:[%s702] sm:$0xff] %vm339, %v700
      %p704 = scmp.lt.s32.totalorder %s20, 1
      %s705 = scalar_select %p704, %s20, 1
      %s706 = smul.addr %s705, 2
      %s707 = smul.addr %s706, 8
      %s708 = scalar_lea.vmem %s9, %s707
      // Predicated region
      $region57: #{separator_forward.11} parent=55 // pred_check
        %p709 = pneg %p232
      $region58: #{separator_forward.11} parent=55 // pred_check_branch
        %711 = sbr.rel (%p709) target = $region60
      $region59: #{separator_forward.11} parent=55 // pred_region
        _
      $region60: #{separator_forward.11} parent=55 // pred_fallthru
        _
    $region56: #{separator_forward.11} parent=5 // pred_fallthru
      _
    %p712 = scmp.le.s32.totalorder 2, %s15
    // Predicated region
    $region61: #{separator_forward.11} parent=5 // pred_check
      %p713 = pneg %p712
    $region62: #{separator_forward.11} parent=5 // pred_check_branch
      %715 = sbr.rel (%p713) target = $region64
    $region63: #{separator_forward.11} parent=5 // pred_region
      %s716 = ssub.s32 %s15, 2
      // Predicated region
      $region65: #{separator_forward.11} parent=63 // pred_check
        %p717 = pneg %p238
      $region66: #{separator_forward.11} parent=63 // pred_check_branch
        %719 = sbr.rel (%p717) target = $region68
      $region67: #{separator_forward.11} parent=63 // pred_region
        %p720 = scmp.lt.s32.totalorder %s21, 1
        %s721 = scalar_select %p720, %s21, 1
        %s722 = smul.addr %s721, 2
        %s723 = smul.addr %s722, 8
        %s724 = scalar_lea.vmem %s9, %s723
      $region68: #{separator_forward.11} parent=63 // pred_fallthru
        _
    $region64: #{separator_forward.11} parent=5 // pred_fallthru
      _
  $region6: #{separator_forward.11} parent=0 // loop_footer
    %s19 = sadd.s32 1, %s15
  $region7: #{separator_forward.11} parent=0 // loop_footer_branch
    %14 = sbr.rel target = $region3
  $region8: #{separator_forward.11} parent=0 // loop_exit
    _

</llo_original>
